<compile_context>
chip_gen: v7x
topology: tpu7x:2x2x1
jax: 0.10.0
libtpu: 0.0.40
codegen_flags: <defaults>
</compile_context>

<pallas_src>
import jax
import jax.numpy as jnp
from jax.experimental import pallas as pl
from jax.experimental.pallas import tpu as pltpu

IN_H, IN_W = 28, 28
OUT_H, OUT_W = 26, 26          # 28 - 3 + 1
NUM_CLASSES = 10
SLAB_ROW = 32                  # per-conv-row stride in the FC slab (8-aligned)
SLAB_K = OUT_H * SLAB_ROW      # 832


def _round_up(n, m):
    return ((n + m - 1) // m) * m


# ---------------------------------------------------------------------------
# Fused kernel: conv3x3 (1->1 ch) + bias + ReLU + Linear(676, 10).
# ---------------------------------------------------------------------------
def fused_cnn_kernel(cw_ref, cb_ref, x_ref, wfc_ref, bfc_ref, out_ref, slab_ref):
    # cw_ref  : (3, 3)           f32  SMEM  conv weights (scalars)
    # cb_ref  : (1,)             f32  SMEM  conv bias (scalar)
    # x_ref   : (28, 28, TB)     bf16 VMEM  input tile, batch on lanes
    # wfc_ref : (10, 832)        bf16 VMEM  fc weights, k = h*32 + w (resident)
    # bfc_ref : (10, 1)          f32  VMEM  fc bias (resident)
    # out_ref : (10, TB)         f32  VMEM  logits tile, batch on lanes
    # slab_ref: (832, TB)        bf16 VMEM  scratch: ReLU'd conv rows for the FC

    # Hoist the 9 conv-weight scalar reads + the bias read out of all loops.
    w = [[cw_ref[i, j] for j in range(3)] for i in range(3)]
    cb = cb_ref[0]

    # Zero the slab so the 6 pad sublanes of every 32-row block are 0.0 (they
    # meet zero FC-weight columns, but must never be uninitialized NaN junk).
    # Done every grid step: scratch is per-core, and on v7x different cores
    # own different grid steps, so a "first step only" init is not safe.
    slab_ref[...] = jnp.zeros_like(slab_ref)

    # Stream the 28 input rows once each.  Input row r contributes to output
    # rows h = r, r-1, r-2 (with di = r - h); three rotating accumulators hold
    # the partially-summed output rows until their last (di == 2) contribution,
    # at which point bias + ReLU are applied and the row is stored in the slab.
    accs = [None, None, None]
    for r in range(IN_H):
        # Three W-shifted views of input row r, loaded once and reused for all
        # (up to 3) output rows consuming this input row.  Up-convert to f32
        # once per view; tap math stays f32 (works on every TPU generation).
        v = [x_ref[r, dj:dj + OUT_W, :].astype(jnp.float32) for dj in range(3)]
        for di in range(3):
            h = r - di
            if 0 <= h < OUT_H:
                contrib = (w[di][0] * v[0] + w[di][1] * v[1] + w[di][2] * v[2])
                s = h % 3
                accs[s] = contrib if di == 0 else accs[s] + contrib
                if di == 2:                    # output row h complete
                    act = jnp.maximum(accs[s] + cb, 0.0)
                    slab_ref[pl.ds(h * SLAB_ROW, OUT_W), :] = (
                        act.astype(slab_ref.dtype))

    # Single deep-K FC matmul on the MXU: (10, 832) @ (832, TB), f32 accumulate.
    out_ref[...] = jnp.dot(wfc_ref[...], slab_ref[...],
                           preferred_element_type=jnp.float32) + bfc_ref[...]


# ---------------------------------------------------------------------------
# Wrapper: layout plumbing (batch -> lanes, fc-weight slab layout) + grid.
# ---------------------------------------------------------------------------
@jax.jit
def dummy_cnn_forward(x_nchw, params):
    conv_w, conv_b, fc_w, fc_b = params
    B = x_nchw.shape[0]

    TB = min(256, _round_up(B, 128))          # lane-dense batch tile
    B_pad = _round_up(B, TB)
    # v7x has 2 TensorCores: make sure the "parallel" batch axis has >= 2 grid
    # steps whenever the batch allows it.
    if B_pad // TB == 1 and TB > 128:
        TB //= 2
        B_pad = _round_up(B, TB)

    # (B,1,28,28) f32 -> (28,28,B_pad) bf16: batch in the lane dim, half HBM.
    # TODO(synk): accept an (H, W, B) bf16 activation layout upstream to remove
    # this standalone transpose/pad relayout (the main non-kernel HBM cost).
    x_hwb = jnp.transpose(x_nchw[:, 0, :, :].astype(jnp.bfloat16), (1, 2, 0))
    x_hwb = jnp.pad(x_hwb, ((0, 0), (0, 0), (0, B_pad - B)))

    # fc_w[k, n] with k = h*26 + w (torch .view order) -> (10, 832) where each
    # conv row is zero-padded 26 -> 32 to line up with the kernel's slab.
    wfc = jnp.transpose(fc_w, (1, 0)).reshape(NUM_CLASSES, OUT_H, OUT_W)
    wfc = jnp.pad(wfc, ((0, 0), (0, 0), (0, SLAB_ROW - OUT_W)))
    wfc = wfc.reshape(NUM_CLASSES, SLAB_K).astype(jnp.bfloat16)
    bfc = fc_b.reshape(NUM_CLASSES, 1).astype(jnp.float32)

    out_t = pl.pallas_call(
        fused_cnn_kernel,
        out_shape=jax.ShapeDtypeStruct((NUM_CLASSES, B_pad), jnp.float32),
        grid_spec=pltpu.PrefetchScalarGridSpec(
            num_scalar_prefetch=0,
            grid=(B_pad // TB,),
            in_specs=[
                pl.BlockSpec(memory_space=pltpu.MemorySpace.SMEM),      # conv w
                pl.BlockSpec(memory_space=pltpu.MemorySpace.SMEM),      # conv b
                pl.BlockSpec((IN_H, IN_W, TB), lambda i: (0, 0, i)),    # x tile
                pl.BlockSpec((NUM_CLASSES, SLAB_K), lambda i: (0, 0)),  # fc W
                pl.BlockSpec((NUM_CLASSES, 1), lambda i: (0, 0)),       # fc b
            ],
            out_specs=pl.BlockSpec((NUM_CLASSES, TB), lambda i: (0, i)),
            scratch_shapes=[pltpu.VMEM((SLAB_K, TB), jnp.bfloat16)],
        ),
        compiler_params=pltpu.CompilerParams(
            dimension_semantics=("parallel",)),
    )(conv_w, conv_b, x_hwb, wfc, bfc)

    # Drop batch padding; (10, B) -> (B, 10) transpose is negligible.
    return out_t[:, :B].T


def init_params():
    # Deterministic synthetic parameters (shapes match nn.Conv2d(1,1,3) and
    # nn.Linear(676, 10)); not a checkpoint load.
    kw, kb, kfw, kfb = jax.random.split(jax.random.PRNGKey(42), 4)
    conv_w = jax.random.normal(kw, (3, 3), jnp.float32) * (1.0 / 3.0)
    conv_b = jax.random.normal(kb, (1,), jnp.float32) * 0.1
    fc_w = jax.random.normal(kfw, (OUT_H * OUT_W, NUM_CLASSES), jnp.float32) * (
        1.0 / jnp.sqrt(float(OUT_H * OUT_W))
    )
    fc_b = jax.random.normal(kfb, (NUM_CLASSES,), jnp.float32) * 0.1
    return conv_w, conv_b, fc_w, fc_b


if __name__ == "__main__":
    params = init_params()
    # Conv2d(1,1,3) + Linear(26*26, 10) implies a (B, 1, 28, 28) NCHW input.
    x = jax.random.normal(jax.random.PRNGKey(0), (2, 1, IN_H, IN_W), jnp.float32)

    out = jax.block_until_ready(dummy_cnn_forward(x, params))
    assert out.shape == (2, NUM_CLASSES) and out.dtype == jnp.float32

    # Correctness cross-check against a pure-JAX f32 reference (bf16 data path
    # in the kernel -> loosened tolerance per the perf review).
    conv_w, conv_b, fc_w, fc_b = params
    ref_conv = jax.lax.conv_general_dilated(
        x, conv_w.reshape(1, 1, 3, 3), (1, 1), "VALID",
        dimension_numbers=("NCHW", "OIHW", "NCHW"),
    ) + conv_b[0]
    ref = jnp.maximum(ref_conv, 0.0).reshape(x.shape[0], -1) @ fc_w + fc_b
    assert jnp.allclose(out, ref, atol=5e-2, rtol=5e-2), float(
        jnp.max(jnp.abs(out - ref))
    )

    print("KERNEL_OK")
</pallas_src>

<mosaic_0001>
module attributes {stable_mosaic.version = 11 : i64} {
  func.func @fused_cnn_kernel(%arg0: i32, %arg1: memref<3x3xf32, #tpu.memory_space<smem>>, %arg2: memref<1xf32, #tpu.memory_space<smem>>, %arg3: memref<28x28x128xbf16, #tpu.memory_space<vmem>>, %arg4: memref<10x832xbf16, #tpu.memory_space<vmem>>, %arg5: memref<10x1xf32, #tpu.memory_space<vmem>>, %arg6: memref<10x128xf32, #tpu.memory_space<vmem>>, %arg7: memref<832x128xbf16, #tpu.memory_space<vmem>>) attributes {dimension_semantics = [#tpu.dimension_semantics<parallel>], iteration_bounds = array<i64: 1>, scalar_prefetch = 0 : i64, scratch_operands = 1 : i64, tpu.core_type = #tpu.core_type<tc>, window_params = [{transform_indices = @transform_0, window_bounds = array<i64: 3, 3>}, {transform_indices = @transform_1, window_bounds = array<i64: 1>}, {transform_indices = @transform_2, window_bounds = array<i64: 28, 28, 128>}, {pipeline_mode = #tpu.pipeline_mode<synchronous>, transform_indices = @transform_3, window_bounds = array<i64: 10, 832>}, {pipeline_mode = #tpu.pipeline_mode<synchronous>, transform_indices = @transform_4, window_bounds = array<i64: 10, 1>}, {transform_indices = @transform_5, window_bounds = array<i64: 10, 128>}]} {
    %c0 = arith.constant 0 : index
    %c0_0 = arith.constant 0 : index
    %0 = memref.load %arg1[%c0, %c0_0] : memref<3x3xf32, #tpu.memory_space<smem>>
    %c0_1 = arith.constant 0 : index
    %c1 = arith.constant 1 : index
    %1 = memref.load %arg1[%c0_1, %c1] : memref<3x3xf32, #tpu.memory_space<smem>>
    %c0_2 = arith.constant 0 : index
    %c2 = arith.constant 2 : index
    %2 = memref.load %arg1[%c0_2, %c2] : memref<3x3xf32, #tpu.memory_space<smem>>
    %c1_3 = arith.constant 1 : index
    %c0_4 = arith.constant 0 : index
    %3 = memref.load %arg1[%c1_3, %c0_4] : memref<3x3xf32, #tpu.memory_space<smem>>
    %c1_5 = arith.constant 1 : index
    %c1_6 = arith.constant 1 : index
    %4 = memref.load %arg1[%c1_5, %c1_6] : memref<3x3xf32, #tpu.memory_space<smem>>
    %c1_7 = arith.constant 1 : index
    %c2_8 = arith.constant 2 : index
    %5 = memref.load %arg1[%c1_7, %c2_8] : memref<3x3xf32, #tpu.memory_space<smem>>
    %c2_9 = arith.constant 2 : index
    %c0_10 = arith.constant 0 : index
    %6 = memref.load %arg1[%c2_9, %c0_10] : memref<3x3xf32, #tpu.memory_space<smem>>
    %c2_11 = arith.constant 2 : index
    %c1_12 = arith.constant 1 : index
    %7 = memref.load %arg1[%c2_11, %c1_12] : memref<3x3xf32, #tpu.memory_space<smem>>
    %c2_13 = arith.constant 2 : index
    %c2_14 = arith.constant 2 : index
    %8 = memref.load %arg1[%c2_13, %c2_14] : memref<3x3xf32, #tpu.memory_space<smem>>
    %c0_15 = arith.constant 0 : index
    %9 = memref.load %arg2[%c0_15] : memref<1xf32, #tpu.memory_space<smem>>
    %cst = arith.constant 0.000000e+00 : bf16
    %10 = vector.broadcast %cst : bf16 to vector<832x128xbf16>
    %c0_16 = arith.constant 0 : index
    %c0_17 = arith.constant 0 : index
    %11 = vector.load %arg7[%c0_16, %c0_17] : memref<832x128xbf16, #tpu.memory_space<vmem>>, vector<832x128xbf16>
    tpu.vector_store %arg7[%c0_16, %c0_17], %10 {strides = array<i32>} : memref<832x128xbf16, #tpu.memory_space<vmem>>, vector<832x128xbf16>,
    %c0_18 = arith.constant 0 : index
    %c0_19 = arith.constant 0 : index
    %c0_20 = arith.constant 0 : index
    %12 = vector.load %arg3[%c0_18, %c0_19, %c0_20] : memref<28x28x128xbf16, #tpu.memory_space<vmem>>, vector<1x26x128xbf16>
    %13 = vector.shape_cast %12 : vector<1x26x128xbf16> to vector<26x128xbf16>
    %14 = arith.extf %13 : vector<26x128xbf16> to vector<26x128xf32>
    %c0_21 = arith.constant 0 : index
    %c1_22 = arith.constant 1 : index
    %c0_23 = arith.constant 0 : index
    %15 = vector.load %arg3[%c0_21, %c1_22, %c0_23] : memref<28x28x128xbf16, #tpu.memory_space<vmem>>, vector<1x26x128xbf16>
    %16 = vector.shape_cast %15 : vector<1x26x128xbf16> to vector<26x128xbf16>
    %17 = arith.extf %16 : vector<26x128xbf16> to vector<26x128xf32>
    %c0_24 = arith.constant 0 : index
    %c2_25 = arith.constant 2 : index
    %c0_26 = arith.constant 0 : index
    %18 = vector.load %arg3[%c0_24, %c2_25, %c0_26] : memref<28x28x128xbf16, #tpu.memory_space<vmem>>, vector<1x26x128xbf16>
    %19 = vector.shape_cast %18 : vector<1x26x128xbf16> to vector<26x128xbf16>
    %20 = arith.extf %19 : vector<26x128xbf16> to vector<26x128xf32>
    %21 = vector.broadcast %0 : f32 to vector<26x128xf32>
    %22 = arith.mulf %21, %14 : vector<26x128xf32>
    %23 = vector.broadcast %1 : f32 to vector<26x128xf32>
    %24 = arith.mulf %23, %17 : vector<26x128xf32>
    %25 = arith.addf %22, %24 : vector<26x128xf32>
    %26 = vector.broadcast %2 : f32 to vector<26x128xf32>
    %27 = arith.mulf %26, %20 : vector<26x128xf32>
    %28 = arith.addf %25, %27 : vector<26x128xf32>
    %c1_27 = arith.constant 1 : index
    %c0_28 = arith.constant 0 : index
    %c0_29 = arith.constant 0 : index
    %29 = vector.load %arg3[%c1_27, %c0_28, %c0_29] : memref<28x28x128xbf16, #tpu.memory_space<vmem>>, vector<1x26x128xbf16>
    %30 = vector.shape_cast %29 : vector<1x26x128xbf16> to vector<26x128xbf16>
    %31 = arith.extf %30 : vector<26x128xbf16> to vector<26x128xf32>
    %c1_30 = arith.constant 1 : index
    %c1_31 = arith.constant 1 : index
    %c0_32 = arith.constant 0 : index
    %32 = vector.load %arg3[%c1_30, %c1_31, %c0_32] : memref<28x28x128xbf16, #tpu.memory_space<vmem>>, vector<1x26x128xbf16>
    %33 = vector.shape_cast %32 : vector<1x26x128xbf16> to vector<26x128xbf16>
    %34 = arith.extf %33 : vector<26x128xbf16> to vector<26x128xf32>
    %c1_33 = arith.constant 1 : index
    %c2_34 = arith.constant 2 : index
    %c0_35 = arith.constant 0 : index
    %35 = vector.load %arg3[%c1_33, %c2_34, %c0_35] : memref<28x28x128xbf16, #tpu.memory_space<vmem>>, vector<1x26x128xbf16>
    %36 = vector.shape_cast %35 : vector<1x26x128xbf16> to vector<26x128xbf16>
    %37 = arith.extf %36 : vector<26x128xbf16> to vector<26x128xf32>
    %38 = vector.broadcast %0 : f32 to vector<26x128xf32>
    %39 = arith.mulf %38, %31 : vector<26x128xf32>
    %40 = vector.broadcast %1 : f32 to vector<26x128xf32>
    %41 = arith.mulf %40, %34 : vector<26x128xf32>
    %42 = arith.addf %39, %41 : vector<26x128xf32>
    %43 = vector.broadcast %2 : f32 to vector<26x128xf32>
    %44 = arith.mulf %43, %37 : vector<26x128xf32>
    %45 = arith.addf %42, %44 : vector<26x128xf32>
    %46 = vector.broadcast %3 : f32 to vector<26x128xf32>
    %47 = arith.mulf %46, %31 : vector<26x128xf32>
    %48 = vector.broadcast %4 : f32 to vector<26x128xf32>
    %49 = arith.mulf %48, %34 : vector<26x128xf32>
    %50 = arith.addf %47, %49 : vector<26x128xf32>
    %51 = vector.broadcast %5 : f32 to vector<26x128xf32>
    %52 = arith.mulf %51, %37 : vector<26x128xf32>
    %53 = arith.addf %50, %52 : vector<26x128xf32>
    %54 = arith.addf %28, %53 : vector<26x128xf32>
    %c2_36 = arith.constant 2 : index
    %c0_37 = arith.constant 0 : index
    %c0_38 = arith.constant 0 : index
    %55 = vector.load %arg3[%c2_36, %c0_37, %c0_38] : memref<28x28x128xbf16, #tpu.memory_space<vmem>>, vector<1x26x128xbf16>
    %56 = vector.shape_cast %55 : vector<1x26x128xbf16> to vector<26x128xbf16>
    %57 = arith.extf %56 : vector<26x128xbf16> to vector<26x128xf32>
    %c2_39 = arith.constant 2 : index
    %c1_40 = arith.constant 1 : index
    %c0_41 = arith.constant 0 : index
    %58 = vector.load %arg3[%c2_39, %c1_40, %c0_41] : memref<28x28x128xbf16, #tpu.memory_space<vmem>>, vector<1x26x128xbf16>
    %59 = vector.shape_cast %58 : vector<1x26x128xbf16> to vector<26x128xbf16>
    %60 = arith.extf %59 : vector<26x128xbf16> to vector<26x128xf32>
    %c2_42 = arith.constant 2 : index
    %c2_43 = arith.constant 2 : index
    %c0_44 = arith.constant 0 : index
    %61 = vector.load %arg3[%c2_42, %c2_43, %c0_44] : memref<28x28x128xbf16, #tpu.memory_space<vmem>>, vector<1x26x128xbf16>
    %62 = vector.shape_cast %61 : vector<1x26x128xbf16> to vector<26x128xbf16>
    %63 = arith.extf %62 : vector<26x128xbf16> to vector<26x128xf32>
    %64 = vector.broadcast %0 : f32 to vector<26x128xf32>
    %65 = arith.mulf %64, %57 : vector<26x128xf32>
    %66 = vector.broadcast %1 : f32 to vector<26x128xf32>
    %67 = arith.mulf %66, %60 : vector<26x128xf32>
    %68 = arith.addf %65, %67 : vector<26x128xf32>
    %69 = vector.broadcast %2 : f32 to vector<26x128xf32>
    %70 = arith.mulf %69, %63 : vector<26x128xf32>
    %71 = arith.addf %68, %70 : vector<26x128xf32>
    %72 = vector.broadcast %3 : f32 to vector<26x128xf32>
    %73 = arith.mulf %72, %57 : vector<26x128xf32>
    %74 = vector.broadcast %4 : f32 to vector<26x128xf32>
    %75 = arith.mulf %74, %60 : vector<26x128xf32>
    %76 = arith.addf %73, %75 : vector<26x128xf32>
    %77 = vector.broadcast %5 : f32 to vector<26x128xf32>
    %78 = arith.mulf %77, %63 : vector<26x128xf32>
    %79 = arith.addf %76, %78 : vector<26x128xf32>
    %80 = arith.addf %45, %79 : vector<26x128xf32>
    %81 = vector.broadcast %6 : f32 to vector<26x128xf32>
    %82 = arith.mulf %81, %57 : vector<26x128xf32>
    %83 = vector.broadcast %7 : f32 to vector<26x128xf32>
    %84 = arith.mulf %83, %60 : vector<26x128xf32>
    %85 = arith.addf %82, %84 : vector<26x128xf32>
    %86 = vector.broadcast %8 : f32 to vector<26x128xf32>
    %87 = arith.mulf %86, %63 : vector<26x128xf32>
    %88 = arith.addf %85, %87 : vector<26x128xf32>
    %89 = arith.addf %54, %88 : vector<26x128xf32>
    %90 = vector.broadcast %9 : f32 to vector<26x128xf32>
    %91 = arith.addf %89, %90 : vector<26x128xf32>
    %cst_45 = arith.constant 0.000000e+00 : f32
    %92 = vector.broadcast %cst_45 : f32 to vector<26x128xf32>
    %93 = arith.maximumf %91, %92 : vector<26x128xf32>
    %94 = arith.truncf %93 : vector<26x128xf32> to vector<26x128xbf16>
    %c0_46 = arith.constant 0 : index
    %c0_47 = arith.constant 0 : index
    %95 = vector.load %arg7[%c0_46, %c0_47] : memref<832x128xbf16, #tpu.memory_space<vmem>>, vector<26x128xbf16>
    tpu.vector_store %arg7[%c0_46, %c0_47], %94 {strides = array<i32>} : memref<832x128xbf16, #tpu.memory_space<vmem>>, vector<26x128xbf16>,
    %c3 = arith.constant 3 : index
    %c0_48 = arith.constant 0 : index
    %c0_49 = arith.constant 0 : index
    %96 = vector.load %arg3[%c3, %c0_48, %c0_49] : memref<28x28x128xbf16, #tpu.memory_space<vmem>>, vector<1x26x128xbf16>
    %97 = vector.shape_cast %96 : vector<1x26x128xbf16> to vector<26x128xbf16>
    %98 = arith.extf %97 : vector<26x128xbf16> to vector<26x128xf32>
    %c3_50 = arith.constant 3 : index
    %c1_51 = arith.constant 1 : index
    %c0_52 = arith.constant 0 : index
    %99 = vector.load %arg3[%c3_50, %c1_51, %c0_52] : memref<28x28x128xbf16, #tpu.memory_space<vmem>>, vector<1x26x128xbf16>
    %100 = vector.shape_cast %99 : vector<1x26x128xbf16> to vector<26x128xbf16>
    %101 = arith.extf %100 : vector<26x128xbf16> to vector<26x128xf32>
    %c3_53 = arith.constant 3 : index
    %c2_54 = arith.constant 2 : index
    %c0_55 = arith.constant 0 : index
    %102 = vector.load %arg3[%c3_53, %c2_54, %c0_55] : memref<28x28x128xbf16, #tpu.memory_space<vmem>>, vector<1x26x128xbf16>
    %103 = vector.shape_cast %102 : vector<1x26x128xbf16> to vector<26x128xbf16>
    %104 = arith.extf %103 : vector<26x128xbf16> to vector<26x128xf32>
    %105 = vector.broadcast %0 : f32 to vector<26x128xf32>
    %106 = arith.mulf %105, %98 : vector<26x128xf32>
    %107 = vector.broadcast %1 : f32 to vector<26x128xf32>
    %108 = arith.mulf %107, %101 : vector<26x128xf32>
    %109 = arith.addf %106, %108 : vector<26x128xf32>
    %110 = vector.broadcast %2 : f32 to vector<26x128xf32>
    %111 = arith.mulf %110, %104 : vector<26x128xf32>
    %112 = arith.addf %109, %111 : vector<26x128xf32>
    %113 = vector.broadcast %3 : f32 to vector<26x128xf32>
    %114 = arith.mulf %113, %98 : vector<26x128xf32>
    %115 = vector.broadcast %4 : f32 to vector<26x128xf32>
    %116 = arith.mulf %115, %101 : vector<26x128xf32>
    %117 = arith.addf %114, %116 : vector<26x128xf32>
    %118 = vector.broadcast %5 : f32 to vector<26x128xf32>
    %119 = arith.mulf %118, %104 : vector<26x128xf32>
    %120 = arith.addf %117, %119 : vector<26x128xf32>
    %121 = arith.addf %71, %120 : vector<26x128xf32>
    %122 = vector.broadcast %6 : f32 to vector<26x128xf32>
    %123 = arith.mulf %122, %98 : vector<26x128xf32>
    %124 = vector.broadcast %7 : f32 to vector<26x128xf32>
    %125 = arith.mulf %124, %101 : vector<26x128xf32>
    %126 = arith.addf %123, %125 : vector<26x128xf32>
    %127 = vector.broadcast %8 : f32 to vector<26x128xf32>
    %128 = arith.mulf %127, %104 : vector<26x128xf32>
    %129 = arith.addf %126, %128 : vector<26x128xf32>
    %130 = arith.addf %80, %129 : vector<26x128xf32>
    %131 = vector.broadcast %9 : f32 to vector<26x128xf32>
    %132 = arith.addf %130, %131 : vector<26x128xf32>
    %cst_56 = arith.constant 0.000000e+00 : f32
    %133 = vector.broadcast %cst_56 : f32 to vector<26x128xf32>
    %134 = arith.maximumf %132, %133 : vector<26x128xf32>
    %135 = arith.truncf %134 : vector<26x128xf32> to vector<26x128xbf16>
    %c32 = arith.constant 32 : index
    %c0_57 = arith.constant 0 : index
    %136 = vector.load %arg7[%c32, %c0_57] : memref<832x128xbf16, #tpu.memory_space<vmem>>, vector<26x128xbf16>
    tpu.vector_store %arg7[%c32, %c0_57], %135 {strides = array<i32>} : memref<832x128xbf16, #tpu.memory_space<vmem>>, vector<26x128xbf16>,
    %c4 = arith.constant 4 : index
    %c0_58 = arith.constant 0 : index
    %c0_59 = arith.constant 0 : index
    %137 = vector.load %arg3[%c4, %c0_58, %c0_59] : memref<28x28x128xbf16, #tpu.memory_space<vmem>>, vector<1x26x128xbf16>
    %138 = vector.shape_cast %137 : vector<1x26x128xbf16> to vector<26x128xbf16>
    %139 = arith.extf %138 : vector<26x128xbf16> to vector<26x128xf32>
    %c4_60 = arith.constant 4 : index
    %c1_61 = arith.constant 1 : index
    %c0_62 = arith.constant 0 : index
    %140 = vector.load %arg3[%c4_60, %c1_61, %c0_62] : memref<28x28x128xbf16, #tpu.memory_space<vmem>>, vector<1x26x128xbf16>
    %141 = vector.shape_cast %140 : vector<1x26x128xbf16> to vector<26x128xbf16>
    %142 = arith.extf %141 : vector<26x128xbf16> to vector<26x128xf32>
    %c4_63 = arith.constant 4 : index
    %c2_64 = arith.constant 2 : index
    %c0_65 = arith.constant 0 : index
    %143 = vector.load %arg3[%c4_63, %c2_64, %c0_65] : memref<28x28x128xbf16, #tpu.memory_space<vmem>>, vector<1x26x128xbf16>
    %144 = vector.shape_cast %143 : vector<1x26x128xbf16> to vector<26x128xbf16>
    %145 = arith.extf %144 : vector<26x128xbf16> to vector<26x128xf32>
    %146 = vector.broadcast %0 : f32 to vector<26x128xf32>
    %147 = arith.mulf %146, %139 : vector<26x128xf32>
    %148 = vector.broadcast %1 : f32 to vector<26x128xf32>
    %149 = arith.mulf %148, %142 : vector<26x128xf32>
    %150 = arith.addf %147, %149 : vector<26x128xf32>
    %151 = vector.broadcast %2 : f32 to vector<26x128xf32>
    %152 = arith.mulf %151, %145 : vector<26x128xf32>
    %153 = arith.addf %150, %152 : vector<26x128xf32>
    %154 = vector.broadcast %3 : f32 to vector<26x128xf32>
    %155 = arith.mulf %154, %139 : vector<26x128xf32>
    %156 = vector.broadcast %4 : f32 to vector<26x128xf32>
    %157 = arith.mulf %156, %142 : vector<26x128xf32>
    %158 = arith.addf %155, %157 : vector<26x128xf32>
    %159 = vector.broadcast %5 : f32 to vector<26x128xf32>
    %160 = arith.mulf %159, %145 : vector<26x128xf32>
    %161 = arith.addf %158, %160 : vector<26x128xf32>
    %162 = arith.addf %112, %161 : vector<26x128xf32>
    %163 = vector.broadcast %6 : f32 to vector<26x128xf32>
    %164 = arith.mulf %163, %139 : vector<26x128xf32>
    %165 = vector.broadcast %7 : f32 to vector<26x128xf32>
    %166 = arith.mulf %165, %142 : vector<26x128xf32>
    %167 = arith.addf %164, %166 : vector<26x128xf32>
    %168 = vector.broadcast %8 : f32 to vector<26x128xf32>
    %169 = arith.mulf %168, %145 : vector<26x128xf32>
    %170 = arith.addf %167, %169 : vector<26x128xf32>
    %171 = arith.addf %121, %170 : vector<26x128xf32>
    %172 = vector.broadcast %9 : f32 to vector<26x128xf32>
    %173 = arith.addf %171, %172 : vector<26x128xf32>
    %cst_66 = arith.constant 0.000000e+00 : f32
    %174 = vector.broadcast %cst_66 : f32 to vector<26x128xf32>
    %175 = arith.maximumf %173, %174 : vector<26x128xf32>
    %176 = arith.truncf %175 : vector<26x128xf32> to vector<26x128xbf16>
    %c64 = arith.constant 64 : index
    %c0_67 = arith.constant 0 : index
    %177 = vector.load %arg7[%c64, %c0_67] : memref<832x128xbf16, #tpu.memory_space<vmem>>, vector<26x128xbf16>
    tpu.vector_store %arg7[%c64, %c0_67], %176 {strides = array<i32>} : memref<832x128xbf16, #tpu.memory_space<vmem>>, vector<26x128xbf16>,
    %c5 = arith.constant 5 : index
    %c0_68 = arith.constant 0 : index
    %c0_69 = arith.constant 0 : index
    %178 = vector.load %arg3[%c5, %c0_68, %c0_69] : memref<28x28x128xbf16, #tpu.memory_space<vmem>>, vector<1x26x128xbf16>
    %179 = vector.shape_cast %178 : vector<1x26x128xbf16> to vector<26x128xbf16>
    %180 = arith.extf %179 : vector<26x128xbf16> to vector<26x128xf32>
    %c5_70 = arith.constant 5 : index
    %c1_71 = arith.constant 1 : index
    %c0_72 = arith.constant 0 : index
    %181 = vector.load %arg3[%c5_70, %c1_71, %c0_72] : memref<28x28x128xbf16, #tpu.memory_space<vmem>>, vector<1x26x128xbf16>
    %182 = vector.shape_cast %181 : vector<1x26x128xbf16> to vector<26x128xbf16>
    %183 = arith.extf %182 : vector<26x128xbf16> to vector<26x128xf32>
    %c5_73 = arith.constant 5 : index
    %c2_74 = arith.constant 2 : index
    %c0_75 = arith.constant 0 : index
    %184 = vector.load %arg3[%c5_73, %c2_74, %c0_75] : memref<28x28x128xbf16, #tpu.memory_space<vmem>>, vector<1x26x128xbf16>
    %185 = vector.shape_cast %184 : vector<1x26x128xbf16> to vector<26x128xbf16>
    %186 = arith.extf %185 : vector<26x128xbf16> to vector<26x128xf32>
    %187 = vector.broadcast %0 : f32 to vector<26x128xf32>
    %188 = arith.mulf %187, %180 : vector<26x128xf32>
    %189 = vector.broadcast %1 : f32 to vector<26x128xf32>
    %190 = arith.mulf %189, %183 : vector<26x128xf32>
    %191 = arith.addf %188, %190 : vector<26x128xf32>
    %192 = vector.broadcast %2 : f32 to vector<26x128xf32>
    %193 = arith.mulf %192, %186 : vector<26x128xf32>
    %194 = arith.addf %191, %193 : vector<26x128xf32>
    %195 = vector.broadcast %3 : f32 to vector<26x128xf32>
    %196 = arith.mulf %195, %180 : vector<26x128xf32>
    %197 = vector.broadcast %4 : f32 to vector<26x128xf32>
    %198 = arith.mulf %197, %183 : vector<26x128xf32>
    %199 = arith.addf %196, %198 : vector<26x128xf32>
    %200 = vector.broadcast %5 : f32 to vector<26x128xf32>
    %201 = arith.mulf %200, %186 : vector<26x128xf32>
    %202 = arith.addf %199, %201 : vector<26x128xf32>
    %203 = arith.addf %153, %202 : vector<26x128xf32>
    %204 = vector.broadcast %6 : f32 to vector<26x128xf32>
    %205 = arith.mulf %204, %180 : vector<26x128xf32>
    %206 = vector.broadcast %7 : f32 to vector<26x128xf32>
    %207 = arith.mulf %206, %183 : vector<26x128xf32>
    %208 = arith.addf %205, %207 : vector<26x128xf32>
    %209 = vector.broadcast %8 : f32 to vector<26x128xf32>
    %210 = arith.mulf %209, %186 : vector<26x128xf32>
    %211 = arith.addf %208, %210 : vector<26x128xf32>
    %212 = arith.addf %162, %211 : vector<26x128xf32>
    %213 = vector.broadcast %9 : f32 to vector<26x128xf32>
    %214 = arith.addf %212, %213 : vector<26x128xf32>
    %cst_76 = arith.constant 0.000000e+00 : f32
    %215 = vector.broadcast %cst_76 : f32 to vector<26x128xf32>
    %216 = arith.maximumf %214, %215 : vector<26x128xf32>
    %217 = arith.truncf %216 : vector<26x128xf32> to vector<26x128xbf16>
    %c96 = arith.constant 96 : index
    %c0_77 = arith.constant 0 : index
    %218 = vector.load %arg7[%c96, %c0_77] : memref<832x128xbf16, #tpu.memory_space<vmem>>, vector<26x128xbf16>
    tpu.vector_store %arg7[%c96, %c0_77], %217 {strides = array<i32>} : memref<832x128xbf16, #tpu.memory_space<vmem>>, vector<26x128xbf16>,
    %c6 = arith.constant 6 : index
    %c0_78 = arith.constant 0 : index
    %c0_79 = arith.constant 0 : index
    %219 = vector.load %arg3[%c6, %c0_78, %c0_79] : memref<28x28x128xbf16, #tpu.memory_space<vmem>>, vector<1x26x128xbf16>
    %220 = vector.shape_cast %219 : vector<1x26x128xbf16> to vector<26x128xbf16>
    %221 = arith.extf %220 : vector<26x128xbf16> to vector<26x128xf32>
    %c6_80 = arith.constant 6 : index
    %c1_81 = arith.constant 1 : index
    %c0_82 = arith.constant 0 : index
    %222 = vector.load %arg3[%c6_80, %c1_81, %c0_82] : memref<28x28x128xbf16, #tpu.memory_space<vmem>>, vector<1x26x128xbf16>
    %223 = vector.shape_cast %222 : vector<1x26x128xbf16> to vector<26x128xbf16>
    %224 = arith.extf %223 : vector<26x128xbf16> to vector<26x128xf32>
    %c6_83 = arith.constant 6 : index
    %c2_84 = arith.constant 2 : index
    %c0_85 = arith.constant 0 : index
    %225 = vector.load %arg3[%c6_83, %c2_84, %c0_85] : memref<28x28x128xbf16, #tpu.memory_space<vmem>>, vector<1x26x128xbf16>
    %226 = vector.shape_cast %225 : vector<1x26x128xbf16> to vector<26x128xbf16>
    %227 = arith.extf %226 : vector<26x128xbf16> to vector<26x128xf32>
    %228 = vector.broadcast %0 : f32 to vector<26x128xf32>
    %229 = arith.mulf %228, %221 : vector<26x128xf32>
    %230 = vector.broadcast %1 : f32 to vector<26x128xf32>
    %231 = arith.mulf %230, %224 : vector<26x128xf32>
    %232 = arith.addf %229, %231 : vector<26x128xf32>
    %233 = vector.broadcast %2 : f32 to vector<26x128xf32>
    %234 = arith.mulf %233, %227 : vector<26x128xf32>
    %235 = arith.addf %232, %234 : vector<26x128xf32>
    %236 = vector.broadcast %3 : f32 to vector<26x128xf32>
    %237 = arith.mulf %236, %221 : vector<26x128xf32>
    %238 = vector.broadcast %4 : f32 to vector<26x128xf32>
    %239 = arith.mulf %238, %224 : vector<26x128xf32>
    %240 = arith.addf %237, %239 : vector<26x128xf32>
    %241 = vector.broadcast %5 : f32 to vector<26x128xf32>
    %242 = arith.mulf %241, %227 : vector<26x128xf32>
    %243 = arith.addf %240, %242 : vector<26x128xf32>
    %244 = arith.addf %194, %243 : vector<26x128xf32>
    %245 = vector.broadcast %6 : f32 to vector<26x128xf32>
    %246 = arith.mulf %245, %221 : vector<26x128xf32>
    %247 = vector.broadcast %7 : f32 to vector<26x128xf32>
    %248 = arith.mulf %247, %224 : vector<26x128xf32>
    %249 = arith.addf %246, %248 : vector<26x128xf32>
    %250 = vector.broadcast %8 : f32 to vector<26x128xf32>
    %251 = arith.mulf %250, %227 : vector<26x128xf32>
    %252 = arith.addf %249, %251 : vector<26x128xf32>
    %253 = arith.addf %203, %252 : vector<26x128xf32>
    %254 = vector.broadcast %9 : f32 to vector<26x128xf32>
    %255 = arith.addf %253, %254 : vector<26x128xf32>
    %cst_86 = arith.constant 0.000000e+00 : f32
    %256 = vector.broadcast %cst_86 : f32 to vector<26x128xf32>
    %257 = arith.maximumf %255, %256 : vector<26x128xf32>
    %258 = arith.truncf %257 : vector<26x128xf32> to vector<26x128xbf16>
    %c128 = arith.constant 128 : index
    %c0_87 = arith.constant 0 : index
    %259 = vector.load %arg7[%c128, %c0_87] : memref<832x128xbf16, #tpu.memory_space<vmem>>, vector<26x128xbf16>
    tpu.vector_store %arg7[%c128, %c0_87], %258 {strides = array<i32>} : memref<832x128xbf16, #tpu.memory_space<vmem>>, vector<26x128xbf16>,
    %c7 = arith.constant 7 : index
    %c0_88 = arith.constant 0 : index
    %c0_89 = arith.constant 0 : index
    %260 = vector.load %arg3[%c7, %c0_88, %c0_89] : memref<28x28x128xbf16, #tpu.memory_space<vmem>>, vector<1x26x128xbf16>
    %261 = vector.shape_cast %260 : vector<1x26x128xbf16> to vector<26x128xbf16>
    %262 = arith.extf %261 : vector<26x128xbf16> to vector<26x128xf32>
    %c7_90 = arith.constant 7 : index
    %c1_91 = arith.constant 1 : index
    %c0_92 = arith.constant 0 : index
    %263 = vector.load %arg3[%c7_90, %c1_91, %c0_92] : memref<28x28x128xbf16, #tpu.memory_space<vmem>>, vector<1x26x128xbf16>
    %264 = vector.shape_cast %263 : vector<1x26x128xbf16> to vector<26x128xbf16>
    %265 = arith.extf %264 : vector<26x128xbf16> to vector<26x128xf32>
    %c7_93 = arith.constant 7 : index
    %c2_94 = arith.constant 2 : index
    %c0_95 = arith.constant 0 : index
    %266 = vector.load %arg3[%c7_93, %c2_94, %c0_95] : memref<28x28x128xbf16, #tpu.memory_space<vmem>>, vector<1x26x128xbf16>
    %267 = vector.shape_cast %266 : vector<1x26x128xbf16> to vector<26x128xbf16>
    %268 = arith.extf %267 : vector<26x128xbf16> to vector<26x128xf32>
    %269 = vector.broadcast %0 : f32 to vector<26x128xf32>
    %270 = arith.mulf %269, %262 : vector<26x128xf32>
    %271 = vector.broadcast %1 : f32 to vector<26x128xf32>
    %272 = arith.mulf %271, %265 : vector<26x128xf32>
    %273 = arith.addf %270, %272 : vector<26x128xf32>
    %274 = vector.broadcast %2 : f32 to vector<26x128xf32>
    %275 = arith.mulf %274, %268 : vector<26x128xf32>
    %276 = arith.addf %273, %275 : vector<26x128xf32>
    %277 = vector.broadcast %3 : f32 to vector<26x128xf32>
    %278 = arith.mulf %277, %262 : vector<26x128xf32>
    %279 = vector.broadcast %4 : f32 to vector<26x128xf32>
    %280 = arith.mulf %279, %265 : vector<26x128xf32>
    %281 = arith.addf %278, %280 : vector<26x128xf32>
    %282 = vector.broadcast %5 : f32 to vector<26x128xf32>
    %283 = arith.mulf %282, %268 : vector<26x128xf32>
    %284 = arith.addf %281, %283 : vector<26x128xf32>
    %285 = arith.addf %235, %284 : vector<26x128xf32>
    %286 = vector.broadcast %6 : f32 to vector<26x128xf32>
    %287 = arith.mulf %286, %262 : vector<26x128xf32>
    %288 = vector.broadcast %7 : f32 to vector<26x128xf32>
    %289 = arith.mulf %288, %265 : vector<26x128xf32>
    %290 = arith.addf %287, %289 : vector<26x128xf32>
    %291 = vector.broadcast %8 : f32 to vector<26x128xf32>
    %292 = arith.mulf %291, %268 : vector<26x128xf32>
    %293 = arith.addf %290, %292 : vector<26x128xf32>
    %294 = arith.addf %244, %293 : vector<26x128xf32>
    %295 = vector.broadcast %9 : f32 to vector<26x128xf32>
    %296 = arith.addf %294, %295 : vector<26x128xf32>
    %cst_96 = arith.constant 0.000000e+00 : f32
    %297 = vector.broadcast %cst_96 : f32 to vector<26x128xf32>
    %298 = arith.maximumf %296, %297 : vector<26x128xf32>
    %299 = arith.truncf %298 : vector<26x128xf32> to vector<26x128xbf16>
    %c160 = arith.constant 160 : index
    %c0_97 = arith.constant 0 : index
    %300 = vector.load %arg7[%c160, %c0_97] : memref<832x128xbf16, #tpu.memory_space<vmem>>, vector<26x128xbf16>
    tpu.vector_store %arg7[%c160, %c0_97], %299 {strides = array<i32>} : memref<832x128xbf16, #tpu.memory_space<vmem>>, vector<26x128xbf16>,
    %c8 = arith.constant 8 : index
    %c0_98 = arith.constant 0 : index
    %c0_99 = arith.constant 0 : index
    %301 = vector.load %arg3[%c8, %c0_98, %c0_99] : memref<28x28x128xbf16, #tpu.memory_space<vmem>>, vector<1x26x128xbf16>
    %302 = vector.shape_cast %301 : vector<1x26x128xbf16> to vector<26x128xbf16>
    %303 = arith.extf %302 : vector<26x128xbf16> to vector<26x128xf32>
    %c8_100 = arith.constant 8 : index
    %c1_101 = arith.constant 1 : index
    %c0_102 = arith.constant 0 : index
    %304 = vector.load %arg3[%c8_100, %c1_101, %c0_102] : memref<28x28x128xbf16, #tpu.memory_space<vmem>>, vector<1x26x128xbf16>
    %305 = vector.shape_cast %304 : vector<1x26x128xbf16> to vector<26x128xbf16>
    %306 = arith.extf %305 : vector<26x128xbf16> to vector<26x128xf32>
    %c8_103 = arith.constant 8 : index
    %c2_104 = arith.constant 2 : index
    %c0_105 = arith.constant 0 : index
    %307 = vector.load %arg3[%c8_103, %c2_104, %c0_105] : memref<28x28x128xbf16, #tpu.memory_space<vmem>>, vector<1x26x128xbf16>
    %308 = vector.shape_cast %307 : vector<1x26x128xbf16> to vector<26x128xbf16>
    %309 = arith.extf %308 : vector<26x128xbf16> to vector<26x128xf32>
    %310 = vector.broadcast %0 : f32 to vector<26x128xf32>
    %311 = arith.mulf %310, %303 : vector<26x128xf32>
    %312 = vector.broadcast %1 : f32 to vector<26x128xf32>
    %313 = arith.mulf %312, %306 : vector<26x128xf32>
    %314 = arith.addf %311, %313 : vector<26x128xf32>
    %315 = vector.broadcast %2 : f32 to vector<26x128xf32>
    %316 = arith.mulf %315, %309 : vector<26x128xf32>
    %317 = arith.addf %314, %316 : vector<26x128xf32>
    %318 = vector.broadcast %3 : f32 to vector<26x128xf32>
    %319 = arith.mulf %318, %303 : vector<26x128xf32>
    %320 = vector.broadcast %4 : f32 to vector<26x128xf32>
    %321 = arith.mulf %320, %306 : vector<26x128xf32>
    %322 = arith.addf %319, %321 : vector<26x128xf32>
    %323 = vector.broadcast %5 : f32 to vector<26x128xf32>
    %324 = arith.mulf %323, %309 : vector<26x128xf32>
    %325 = arith.addf %322, %324 : vector<26x128xf32>
    %326 = arith.addf %276, %325 : vector<26x128xf32>
    %327 = vector.broadcast %6 : f32 to vector<26x128xf32>
    %328 = arith.mulf %327, %303 : vector<26x128xf32>
    %329 = vector.broadcast %7 : f32 to vector<26x128xf32>
    %330 = arith.mulf %329, %306 : vector<26x128xf32>
    %331 = arith.addf %328, %330 : vector<26x128xf32>
    %332 = vector.broadcast %8 : f32 to vector<26x128xf32>
    %333 = arith.mulf %332, %309 : vector<26x128xf32>
    %334 = arith.addf %331, %333 : vector<26x128xf32>
    %335 = arith.addf %285, %334 : vector<26x128xf32>
    %336 = vector.broadcast %9 : f32 to vector<26x128xf32>
    %337 = arith.addf %335, %336 : vector<26x128xf32>
    %cst_106 = arith.constant 0.000000e+00 : f32
    %338 = vector.broadcast %cst_106 : f32 to vector<26x128xf32>
    %339 = arith.maximumf %337, %338 : vector<26x128xf32>
    %340 = arith.truncf %339 : vector<26x128xf32> to vector<26x128xbf16>
    %c192 = arith.constant 192 : index
    %c0_107 = arith.constant 0 : index
    %341 = vector.load %arg7[%c192, %c0_107] : memref<832x128xbf16, #tpu.memory_space<vmem>>, vector<26x128xbf16>
    tpu.vector_store %arg7[%c192, %c0_107], %340 {strides = array<i32>} : memref<832x128xbf16, #tpu.memory_space<vmem>>, vector<26x128xbf16>,
    %c9 = arith.constant 9 : index
    %c0_108 = arith.constant 0 : index
    %c0_109 = arith.constant 0 : index
    %342 = vector.load %arg3[%c9, %c0_108, %c0_109] : memref<28x28x128xbf16, #tpu.memory_space<vmem>>, vector<1x26x128xbf16>
    %343 = vector.shape_cast %342 : vector<1x26x128xbf16> to vector<26x128xbf16>
    %344 = arith.extf %343 : vector<26x128xbf16> to vector<26x128xf32>
    %c9_110 = arith.constant 9 : index
    %c1_111 = arith.constant 1 : index
    %c0_112 = arith.constant 0 : index
    %345 = vector.load %arg3[%c9_110, %c1_111, %c0_112] : memref<28x28x128xbf16, #tpu.memory_space<vmem>>, vector<1x26x128xbf16>
    %346 = vector.shape_cast %345 : vector<1x26x128xbf16> to vector<26x128xbf16>
    %347 = arith.extf %346 : vector<26x128xbf16> to vector<26x128xf32>
    %c9_113 = arith.constant 9 : index
    %c2_114 = arith.constant 2 : index
    %c0_115 = arith.constant 0 : index
    %348 = vector.load %arg3[%c9_113, %c2_114, %c0_115] : memref<28x28x128xbf16, #tpu.memory_space<vmem>>, vector<1x26x128xbf16>
    %349 = vector.shape_cast %348 : vector<1x26x128xbf16> to vector<26x128xbf16>
    %350 = arith.extf %349 : vector<26x128xbf16> to vector<26x128xf32>
    %351 = vector.broadcast %0 : f32 to vector<26x128xf32>
    %352 = arith.mulf %351, %344 : vector<26x128xf32>
    %353 = vector.broadcast %1 : f32 to vector<26x128xf32>
    %354 = arith.mulf %353, %347 : vector<26x128xf32>
    %355 = arith.addf %352, %354 : vector<26x128xf32>
    %356 = vector.broadcast %2 : f32 to vector<26x128xf32>
    %357 = arith.mulf %356, %350 : vector<26x128xf32>
    %358 = arith.addf %355, %357 : vector<26x128xf32>
    %359 = vector.broadcast %3 : f32 to vector<26x128xf32>
    %360 = arith.mulf %359, %344 : vector<26x128xf32>
    %361 = vector.broadcast %4 : f32 to vector<26x128xf32>
    %362 = arith.mulf %361, %347 : vector<26x128xf32>
    %363 = arith.addf %360, %362 : vector<26x128xf32>
    %364 = vector.broadcast %5 : f32 to vector<26x128xf32>
    %365 = arith.mulf %364, %350 : vector<26x128xf32>
    %366 = arith.addf %363, %365 : vector<26x128xf32>
    %367 = arith.addf %317, %366 : vector<26x128xf32>
    %368 = vector.broadcast %6 : f32 to vector<26x128xf32>
    %369 = arith.mulf %368, %344 : vector<26x128xf32>
    %370 = vector.broadcast %7 : f32 to vector<26x128xf32>
    %371 = arith.mulf %370, %347 : vector<26x128xf32>
    %372 = arith.addf %369, %371 : vector<26x128xf32>
    %373 = vector.broadcast %8 : f32 to vector<26x128xf32>
    %374 = arith.mulf %373, %350 : vector<26x128xf32>
    %375 = arith.addf %372, %374 : vector<26x128xf32>
    %376 = arith.addf %326, %375 : vector<26x128xf32>
    %377 = vector.broadcast %9 : f32 to vector<26x128xf32>
    %378 = arith.addf %376, %377 : vector<26x128xf32>
    %cst_116 = arith.constant 0.000000e+00 : f32
    %379 = vector.broadcast %cst_116 : f32 to vector<26x128xf32>
    %380 = arith.maximumf %378, %379 : vector<26x128xf32>
    %381 = arith.truncf %380 : vector<26x128xf32> to vector<26x128xbf16>
    %c224 = arith.constant 224 : index
    %c0_117 = arith.constant 0 : index
    %382 = vector.load %arg7[%c224, %c0_117] : memref<832x128xbf16, #tpu.memory_space<vmem>>, vector<26x128xbf16>
    tpu.vector_store %arg7[%c224, %c0_117], %381 {strides = array<i32>} : memref<832x128xbf16, #tpu.memory_space<vmem>>, vector<26x128xbf16>,
    %c10 = arith.constant 10 : index
    %c0_118 = arith.constant 0 : index
    %c0_119 = arith.constant 0 : index
    %383 = vector.load %arg3[%c10, %c0_118, %c0_119] : memref<28x28x128xbf16, #tpu.memory_space<vmem>>, vector<1x26x128xbf16>
    %384 = vector.shape_cast %383 : vector<1x26x128xbf16> to vector<26x128xbf16>
    %385 = arith.extf %384 : vector<26x128xbf16> to vector<26x128xf32>
    %c10_120 = arith.constant 10 : index
    %c1_121 = arith.constant 1 : index
    %c0_122 = arith.constant 0 : index
    %386 = vector.load %arg3[%c10_120, %c1_121, %c0_122] : memref<28x28x128xbf16, #tpu.memory_space<vmem>>, vector<1x26x128xbf16>
    %387 = vector.shape_cast %386 : vector<1x26x128xbf16> to vector<26x128xbf16>
    %388 = arith.extf %387 : vector<26x128xbf16> to vector<26x128xf32>
    %c10_123 = arith.constant 10 : index
    %c2_124 = arith.constant 2 : index
    %c0_125 = arith.constant 0 : index
    %389 = vector.load %arg3[%c10_123, %c2_124, %c0_125] : memref<28x28x128xbf16, #tpu.memory_space<vmem>>, vector<1x26x128xbf16>
    %390 = vector.shape_cast %389 : vector<1x26x128xbf16> to vector<26x128xbf16>
    %391 = arith.extf %390 : vector<26x128xbf16> to vector<26x128xf32>
    %392 = vector.broadcast %0 : f32 to vector<26x128xf32>
    %393 = arith.mulf %392, %385 : vector<26x128xf32>
    %394 = vector.broadcast %1 : f32 to vector<26x128xf32>
    %395 = arith.mulf %394, %388 : vector<26x128xf32>
    %396 = arith.addf %393, %395 : vector<26x128xf32>
    %397 = vector.broadcast %2 : f32 to vector<26x128xf32>
    %398 = arith.mulf %397, %391 : vector<26x128xf32>
    %399 = arith.addf %396, %398 : vector<26x128xf32>
    %400 = vector.broadcast %3 : f32 to vector<26x128xf32>
    %401 = arith.mulf %400, %385 : vector<26x128xf32>
    %402 = vector.broadcast %4 : f32 to vector<26x128xf32>
    %403 = arith.mulf %402, %388 : vector<26x128xf32>
    %404 = arith.addf %401, %403 : vector<26x128xf32>
    %405 = vector.broadcast %5 : f32 to vector<26x128xf32>
    %406 = arith.mulf %405, %391 : vector<26x128xf32>
    %407 = arith.addf %404, %406 : vector<26x128xf32>
    %408 = arith.addf %358, %407 : vector<26x128xf32>
    %409 = vector.broadcast %6 : f32 to vector<26x128xf32>
    %410 = arith.mulf %409, %385 : vector<26x128xf32>
    %411 = vector.broadcast %7 : f32 to vector<26x128xf32>
    %412 = arith.mulf %411, %388 : vector<26x128xf32>
    %413 = arith.addf %410, %412 : vector<26x128xf32>
    %414 = vector.broadcast %8 : f32 to vector<26x128xf32>
    %415 = arith.mulf %414, %391 : vector<26x128xf32>
    %416 = arith.addf %413, %415 : vector<26x128xf32>
    %417 = arith.addf %367, %416 : vector<26x128xf32>
    %418 = vector.broadcast %9 : f32 to vector<26x128xf32>
    %419 = arith.addf %417, %418 : vector<26x128xf32>
    %cst_126 = arith.constant 0.000000e+00 : f32
    %420 = vector.broadcast %cst_126 : f32 to vector<26x128xf32>
    %421 = arith.maximumf %419, %420 : vector<26x128xf32>
    %422 = arith.truncf %421 : vector<26x128xf32> to vector<26x128xbf16>
    %c256 = arith.constant 256 : index
    %c0_127 = arith.constant 0 : index
    %423 = vector.load %arg7[%c256, %c0_127] : memref<832x128xbf16, #tpu.memory_space<vmem>>, vector<26x128xbf16>
    tpu.vector_store %arg7[%c256, %c0_127], %422 {strides = array<i32>} : memref<832x128xbf16, #tpu.memory_space<vmem>>, vector<26x128xbf16>,
    %c11 = arith.constant 11 : index
    %c0_128 = arith.constant 0 : index
    %c0_129 = arith.constant 0 : index
    %424 = vector.load %arg3[%c11, %c0_128, %c0_129] : memref<28x28x128xbf16, #tpu.memory_space<vmem>>, vector<1x26x128xbf16>
    %425 = vector.shape_cast %424 : vector<1x26x128xbf16> to vector<26x128xbf16>
    %426 = arith.extf %425 : vector<26x128xbf16> to vector<26x128xf32>
    %c11_130 = arith.constant 11 : index
    %c1_131 = arith.constant 1 : index
    %c0_132 = arith.constant 0 : index
    %427 = vector.load %arg3[%c11_130, %c1_131, %c0_132] : memref<28x28x128xbf16, #tpu.memory_space<vmem>>, vector<1x26x128xbf16>
    %428 = vector.shape_cast %427 : vector<1x26x128xbf16> to vector<26x128xbf16>
    %429 = arith.extf %428 : vector<26x128xbf16> to vector<26x128xf32>
    %c11_133 = arith.constant 11 : index
    %c2_134 = arith.constant 2 : index
    %c0_135 = arith.constant 0 : index
    %430 = vector.load %arg3[%c11_133, %c2_134, %c0_135] : memref<28x28x128xbf16, #tpu.memory_space<vmem>>, vector<1x26x128xbf16>
    %431 = vector.shape_cast %430 : vector<1x26x128xbf16> to vector<26x128xbf16>
    %432 = arith.extf %431 : vector<26x128xbf16> to vector<26x128xf32>
    %433 = vector.broadcast %0 : f32 to vector<26x128xf32>
    %434 = arith.mulf %433, %426 : vector<26x128xf32>
    %435 = vector.broadcast %1 : f32 to vector<26x128xf32>
    %436 = arith.mulf %435, %429 : vector<26x128xf32>
    %437 = arith.addf %434, %436 : vector<26x128xf32>
    %438 = vector.broadcast %2 : f32 to vector<26x128xf32>
    %439 = arith.mulf %438, %432 : vector<26x128xf32>
    %440 = arith.addf %437, %439 : vector<26x128xf32>
    %441 = vector.broadcast %3 : f32 to vector<26x128xf32>
    %442 = arith.mulf %441, %426 : vector<26x128xf32>
    %443 = vector.broadcast %4 : f32 to vector<26x128xf32>
    %444 = arith.mulf %443, %429 : vector<26x128xf32>
    %445 = arith.addf %442, %444 : vector<26x128xf32>
    %446 = vector.broadcast %5 : f32 to vector<26x128xf32>
    %447 = arith.mulf %446, %432 : vector<26x128xf32>
    %448 = arith.addf %445, %447 : vector<26x128xf32>
    %449 = arith.addf %399, %448 : vector<26x128xf32>
    %450 = vector.broadcast %6 : f32 to vector<26x128xf32>
    %451 = arith.mulf %450, %426 : vector<26x128xf32>
    %452 = vector.broadcast %7 : f32 to vector<26x128xf32>
    %453 = arith.mulf %452, %429 : vector<26x128xf32>
    %454 = arith.addf %451, %453 : vector<26x128xf32>
    %455 = vector.broadcast %8 : f32 to vector<26x128xf32>
    %456 = arith.mulf %455, %432 : vector<26x128xf32>
    %457 = arith.addf %454, %456 : vector<26x128xf32>
    %458 = arith.addf %408, %457 : vector<26x128xf32>
    %459 = vector.broadcast %9 : f32 to vector<26x128xf32>
    %460 = arith.addf %458, %459 : vector<26x128xf32>
    %cst_136 = arith.constant 0.000000e+00 : f32
    %461 = vector.broadcast %cst_136 : f32 to vector<26x128xf32>
    %462 = arith.maximumf %460, %461 : vector<26x128xf32>
    %463 = arith.truncf %462 : vector<26x128xf32> to vector<26x128xbf16>
    %c288 = arith.constant 288 : index
    %c0_137 = arith.constant 0 : index
    %464 = vector.load %arg7[%c288, %c0_137] : memref<832x128xbf16, #tpu.memory_space<vmem>>, vector<26x128xbf16>
    tpu.vector_store %arg7[%c288, %c0_137], %463 {strides = array<i32>} : memref<832x128xbf16, #tpu.memory_space<vmem>>, vector<26x128xbf16>,
    %c12 = arith.constant 12 : index
    %c0_138 = arith.constant 0 : index
    %c0_139 = arith.constant 0 : index
    %465 = vector.load %arg3[%c12, %c0_138, %c0_139] : memref<28x28x128xbf16, #tpu.memory_space<vmem>>, vector<1x26x128xbf16>
    %466 = vector.shape_cast %465 : vector<1x26x128xbf16> to vector<26x128xbf16>
    %467 = arith.extf %466 : vector<26x128xbf16> to vector<26x128xf32>
    %c12_140 = arith.constant 12 : index
    %c1_141 = arith.constant 1 : index
    %c0_142 = arith.constant 0 : index
    %468 = vector.load %arg3[%c12_140, %c1_141, %c0_142] : memref<28x28x128xbf16, #tpu.memory_space<vmem>>, vector<1x26x128xbf16>
    %469 = vector.shape_cast %468 : vector<1x26x128xbf16> to vector<26x128xbf16>
    %470 = arith.extf %469 : vector<26x128xbf16> to vector<26x128xf32>
    %c12_143 = arith.constant 12 : index
    %c2_144 = arith.constant 2 : index
    %c0_145 = arith.constant 0 : index
    %471 = vector.load %arg3[%c12_143, %c2_144, %c0_145] : memref<28x28x128xbf16, #tpu.memory_space<vmem>>, vector<1x26x128xbf16>
    %472 = vector.shape_cast %471 : vector<1x26x128xbf16> to vector<26x128xbf16>
    %473 = arith.extf %472 : vector<26x128xbf16> to vector<26x128xf32>
    %474 = vector.broadcast %0 : f32 to vector<26x128xf32>
    %475 = arith.mulf %474, %467 : vector<26x128xf32>
    %476 = vector.broadcast %1 : f32 to vector<26x128xf32>
    %477 = arith.mulf %476, %470 : vector<26x128xf32>
    %478 = arith.addf %475, %477 : vector<26x128xf32>
    %479 = vector.broadcast %2 : f32 to vector<26x128xf32>
    %480 = arith.mulf %479, %473 : vector<26x128xf32>
    %481 = arith.addf %478, %480 : vector<26x128xf32>
    %482 = vector.broadcast %3 : f32 to vector<26x128xf32>
    %483 = arith.mulf %482, %467 : vector<26x128xf32>
    %484 = vector.broadcast %4 : f32 to vector<26x128xf32>
    %485 = arith.mulf %484, %470 : vector<26x128xf32>
    %486 = arith.addf %483, %485 : vector<26x128xf32>
    %487 = vector.broadcast %5 : f32 to vector<26x128xf32>
    %488 = arith.mulf %487, %473 : vector<26x128xf32>
    %489 = arith.addf %486, %488 : vector<26x128xf32>
    %490 = arith.addf %440, %489 : vector<26x128xf32>
    %491 = vector.broadcast %6 : f32 to vector<26x128xf32>
    %492 = arith.mulf %491, %467 : vector<26x128xf32>
    %493 = vector.broadcast %7 : f32 to vector<26x128xf32>
    %494 = arith.mulf %493, %470 : vector<26x128xf32>
    %495 = arith.addf %492, %494 : vector<26x128xf32>
    %496 = vector.broadcast %8 : f32 to vector<26x128xf32>
    %497 = arith.mulf %496, %473 : vector<26x128xf32>
    %498 = arith.addf %495, %497 : vector<26x128xf32>
    %499 = arith.addf %449, %498 : vector<26x128xf32>
    %500 = vector.broadcast %9 : f32 to vector<26x128xf32>
    %501 = arith.addf %499, %500 : vector<26x128xf32>
    %cst_146 = arith.constant 0.000000e+00 : f32
    %502 = vector.broadcast %cst_146 : f32 to vector<26x128xf32>
    %503 = arith.maximumf %501, %502 : vector<26x128xf32>
    %504 = arith.truncf %503 : vector<26x128xf32> to vector<26x128xbf16>
    %c320 = arith.constant 320 : index
    %c0_147 = arith.constant 0 : index
    %505 = vector.load %arg7[%c320, %c0_147] : memref<832x128xbf16, #tpu.memory_space<vmem>>, vector<26x128xbf16>
    tpu.vector_store %arg7[%c320, %c0_147], %504 {strides = array<i32>} : memref<832x128xbf16, #tpu.memory_space<vmem>>, vector<26x128xbf16>,
    %c13 = arith.constant 13 : index
    %c0_148 = arith.constant 0 : index
    %c0_149 = arith.constant 0 : index
    %506 = vector.load %arg3[%c13, %c0_148, %c0_149] : memref<28x28x128xbf16, #tpu.memory_space<vmem>>, vector<1x26x128xbf16>
    %507 = vector.shape_cast %506 : vector<1x26x128xbf16> to vector<26x128xbf16>
    %508 = arith.extf %507 : vector<26x128xbf16> to vector<26x128xf32>
    %c13_150 = arith.constant 13 : index
    %c1_151 = arith.constant 1 : index
    %c0_152 = arith.constant 0 : index
    %509 = vector.load %arg3[%c13_150, %c1_151, %c0_152] : memref<28x28x128xbf16, #tpu.memory_space<vmem>>, vector<1x26x128xbf16>
    %510 = vector.shape_cast %509 : vector<1x26x128xbf16> to vector<26x128xbf16>
    %511 = arith.extf %510 : vector<26x128xbf16> to vector<26x128xf32>
    %c13_153 = arith.constant 13 : index
    %c2_154 = arith.constant 2 : index
    %c0_155 = arith.constant 0 : index
    %512 = vector.load %arg3[%c13_153, %c2_154, %c0_155] : memref<28x28x128xbf16, #tpu.memory_space<vmem>>, vector<1x26x128xbf16>
    %513 = vector.shape_cast %512 : vector<1x26x128xbf16> to vector<26x128xbf16>
    %514 = arith.extf %513 : vector<26x128xbf16> to vector<26x128xf32>
    %515 = vector.broadcast %0 : f32 to vector<26x128xf32>
    %516 = arith.mulf %515, %508 : vector<26x128xf32>
    %517 = vector.broadcast %1 : f32 to vector<26x128xf32>
    %518 = arith.mulf %517, %511 : vector<26x128xf32>
    %519 = arith.addf %516, %518 : vector<26x128xf32>
    %520 = vector.broadcast %2 : f32 to vector<26x128xf32>
    %521 = arith.mulf %520, %514 : vector<26x128xf32>
    %522 = arith.addf %519, %521 : vector<26x128xf32>
    %523 = vector.broadcast %3 : f32 to vector<26x128xf32>
    %524 = arith.mulf %523, %508 : vector<26x128xf32>
    %525 = vector.broadcast %4 : f32 to vector<26x128xf32>
    %526 = arith.mulf %525, %511 : vector<26x128xf32>
    %527 = arith.addf %524, %526 : vector<26x128xf32>
    %528 = vector.broadcast %5 : f32 to vector<26x128xf32>
    %529 = arith.mulf %528, %514 : vector<26x128xf32>
    %530 = arith.addf %527, %529 : vector<26x128xf32>
    %531 = arith.addf %481, %530 : vector<26x128xf32>
    %532 = vector.broadcast %6 : f32 to vector<26x128xf32>
    %533 = arith.mulf %532, %508 : vector<26x128xf32>
    %534 = vector.broadcast %7 : f32 to vector<26x128xf32>
    %535 = arith.mulf %534, %511 : vector<26x128xf32>
    %536 = arith.addf %533, %535 : vector<26x128xf32>
    %537 = vector.broadcast %8 : f32 to vector<26x128xf32>
    %538 = arith.mulf %537, %514 : vector<26x128xf32>
    %539 = arith.addf %536, %538 : vector<26x128xf32>
    %540 = arith.addf %490, %539 : vector<26x128xf32>
    %541 = vector.broadcast %9 : f32 to vector<26x128xf32>
    %542 = arith.addf %540, %541 : vector<26x128xf32>
    %cst_156 = arith.constant 0.000000e+00 : f32
    %543 = vector.broadcast %cst_156 : f32 to vector<26x128xf32>
    %544 = arith.maximumf %542, %543 : vector<26x128xf32>
    %545 = arith.truncf %544 : vector<26x128xf32> to vector<26x128xbf16>
    %c352 = arith.constant 352 : index
    %c0_157 = arith.constant 0 : index
    %546 = vector.load %arg7[%c352, %c0_157] : memref<832x128xbf16, #tpu.memory_space<vmem>>, vector<26x128xbf16>
    tpu.vector_store %arg7[%c352, %c0_157], %545 {strides = array<i32>} : memref<832x128xbf16, #tpu.memory_space<vmem>>, vector<26x128xbf16>,
    %c14 = arith.constant 14 : index
    %c0_158 = arith.constant 0 : index
    %c0_159 = arith.constant 0 : index
    %547 = vector.load %arg3[%c14, %c0_158, %c0_159] : memref<28x28x128xbf16, #tpu.memory_space<vmem>>, vector<1x26x128xbf16>
    %548 = vector.shape_cast %547 : vector<1x26x128xbf16> to vector<26x128xbf16>
    %549 = arith.extf %548 : vector<26x128xbf16> to vector<26x128xf32>
    %c14_160 = arith.constant 14 : index
    %c1_161 = arith.constant 1 : index
    %c0_162 = arith.constant 0 : index
    %550 = vector.load %arg3[%c14_160, %c1_161, %c0_162] : memref<28x28x128xbf16, #tpu.memory_space<vmem>>, vector<1x26x128xbf16>
    %551 = vector.shape_cast %550 : vector<1x26x128xbf16> to vector<26x128xbf16>
    %552 = arith.extf %551 : vector<26x128xbf16> to vector<26x128xf32>
    %c14_163 = arith.constant 14 : index
    %c2_164 = arith.constant 2 : index
    %c0_165 = arith.constant 0 : index
    %553 = vector.load %arg3[%c14_163, %c2_164, %c0_165] : memref<28x28x128xbf16, #tpu.memory_space<vmem>>, vector<1x26x128xbf16>
    %554 = vector.shape_cast %553 : vector<1x26x128xbf16> to vector<26x128xbf16>
    %555 = arith.extf %554 : vector<26x128xbf16> to vector<26x128xf32>
    %556 = vector.broadcast %0 : f32 to vector<26x128xf32>
    %557 = arith.mulf %556, %549 : vector<26x128xf32>
    %558 = vector.broadcast %1 : f32 to vector<26x128xf32>
    %559 = arith.mulf %558, %552 : vector<26x128xf32>
    %560 = arith.addf %557, %559 : vector<26x128xf32>
    %561 = vector.broadcast %2 : f32 to vector<26x128xf32>
    %562 = arith.mulf %561, %555 : vector<26x128xf32>
    %563 = arith.addf %560, %562 : vector<26x128xf32>
    %564 = vector.broadcast %3 : f32 to vector<26x128xf32>
    %565 = arith.mulf %564, %549 : vector<26x128xf32>
    %566 = vector.broadcast %4 : f32 to vector<26x128xf32>
    %567 = arith.mulf %566, %552 : vector<26x128xf32>
    %568 = arith.addf %565, %567 : vector<26x128xf32>
    %569 = vector.broadcast %5 : f32 to vector<26x128xf32>
    %570 = arith.mulf %569, %555 : vector<26x128xf32>
    %571 = arith.addf %568, %570 : vector<26x128xf32>
    %572 = arith.addf %522, %571 : vector<26x128xf32>
    %573 = vector.broadcast %6 : f32 to vector<26x128xf32>
    %574 = arith.mulf %573, %549 : vector<26x128xf32>
    %575 = vector.broadcast %7 : f32 to vector<26x128xf32>
    %576 = arith.mulf %575, %552 : vector<26x128xf32>
    %577 = arith.addf %574, %576 : vector<26x128xf32>
    %578 = vector.broadcast %8 : f32 to vector<26x128xf32>
    %579 = arith.mulf %578, %555 : vector<26x128xf32>
    %580 = arith.addf %577, %579 : vector<26x128xf32>
    %581 = arith.addf %531, %580 : vector<26x128xf32>
    %582 = vector.broadcast %9 : f32 to vector<26x128xf32>
    %583 = arith.addf %581, %582 : vector<26x128xf32>
    %cst_166 = arith.constant 0.000000e+00 : f32
    %584 = vector.broadcast %cst_166 : f32 to vector<26x128xf32>
    %585 = arith.maximumf %583, %584 : vector<26x128xf32>
    %586 = arith.truncf %585 : vector<26x128xf32> to vector<26x128xbf16>
    %c384 = arith.constant 384 : index
    %c0_167 = arith.constant 0 : index
    %587 = vector.load %arg7[%c384, %c0_167] : memref<832x128xbf16, #tpu.memory_space<vmem>>, vector<26x128xbf16>
    tpu.vector_store %arg7[%c384, %c0_167], %586 {strides = array<i32>} : memref<832x128xbf16, #tpu.memory_space<vmem>>, vector<26x128xbf16>,
    %c15 = arith.constant 15 : index
    %c0_168 = arith.constant 0 : index
    %c0_169 = arith.constant 0 : index
    %588 = vector.load %arg3[%c15, %c0_168, %c0_169] : memref<28x28x128xbf16, #tpu.memory_space<vmem>>, vector<1x26x128xbf16>
    %589 = vector.shape_cast %588 : vector<1x26x128xbf16> to vector<26x128xbf16>
    %590 = arith.extf %589 : vector<26x128xbf16> to vector<26x128xf32>
    %c15_170 = arith.constant 15 : index
    %c1_171 = arith.constant 1 : index
    %c0_172 = arith.constant 0 : index
    %591 = vector.load %arg3[%c15_170, %c1_171, %c0_172] : memref<28x28x128xbf16, #tpu.memory_space<vmem>>, vector<1x26x128xbf16>
    %592 = vector.shape_cast %591 : vector<1x26x128xbf16> to vector<26x128xbf16>
    %593 = arith.extf %592 : vector<26x128xbf16> to vector<26x128xf32>
    %c15_173 = arith.constant 15 : index
    %c2_174 = arith.constant 2 : index
    %c0_175 = arith.constant 0 : index
    %594 = vector.load %arg3[%c15_173, %c2_174, %c0_175] : memref<28x28x128xbf16, #tpu.memory_space<vmem>>, vector<1x26x128xbf16>
    %595 = vector.shape_cast %594 : vector<1x26x128xbf16> to vector<26x128xbf16>
    %596 = arith.extf %595 : vector<26x128xbf16> to vector<26x128xf32>
    %597 = vector.broadcast %0 : f32 to vector<26x128xf32>
    %598 = arith.mulf %597, %590 : vector<26x128xf32>
    %599 = vector.broadcast %1 : f32 to vector<26x128xf32>
    %600 = arith.mulf %599, %593 : vector<26x128xf32>
    %601 = arith.addf %598, %600 : vector<26x128xf32>
    %602 = vector.broadcast %2 : f32 to vector<26x128xf32>
    %603 = arith.mulf %602, %596 : vector<26x128xf32>
    %604 = arith.addf %601, %603 : vector<26x128xf32>
    %605 = vector.broadcast %3 : f32 to vector<26x128xf32>
    %606 = arith.mulf %605, %590 : vector<26x128xf32>
    %607 = vector.broadcast %4 : f32 to vector<26x128xf32>
    %608 = arith.mulf %607, %593 : vector<26x128xf32>
    %609 = arith.addf %606, %608 : vector<26x128xf32>
    %610 = vector.broadcast %5 : f32 to vector<26x128xf32>
    %611 = arith.mulf %610, %596 : vector<26x128xf32>
    %612 = arith.addf %609, %611 : vector<26x128xf32>
    %613 = arith.addf %563, %612 : vector<26x128xf32>
    %614 = vector.broadcast %6 : f32 to vector<26x128xf32>
    %615 = arith.mulf %614, %590 : vector<26x128xf32>
    %616 = vector.broadcast %7 : f32 to vector<26x128xf32>
    %617 = arith.mulf %616, %593 : vector<26x128xf32>
    %618 = arith.addf %615, %617 : vector<26x128xf32>
    %619 = vector.broadcast %8 : f32 to vector<26x128xf32>
    %620 = arith.mulf %619, %596 : vector<26x128xf32>
    %621 = arith.addf %618, %620 : vector<26x128xf32>
    %622 = arith.addf %572, %621 : vector<26x128xf32>
    %623 = vector.broadcast %9 : f32 to vector<26x128xf32>
    %624 = arith.addf %622, %623 : vector<26x128xf32>
    %cst_176 = arith.constant 0.000000e+00 : f32
    %625 = vector.broadcast %cst_176 : f32 to vector<26x128xf32>
    %626 = arith.maximumf %624, %625 : vector<26x128xf32>
    %627 = arith.truncf %626 : vector<26x128xf32> to vector<26x128xbf16>
    %c416 = arith.constant 416 : index
    %c0_177 = arith.constant 0 : index
    %628 = vector.load %arg7[%c416, %c0_177] : memref<832x128xbf16, #tpu.memory_space<vmem>>, vector<26x128xbf16>
    tpu.vector_store %arg7[%c416, %c0_177], %627 {strides = array<i32>} : memref<832x128xbf16, #tpu.memory_space<vmem>>, vector<26x128xbf16>,
    %c16 = arith.constant 16 : index
    %c0_178 = arith.constant 0 : index
    %c0_179 = arith.constant 0 : index
    %629 = vector.load %arg3[%c16, %c0_178, %c0_179] : memref<28x28x128xbf16, #tpu.memory_space<vmem>>, vector<1x26x128xbf16>
    %630 = vector.shape_cast %629 : vector<1x26x128xbf16> to vector<26x128xbf16>
    %631 = arith.extf %630 : vector<26x128xbf16> to vector<26x128xf32>
    %c16_180 = arith.constant 16 : index
    %c1_181 = arith.constant 1 : index
    %c0_182 = arith.constant 0 : index
    %632 = vector.load %arg3[%c16_180, %c1_181, %c0_182] : memref<28x28x128xbf16, #tpu.memory_space<vmem>>, vector<1x26x128xbf16>
    %633 = vector.shape_cast %632 : vector<1x26x128xbf16> to vector<26x128xbf16>
    %634 = arith.extf %633 : vector<26x128xbf16> to vector<26x128xf32>
    %c16_183 = arith.constant 16 : index
    %c2_184 = arith.constant 2 : index
    %c0_185 = arith.constant 0 : index
    %635 = vector.load %arg3[%c16_183, %c2_184, %c0_185] : memref<28x28x128xbf16, #tpu.memory_space<vmem>>, vector<1x26x128xbf16>
    %636 = vector.shape_cast %635 : vector<1x26x128xbf16> to vector<26x128xbf16>
    %637 = arith.extf %636 : vector<26x128xbf16> to vector<26x128xf32>
    %638 = vector.broadcast %0 : f32 to vector<26x128xf32>
    %639 = arith.mulf %638, %631 : vector<26x128xf32>
    %640 = vector.broadcast %1 : f32 to vector<26x128xf32>
    %641 = arith.mulf %640, %634 : vector<26x128xf32>
    %642 = arith.addf %639, %641 : vector<26x128xf32>
    %643 = vector.broadcast %2 : f32 to vector<26x128xf32>
    %644 = arith.mulf %643, %637 : vector<26x128xf32>
    %645 = arith.addf %642, %644 : vector<26x128xf32>
    %646 = vector.broadcast %3 : f32 to vector<26x128xf32>
    %647 = arith.mulf %646, %631 : vector<26x128xf32>
    %648 = vector.broadcast %4 : f32 to vector<26x128xf32>
    %649 = arith.mulf %648, %634 : vector<26x128xf32>
    %650 = arith.addf %647, %649 : vector<26x128xf32>
    %651 = vector.broadcast %5 : f32 to vector<26x128xf32>
    %652 = arith.mulf %651, %637 : vector<26x128xf32>
    %653 = arith.addf %650, %652 : vector<26x128xf32>
    %654 = arith.addf %604, %653 : vector<26x128xf32>
    %655 = vector.broadcast %6 : f32 to vector<26x128xf32>
    %656 = arith.mulf %655, %631 : vector<26x128xf32>
    %657 = vector.broadcast %7 : f32 to vector<26x128xf32>
    %658 = arith.mulf %657, %634 : vector<26x128xf32>
    %659 = arith.addf %656, %658 : vector<26x128xf32>
    %660 = vector.broadcast %8 : f32 to vector<26x128xf32>
    %661 = arith.mulf %660, %637 : vector<26x128xf32>
    %662 = arith.addf %659, %661 : vector<26x128xf32>
    %663 = arith.addf %613, %662 : vector<26x128xf32>
    %664 = vector.broadcast %9 : f32 to vector<26x128xf32>
    %665 = arith.addf %663, %664 : vector<26x128xf32>
    %cst_186 = arith.constant 0.000000e+00 : f32
    %666 = vector.broadcast %cst_186 : f32 to vector<26x128xf32>
    %667 = arith.maximumf %665, %666 : vector<26x128xf32>
    %668 = arith.truncf %667 : vector<26x128xf32> to vector<26x128xbf16>
    %c448 = arith.constant 448 : index
    %c0_187 = arith.constant 0 : index
    %669 = vector.load %arg7[%c448, %c0_187] : memref<832x128xbf16, #tpu.memory_space<vmem>>, vector<26x128xbf16>
    tpu.vector_store %arg7[%c448, %c0_187], %668 {strides = array<i32>} : memref<832x128xbf16, #tpu.memory_space<vmem>>, vector<26x128xbf16>,
    %c17 = arith.constant 17 : index
    %c0_188 = arith.constant 0 : index
    %c0_189 = arith.constant 0 : index
    %670 = vector.load %arg3[%c17, %c0_188, %c0_189] : memref<28x28x128xbf16, #tpu.memory_space<vmem>>, vector<1x26x128xbf16>
    %671 = vector.shape_cast %670 : vector<1x26x128xbf16> to vector<26x128xbf16>
    %672 = arith.extf %671 : vector<26x128xbf16> to vector<26x128xf32>
    %c17_190 = arith.constant 17 : index
    %c1_191 = arith.constant 1 : index
    %c0_192 = arith.constant 0 : index
    %673 = vector.load %arg3[%c17_190, %c1_191, %c0_192] : memref<28x28x128xbf16, #tpu.memory_space<vmem>>, vector<1x26x128xbf16>
    %674 = vector.shape_cast %673 : vector<1x26x128xbf16> to vector<26x128xbf16>
    %675 = arith.extf %674 : vector<26x128xbf16> to vector<26x128xf32>
    %c17_193 = arith.constant 17 : index
    %c2_194 = arith.constant 2 : index
    %c0_195 = arith.constant 0 : index
    %676 = vector.load %arg3[%c17_193, %c2_194, %c0_195] : memref<28x28x128xbf16, #tpu.memory_space<vmem>>, vector<1x26x128xbf16>
    %677 = vector.shape_cast %676 : vector<1x26x128xbf16> to vector<26x128xbf16>
    %678 = arith.extf %677 : vector<26x128xbf16> to vector<26x128xf32>
    %679 = vector.broadcast %0 : f32 to vector<26x128xf32>
    %680 = arith.mulf %679, %672 : vector<26x128xf32>
    %681 = vector.broadcast %1 : f32 to vector<26x128xf32>
    %682 = arith.mulf %681, %675 : vector<26x128xf32>
    %683 = arith.addf %680, %682 : vector<26x128xf32>
    %684 = vector.broadcast %2 : f32 to vector<26x128xf32>
    %685 = arith.mulf %684, %678 : vector<26x128xf32>
    %686 = arith.addf %683, %685 : vector<26x128xf32>
    %687 = vector.broadcast %3 : f32 to vector<26x128xf32>
    %688 = arith.mulf %687, %672 : vector<26x128xf32>
    %689 = vector.broadcast %4 : f32 to vector<26x128xf32>
    %690 = arith.mulf %689, %675 : vector<26x128xf32>
    %691 = arith.addf %688, %690 : vector<26x128xf32>
    %692 = vector.broadcast %5 : f32 to vector<26x128xf32>
    %693 = arith.mulf %692, %678 : vector<26x128xf32>
    %694 = arith.addf %691, %693 : vector<26x128xf32>
    %695 = arith.addf %645, %694 : vector<26x128xf32>
    %696 = vector.broadcast %6 : f32 to vector<26x128xf32>
    %697 = arith.mulf %696, %672 : vector<26x128xf32>
    %698 = vector.broadcast %7 : f32 to vector<26x128xf32>
    %699 = arith.mulf %698, %675 : vector<26x128xf32>
    %700 = arith.addf %697, %699 : vector<26x128xf32>
    %701 = vector.broadcast %8 : f32 to vector<26x128xf32>
    %702 = arith.mulf %701, %678 : vector<26x128xf32>
    %703 = arith.addf %700, %702 : vector<26x128xf32>
    %704 = arith.addf %654, %703 : vector<26x128xf32>
    %705 = vector.broadcast %9 : f32 to vector<26x128xf32>
    %706 = arith.addf %704, %705 : vector<26x128xf32>
    %cst_196 = arith.constant 0.000000e+00 : f32
    %707 = vector.broadcast %cst_196 : f32 to vector<26x128xf32>
    %708 = arith.maximumf %706, %707 : vector<26x128xf32>
    %709 = arith.truncf %708 : vector<26x128xf32> to vector<26x128xbf16>
    %c480 = arith.constant 480 : index
    %c0_197 = arith.constant 0 : index
    %710 = vector.load %arg7[%c480, %c0_197] : memref<832x128xbf16, #tpu.memory_space<vmem>>, vector<26x128xbf16>
    tpu.vector_store %arg7[%c480, %c0_197], %709 {strides = array<i32>} : memref<832x128xbf16, #tpu.memory_space<vmem>>, vector<26x128xbf16>,
    %c18 = arith.constant 18 : index
    %c0_198 = arith.constant 0 : index
    %c0_199 = arith.constant 0 : index
    %711 = vector.load %arg3[%c18, %c0_198, %c0_199] : memref<28x28x128xbf16, #tpu.memory_space<vmem>>, vector<1x26x128xbf16>
    %712 = vector.shape_cast %711 : vector<1x26x128xbf16> to vector<26x128xbf16>
    %713 = arith.extf %712 : vector<26x128xbf16> to vector<26x128xf32>
    %c18_200 = arith.constant 18 : index
    %c1_201 = arith.constant 1 : index
    %c0_202 = arith.constant 0 : index
    %714 = vector.load %arg3[%c18_200, %c1_201, %c0_202] : memref<28x28x128xbf16, #tpu.memory_space<vmem>>, vector<1x26x128xbf16>
    %715 = vector.shape_cast %714 : vector<1x26x128xbf16> to vector<26x128xbf16>
    %716 = arith.extf %715 : vector<26x128xbf16> to vector<26x128xf32>
    %c18_203 = arith.constant 18 : index
    %c2_204 = arith.constant 2 : index
    %c0_205 = arith.constant 0 : index
    %717 = vector.load %arg3[%c18_203, %c2_204, %c0_205] : memref<28x28x128xbf16, #tpu.memory_space<vmem>>, vector<1x26x128xbf16>
    %718 = vector.shape_cast %717 : vector<1x26x128xbf16> to vector<26x128xbf16>
    %719 = arith.extf %718 : vector<26x128xbf16> to vector<26x128xf32>
    %720 = vector.broadcast %0 : f32 to vector<26x128xf32>
    %721 = arith.mulf %720, %713 : vector<26x128xf32>
    %722 = vector.broadcast %1 : f32 to vector<26x128xf32>
    %723 = arith.mulf %722, %716 : vector<26x128xf32>
    %724 = arith.addf %721, %723 : vector<26x128xf32>
    %725 = vector.broadcast %2 : f32 to vector<26x128xf32>
    %726 = arith.mulf %725, %719 : vector<26x128xf32>
    %727 = arith.addf %724, %726 : vector<26x128xf32>
    %728 = vector.broadcast %3 : f32 to vector<26x128xf32>
    %729 = arith.mulf %728, %713 : vector<26x128xf32>
    %730 = vector.broadcast %4 : f32 to vector<26x128xf32>
    %731 = arith.mulf %730, %716 : vector<26x128xf32>
    %732 = arith.addf %729, %731 : vector<26x128xf32>
    %733 = vector.broadcast %5 : f32 to vector<26x128xf32>
    %734 = arith.mulf %733, %719 : vector<26x128xf32>
    %735 = arith.addf %732, %734 : vector<26x128xf32>
    %736 = arith.addf %686, %735 : vector<26x128xf32>
    %737 = vector.broadcast %6 : f32 to vector<26x128xf32>
    %738 = arith.mulf %737, %713 : vector<26x128xf32>
    %739 = vector.broadcast %7 : f32 to vector<26x128xf32>
    %740 = arith.mulf %739, %716 : vector<26x128xf32>
    %741 = arith.addf %738, %740 : vector<26x128xf32>
    %742 = vector.broadcast %8 : f32 to vector<26x128xf32>
    %743 = arith.mulf %742, %719 : vector<26x128xf32>
    %744 = arith.addf %741, %743 : vector<26x128xf32>
    %745 = arith.addf %695, %744 : vector<26x128xf32>
    %746 = vector.broadcast %9 : f32 to vector<26x128xf32>
    %747 = arith.addf %745, %746 : vector<26x128xf32>
    %cst_206 = arith.constant 0.000000e+00 : f32
    %748 = vector.broadcast %cst_206 : f32 to vector<26x128xf32>
    %749 = arith.maximumf %747, %748 : vector<26x128xf32>
    %750 = arith.truncf %749 : vector<26x128xf32> to vector<26x128xbf16>
    %c512 = arith.constant 512 : index
    %c0_207 = arith.constant 0 : index
    %751 = vector.load %arg7[%c512, %c0_207] : memref<832x128xbf16, #tpu.memory_space<vmem>>, vector<26x128xbf16>
    tpu.vector_store %arg7[%c512, %c0_207], %750 {strides = array<i32>} : memref<832x128xbf16, #tpu.memory_space<vmem>>, vector<26x128xbf16>,
    %c19 = arith.constant 19 : index
    %c0_208 = arith.constant 0 : index
    %c0_209 = arith.constant 0 : index
    %752 = vector.load %arg3[%c19, %c0_208, %c0_209] : memref<28x28x128xbf16, #tpu.memory_space<vmem>>, vector<1x26x128xbf16>
    %753 = vector.shape_cast %752 : vector<1x26x128xbf16> to vector<26x128xbf16>
    %754 = arith.extf %753 : vector<26x128xbf16> to vector<26x128xf32>
    %c19_210 = arith.constant 19 : index
    %c1_211 = arith.constant 1 : index
    %c0_212 = arith.constant 0 : index
    %755 = vector.load %arg3[%c19_210, %c1_211, %c0_212] : memref<28x28x128xbf16, #tpu.memory_space<vmem>>, vector<1x26x128xbf16>
    %756 = vector.shape_cast %755 : vector<1x26x128xbf16> to vector<26x128xbf16>
    %757 = arith.extf %756 : vector<26x128xbf16> to vector<26x128xf32>
    %c19_213 = arith.constant 19 : index
    %c2_214 = arith.constant 2 : index
    %c0_215 = arith.constant 0 : index
    %758 = vector.load %arg3[%c19_213, %c2_214, %c0_215] : memref<28x28x128xbf16, #tpu.memory_space<vmem>>, vector<1x26x128xbf16>
    %759 = vector.shape_cast %758 : vector<1x26x128xbf16> to vector<26x128xbf16>
    %760 = arith.extf %759 : vector<26x128xbf16> to vector<26x128xf32>
    %761 = vector.broadcast %0 : f32 to vector<26x128xf32>
    %762 = arith.mulf %761, %754 : vector<26x128xf32>
    %763 = vector.broadcast %1 : f32 to vector<26x128xf32>
    %764 = arith.mulf %763, %757 : vector<26x128xf32>
    %765 = arith.addf %762, %764 : vector<26x128xf32>
    %766 = vector.broadcast %2 : f32 to vector<26x128xf32>
    %767 = arith.mulf %766, %760 : vector<26x128xf32>
    %768 = arith.addf %765, %767 : vector<26x128xf32>
    %769 = vector.broadcast %3 : f32 to vector<26x128xf32>
    %770 = arith.mulf %769, %754 : vector<26x128xf32>
    %771 = vector.broadcast %4 : f32 to vector<26x128xf32>
    %772 = arith.mulf %771, %757 : vector<26x128xf32>
    %773 = arith.addf %770, %772 : vector<26x128xf32>
    %774 = vector.broadcast %5 : f32 to vector<26x128xf32>
    %775 = arith.mulf %774, %760 : vector<26x128xf32>
    %776 = arith.addf %773, %775 : vector<26x128xf32>
    %777 = arith.addf %727, %776 : vector<26x128xf32>
    %778 = vector.broadcast %6 : f32 to vector<26x128xf32>
    %779 = arith.mulf %778, %754 : vector<26x128xf32>
    %780 = vector.broadcast %7 : f32 to vector<26x128xf32>
    %781 = arith.mulf %780, %757 : vector<26x128xf32>
    %782 = arith.addf %779, %781 : vector<26x128xf32>
    %783 = vector.broadcast %8 : f32 to vector<26x128xf32>
    %784 = arith.mulf %783, %760 : vector<26x128xf32>
    %785 = arith.addf %782, %784 : vector<26x128xf32>
    %786 = arith.addf %736, %785 : vector<26x128xf32>
    %787 = vector.broadcast %9 : f32 to vector<26x128xf32>
    %788 = arith.addf %786, %787 : vector<26x128xf32>
    %cst_216 = arith.constant 0.000000e+00 : f32
    %789 = vector.broadcast %cst_216 : f32 to vector<26x128xf32>
    %790 = arith.maximumf %788, %789 : vector<26x128xf32>
    %791 = arith.truncf %790 : vector<26x128xf32> to vector<26x128xbf16>
    %c544 = arith.constant 544 : index
    %c0_217 = arith.constant 0 : index
    %792 = vector.load %arg7[%c544, %c0_217] : memref<832x128xbf16, #tpu.memory_space<vmem>>, vector<26x128xbf16>
    tpu.vector_store %arg7[%c544, %c0_217], %791 {strides = array<i32>} : memref<832x128xbf16, #tpu.memory_space<vmem>>, vector<26x128xbf16>,
    %c20 = arith.constant 20 : index
    %c0_218 = arith.constant 0 : index
    %c0_219 = arith.constant 0 : index
    %793 = vector.load %arg3[%c20, %c0_218, %c0_219] : memref<28x28x128xbf16, #tpu.memory_space<vmem>>, vector<1x26x128xbf16>
    %794 = vector.shape_cast %793 : vector<1x26x128xbf16> to vector<26x128xbf16>
    %795 = arith.extf %794 : vector<26x128xbf16> to vector<26x128xf32>
    %c20_220 = arith.constant 20 : index
    %c1_221 = arith.constant 1 : index
    %c0_222 = arith.constant 0 : index
    %796 = vector.load %arg3[%c20_220, %c1_221, %c0_222] : memref<28x28x128xbf16, #tpu.memory_space<vmem>>, vector<1x26x128xbf16>
    %797 = vector.shape_cast %796 : vector<1x26x128xbf16> to vector<26x128xbf16>
    %798 = arith.extf %797 : vector<26x128xbf16> to vector<26x128xf32>
    %c20_223 = arith.constant 20 : index
    %c2_224 = arith.constant 2 : index
    %c0_225 = arith.constant 0 : index
    %799 = vector.load %arg3[%c20_223, %c2_224, %c0_225] : memref<28x28x128xbf16, #tpu.memory_space<vmem>>, vector<1x26x128xbf16>
    %800 = vector.shape_cast %799 : vector<1x26x128xbf16> to vector<26x128xbf16>
    %801 = arith.extf %800 : vector<26x128xbf16> to vector<26x128xf32>
    %802 = vector.broadcast %0 : f32 to vector<26x128xf32>
    %803 = arith.mulf %802, %795 : vector<26x128xf32>
    %804 = vector.broadcast %1 : f32 to vector<26x128xf32>
    %805 = arith.mulf %804, %798 : vector<26x128xf32>
    %806 = arith.addf %803, %805 : vector<26x128xf32>
    %807 = vector.broadcast %2 : f32 to vector<26x128xf32>
    %808 = arith.mulf %807, %801 : vector<26x128xf32>
    %809 = arith.addf %806, %808 : vector<26x128xf32>
    %810 = vector.broadcast %3 : f32 to vector<26x128xf32>
    %811 = arith.mulf %810, %795 : vector<26x128xf32>
    %812 = vector.broadcast %4 : f32 to vector<26x128xf32>
    %813 = arith.mulf %812, %798 : vector<26x128xf32>
    %814 = arith.addf %811, %813 : vector<26x128xf32>
    %815 = vector.broadcast %5 : f32 to vector<26x128xf32>
    %816 = arith.mulf %815, %801 : vector<26x128xf32>
    %817 = arith.addf %814, %816 : vector<26x128xf32>
    %818 = arith.addf %768, %817 : vector<26x128xf32>
    %819 = vector.broadcast %6 : f32 to vector<26x128xf32>
    %820 = arith.mulf %819, %795 : vector<26x128xf32>
    %821 = vector.broadcast %7 : f32 to vector<26x128xf32>
    %822 = arith.mulf %821, %798 : vector<26x128xf32>
    %823 = arith.addf %820, %822 : vector<26x128xf32>
    %824 = vector.broadcast %8 : f32 to vector<26x128xf32>
    %825 = arith.mulf %824, %801 : vector<26x128xf32>
    %826 = arith.addf %823, %825 : vector<26x128xf32>
    %827 = arith.addf %777, %826 : vector<26x128xf32>
    %828 = vector.broadcast %9 : f32 to vector<26x128xf32>
    %829 = arith.addf %827, %828 : vector<26x128xf32>
    %cst_226 = arith.constant 0.000000e+00 : f32
    %830 = vector.broadcast %cst_226 : f32 to vector<26x128xf32>
    %831 = arith.maximumf %829, %830 : vector<26x128xf32>
    %832 = arith.truncf %831 : vector<26x128xf32> to vector<26x128xbf16>
    %c576 = arith.constant 576 : index
    %c0_227 = arith.constant 0 : index
    %833 = vector.load %arg7[%c576, %c0_227] : memref<832x128xbf16, #tpu.memory_space<vmem>>, vector<26x128xbf16>
    tpu.vector_store %arg7[%c576, %c0_227], %832 {strides = array<i32>} : memref<832x128xbf16, #tpu.memory_space<vmem>>, vector<26x128xbf16>,
    %c21 = arith.constant 21 : index
    %c0_228 = arith.constant 0 : index
    %c0_229 = arith.constant 0 : index
    %834 = vector.load %arg3[%c21, %c0_228, %c0_229] : memref<28x28x128xbf16, #tpu.memory_space<vmem>>, vector<1x26x128xbf16>
    %835 = vector.shape_cast %834 : vector<1x26x128xbf16> to vector<26x128xbf16>
    %836 = arith.extf %835 : vector<26x128xbf16> to vector<26x128xf32>
    %c21_230 = arith.constant 21 : index
    %c1_231 = arith.constant 1 : index
    %c0_232 = arith.constant 0 : index
    %837 = vector.load %arg3[%c21_230, %c1_231, %c0_232] : memref<28x28x128xbf16, #tpu.memory_space<vmem>>, vector<1x26x128xbf16>
    %838 = vector.shape_cast %837 : vector<1x26x128xbf16> to vector<26x128xbf16>
    %839 = arith.extf %838 : vector<26x128xbf16> to vector<26x128xf32>
    %c21_233 = arith.constant 21 : index
    %c2_234 = arith.constant 2 : index
    %c0_235 = arith.constant 0 : index
    %840 = vector.load %arg3[%c21_233, %c2_234, %c0_235] : memref<28x28x128xbf16, #tpu.memory_space<vmem>>, vector<1x26x128xbf16>
    %841 = vector.shape_cast %840 : vector<1x26x128xbf16> to vector<26x128xbf16>
    %842 = arith.extf %841 : vector<26x128xbf16> to vector<26x128xf32>
    %843 = vector.broadcast %0 : f32 to vector<26x128xf32>
    %844 = arith.mulf %843, %836 : vector<26x128xf32>
    %845 = vector.broadcast %1 : f32 to vector<26x128xf32>
    %846 = arith.mulf %845, %839 : vector<26x128xf32>
    %847 = arith.addf %844, %846 : vector<26x128xf32>
    %848 = vector.broadcast %2 : f32 to vector<26x128xf32>
    %849 = arith.mulf %848, %842 : vector<26x128xf32>
    %850 = arith.addf %847, %849 : vector<26x128xf32>
    %851 = vector.broadcast %3 : f32 to vector<26x128xf32>
    %852 = arith.mulf %851, %836 : vector<26x128xf32>
    %853 = vector.broadcast %4 : f32 to vector<26x128xf32>
    %854 = arith.mulf %853, %839 : vector<26x128xf32>
    %855 = arith.addf %852, %854 : vector<26x128xf32>
    %856 = vector.broadcast %5 : f32 to vector<26x128xf32>
    %857 = arith.mulf %856, %842 : vector<26x128xf32>
    %858 = arith.addf %855, %857 : vector<26x128xf32>
    %859 = arith.addf %809, %858 : vector<26x128xf32>
    %860 = vector.broadcast %6 : f32 to vector<26x128xf32>
    %861 = arith.mulf %860, %836 : vector<26x128xf32>
    %862 = vector.broadcast %7 : f32 to vector<26x128xf32>
    %863 = arith.mulf %862, %839 : vector<26x128xf32>
    %864 = arith.addf %861, %863 : vector<26x128xf32>
    %865 = vector.broadcast %8 : f32 to vector<26x128xf32>
    %866 = arith.mulf %865, %842 : vector<26x128xf32>
    %867 = arith.addf %864, %866 : vector<26x128xf32>
    %868 = arith.addf %818, %867 : vector<26x128xf32>
    %869 = vector.broadcast %9 : f32 to vector<26x128xf32>
    %870 = arith.addf %868, %869 : vector<26x128xf32>
    %cst_236 = arith.constant 0.000000e+00 : f32
    %871 = vector.broadcast %cst_236 : f32 to vector<26x128xf32>
    %872 = arith.maximumf %870, %871 : vector<26x128xf32>
    %873 = arith.truncf %872 : vector<26x128xf32> to vector<26x128xbf16>
    %c608 = arith.constant 608 : index
    %c0_237 = arith.constant 0 : index
    %874 = vector.load %arg7[%c608, %c0_237] : memref<832x128xbf16, #tpu.memory_space<vmem>>, vector<26x128xbf16>
    tpu.vector_store %arg7[%c608, %c0_237], %873 {strides = array<i32>} : memref<832x128xbf16, #tpu.memory_space<vmem>>, vector<26x128xbf16>,
    %c22 = arith.constant 22 : index
    %c0_238 = arith.constant 0 : index
    %c0_239 = arith.constant 0 : index
    %875 = vector.load %arg3[%c22, %c0_238, %c0_239] : memref<28x28x128xbf16, #tpu.memory_space<vmem>>, vector<1x26x128xbf16>
    %876 = vector.shape_cast %875 : vector<1x26x128xbf16> to vector<26x128xbf16>
    %877 = arith.extf %876 : vector<26x128xbf16> to vector<26x128xf32>
    %c22_240 = arith.constant 22 : index
    %c1_241 = arith.constant 1 : index
    %c0_242 = arith.constant 0 : index
    %878 = vector.load %arg3[%c22_240, %c1_241, %c0_242] : memref<28x28x128xbf16, #tpu.memory_space<vmem>>, vector<1x26x128xbf16>
    %879 = vector.shape_cast %878 : vector<1x26x128xbf16> to vector<26x128xbf16>
    %880 = arith.extf %879 : vector<26x128xbf16> to vector<26x128xf32>
    %c22_243 = arith.constant 22 : index
    %c2_244 = arith.constant 2 : index
    %c0_245 = arith.constant 0 : index
    %881 = vector.load %arg3[%c22_243, %c2_244, %c0_245] : memref<28x28x128xbf16, #tpu.memory_space<vmem>>, vector<1x26x128xbf16>
    %882 = vector.shape_cast %881 : vector<1x26x128xbf16> to vector<26x128xbf16>
    %883 = arith.extf %882 : vector<26x128xbf16> to vector<26x128xf32>
    %884 = vector.broadcast %0 : f32 to vector<26x128xf32>
    %885 = arith.mulf %884, %877 : vector<26x128xf32>
    %886 = vector.broadcast %1 : f32 to vector<26x128xf32>
    %887 = arith.mulf %886, %880 : vector<26x128xf32>
    %888 = arith.addf %885, %887 : vector<26x128xf32>
    %889 = vector.broadcast %2 : f32 to vector<26x128xf32>
    %890 = arith.mulf %889, %883 : vector<26x128xf32>
    %891 = arith.addf %888, %890 : vector<26x128xf32>
    %892 = vector.broadcast %3 : f32 to vector<26x128xf32>
    %893 = arith.mulf %892, %877 : vector<26x128xf32>
    %894 = vector.broadcast %4 : f32 to vector<26x128xf32>
    %895 = arith.mulf %894, %880 : vector<26x128xf32>
    %896 = arith.addf %893, %895 : vector<26x128xf32>
    %897 = vector.broadcast %5 : f32 to vector<26x128xf32>
    %898 = arith.mulf %897, %883 : vector<26x128xf32>
    %899 = arith.addf %896, %898 : vector<26x128xf32>
    %900 = arith.addf %850, %899 : vector<26x128xf32>
    %901 = vector.broadcast %6 : f32 to vector<26x128xf32>
    %902 = arith.mulf %901, %877 : vector<26x128xf32>
    %903 = vector.broadcast %7 : f32 to vector<26x128xf32>
    %904 = arith.mulf %903, %880 : vector<26x128xf32>
    %905 = arith.addf %902, %904 : vector<26x128xf32>
    %906 = vector.broadcast %8 : f32 to vector<26x128xf32>
    %907 = arith.mulf %906, %883 : vector<26x128xf32>
    %908 = arith.addf %905, %907 : vector<26x128xf32>
    %909 = arith.addf %859, %908 : vector<26x128xf32>
    %910 = vector.broadcast %9 : f32 to vector<26x128xf32>
    %911 = arith.addf %909, %910 : vector<26x128xf32>
    %cst_246 = arith.constant 0.000000e+00 : f32
    %912 = vector.broadcast %cst_246 : f32 to vector<26x128xf32>
    %913 = arith.maximumf %911, %912 : vector<26x128xf32>
    %914 = arith.truncf %913 : vector<26x128xf32> to vector<26x128xbf16>
    %c640 = arith.constant 640 : index
    %c0_247 = arith.constant 0 : index
    %915 = vector.load %arg7[%c640, %c0_247] : memref<832x128xbf16, #tpu.memory_space<vmem>>, vector<26x128xbf16>
    tpu.vector_store %arg7[%c640, %c0_247], %914 {strides = array<i32>} : memref<832x128xbf16, #tpu.memory_space<vmem>>, vector<26x128xbf16>,
    %c23 = arith.constant 23 : index
    %c0_248 = arith.constant 0 : index
    %c0_249 = arith.constant 0 : index
    %916 = vector.load %arg3[%c23, %c0_248, %c0_249] : memref<28x28x128xbf16, #tpu.memory_space<vmem>>, vector<1x26x128xbf16>
    %917 = vector.shape_cast %916 : vector<1x26x128xbf16> to vector<26x128xbf16>
    %918 = arith.extf %917 : vector<26x128xbf16> to vector<26x128xf32>
    %c23_250 = arith.constant 23 : index
    %c1_251 = arith.constant 1 : index
    %c0_252 = arith.constant 0 : index
    %919 = vector.load %arg3[%c23_250, %c1_251, %c0_252] : memref<28x28x128xbf16, #tpu.memory_space<vmem>>, vector<1x26x128xbf16>
    %920 = vector.shape_cast %919 : vector<1x26x128xbf16> to vector<26x128xbf16>
    %921 = arith.extf %920 : vector<26x128xbf16> to vector<26x128xf32>
    %c23_253 = arith.constant 23 : index
    %c2_254 = arith.constant 2 : index
    %c0_255 = arith.constant 0 : index
    %922 = vector.load %arg3[%c23_253, %c2_254, %c0_255] : memref<28x28x128xbf16, #tpu.memory_space<vmem>>, vector<1x26x128xbf16>
    %923 = vector.shape_cast %922 : vector<1x26x128xbf16> to vector<26x128xbf16>
    %924 = arith.extf %923 : vector<26x128xbf16> to vector<26x128xf32>
    %925 = vector.broadcast %0 : f32 to vector<26x128xf32>
    %926 = arith.mulf %925, %918 : vector<26x128xf32>
    %927 = vector.broadcast %1 : f32 to vector<26x128xf32>
    %928 = arith.mulf %927, %921 : vector<26x128xf32>
    %929 = arith.addf %926, %928 : vector<26x128xf32>
    %930 = vector.broadcast %2 : f32 to vector<26x128xf32>
    %931 = arith.mulf %930, %924 : vector<26x128xf32>
    %932 = arith.addf %929, %931 : vector<26x128xf32>
    %933 = vector.broadcast %3 : f32 to vector<26x128xf32>
    %934 = arith.mulf %933, %918 : vector<26x128xf32>
    %935 = vector.broadcast %4 : f32 to vector<26x128xf32>
    %936 = arith.mulf %935, %921 : vector<26x128xf32>
    %937 = arith.addf %934, %936 : vector<26x128xf32>
    %938 = vector.broadcast %5 : f32 to vector<26x128xf32>
    %939 = arith.mulf %938, %924 : vector<26x128xf32>
    %940 = arith.addf %937, %939 : vector<26x128xf32>
    %941 = arith.addf %891, %940 : vector<26x128xf32>
    %942 = vector.broadcast %6 : f32 to vector<26x128xf32>
    %943 = arith.mulf %942, %918 : vector<26x128xf32>
    %944 = vector.broadcast %7 : f32 to vector<26x128xf32>
    %945 = arith.mulf %944, %921 : vector<26x128xf32>
    %946 = arith.addf %943, %945 : vector<26x128xf32>
    %947 = vector.broadcast %8 : f32 to vector<26x128xf32>
    %948 = arith.mulf %947, %924 : vector<26x128xf32>
    %949 = arith.addf %946, %948 : vector<26x128xf32>
    %950 = arith.addf %900, %949 : vector<26x128xf32>
    %951 = vector.broadcast %9 : f32 to vector<26x128xf32>
    %952 = arith.addf %950, %951 : vector<26x128xf32>
    %cst_256 = arith.constant 0.000000e+00 : f32
    %953 = vector.broadcast %cst_256 : f32 to vector<26x128xf32>
    %954 = arith.maximumf %952, %953 : vector<26x128xf32>
    %955 = arith.truncf %954 : vector<26x128xf32> to vector<26x128xbf16>
    %c672 = arith.constant 672 : index
    %c0_257 = arith.constant 0 : index
    %956 = vector.load %arg7[%c672, %c0_257] : memref<832x128xbf16, #tpu.memory_space<vmem>>, vector<26x128xbf16>
    tpu.vector_store %arg7[%c672, %c0_257], %955 {strides = array<i32>} : memref<832x128xbf16, #tpu.memory_space<vmem>>, vector<26x128xbf16>,
    %c24 = arith.constant 24 : index
    %c0_258 = arith.constant 0 : index
    %c0_259 = arith.constant 0 : index
    %957 = vector.load %arg3[%c24, %c0_258, %c0_259] : memref<28x28x128xbf16, #tpu.memory_space<vmem>>, vector<1x26x128xbf16>
    %958 = vector.shape_cast %957 : vector<1x26x128xbf16> to vector<26x128xbf16>
    %959 = arith.extf %958 : vector<26x128xbf16> to vector<26x128xf32>
    %c24_260 = arith.constant 24 : index
    %c1_261 = arith.constant 1 : index
    %c0_262 = arith.constant 0 : index
    %960 = vector.load %arg3[%c24_260, %c1_261, %c0_262] : memref<28x28x128xbf16, #tpu.memory_space<vmem>>, vector<1x26x128xbf16>
    %961 = vector.shape_cast %960 : vector<1x26x128xbf16> to vector<26x128xbf16>
    %962 = arith.extf %961 : vector<26x128xbf16> to vector<26x128xf32>
    %c24_263 = arith.constant 24 : index
    %c2_264 = arith.constant 2 : index
    %c0_265 = arith.constant 0 : index
    %963 = vector.load %arg3[%c24_263, %c2_264, %c0_265] : memref<28x28x128xbf16, #tpu.memory_space<vmem>>, vector<1x26x128xbf16>
    %964 = vector.shape_cast %963 : vector<1x26x128xbf16> to vector<26x128xbf16>
    %965 = arith.extf %964 : vector<26x128xbf16> to vector<26x128xf32>
    %966 = vector.broadcast %0 : f32 to vector<26x128xf32>
    %967 = arith.mulf %966, %959 : vector<26x128xf32>
    %968 = vector.broadcast %1 : f32 to vector<26x128xf32>
    %969 = arith.mulf %968, %962 : vector<26x128xf32>
    %970 = arith.addf %967, %969 : vector<26x128xf32>
    %971 = vector.broadcast %2 : f32 to vector<26x128xf32>
    %972 = arith.mulf %971, %965 : vector<26x128xf32>
    %973 = arith.addf %970, %972 : vector<26x128xf32>
    %974 = vector.broadcast %3 : f32 to vector<26x128xf32>
    %975 = arith.mulf %974, %959 : vector<26x128xf32>
    %976 = vector.broadcast %4 : f32 to vector<26x128xf32>
    %977 = arith.mulf %976, %962 : vector<26x128xf32>
    %978 = arith.addf %975, %977 : vector<26x128xf32>
    %979 = vector.broadcast %5 : f32 to vector<26x128xf32>
    %980 = arith.mulf %979, %965 : vector<26x128xf32>
    %981 = arith.addf %978, %980 : vector<26x128xf32>
    %982 = arith.addf %932, %981 : vector<26x128xf32>
    %983 = vector.broadcast %6 : f32 to vector<26x128xf32>
    %984 = arith.mulf %983, %959 : vector<26x128xf32>
    %985 = vector.broadcast %7 : f32 to vector<26x128xf32>
    %986 = arith.mulf %985, %962 : vector<26x128xf32>
    %987 = arith.addf %984, %986 : vector<26x128xf32>
    %988 = vector.broadcast %8 : f32 to vector<26x128xf32>
    %989 = arith.mulf %988, %965 : vector<26x128xf32>
    %990 = arith.addf %987, %989 : vector<26x128xf32>
    %991 = arith.addf %941, %990 : vector<26x128xf32>
    %992 = vector.broadcast %9 : f32 to vector<26x128xf32>
    %993 = arith.addf %991, %992 : vector<26x128xf32>
    %cst_266 = arith.constant 0.000000e+00 : f32
    %994 = vector.broadcast %cst_266 : f32 to vector<26x128xf32>
    %995 = arith.maximumf %993, %994 : vector<26x128xf32>
    %996 = arith.truncf %995 : vector<26x128xf32> to vector<26x128xbf16>
    %c704 = arith.constant 704 : index
    %c0_267 = arith.constant 0 : index
    %997 = vector.load %arg7[%c704, %c0_267] : memref<832x128xbf16, #tpu.memory_space<vmem>>, vector<26x128xbf16>
    tpu.vector_store %arg7[%c704, %c0_267], %996 {strides = array<i32>} : memref<832x128xbf16, #tpu.memory_space<vmem>>, vector<26x128xbf16>,
    %c25 = arith.constant 25 : index
    %c0_268 = arith.constant 0 : index
    %c0_269 = arith.constant 0 : index
    %998 = vector.load %arg3[%c25, %c0_268, %c0_269] : memref<28x28x128xbf16, #tpu.memory_space<vmem>>, vector<1x26x128xbf16>
    %999 = vector.shape_cast %998 : vector<1x26x128xbf16> to vector<26x128xbf16>
    %1000 = arith.extf %999 : vector<26x128xbf16> to vector<26x128xf32>
    %c25_270 = arith.constant 25 : index
    %c1_271 = arith.constant 1 : index
    %c0_272 = arith.constant 0 : index
    %1001 = vector.load %arg3[%c25_270, %c1_271, %c0_272] : memref<28x28x128xbf16, #tpu.memory_space<vmem>>, vector<1x26x128xbf16>
    %1002 = vector.shape_cast %1001 : vector<1x26x128xbf16> to vector<26x128xbf16>
    %1003 = arith.extf %1002 : vector<26x128xbf16> to vector<26x128xf32>
    %c25_273 = arith.constant 25 : index
    %c2_274 = arith.constant 2 : index
    %c0_275 = arith.constant 0 : index
    %1004 = vector.load %arg3[%c25_273, %c2_274, %c0_275] : memref<28x28x128xbf16, #tpu.memory_space<vmem>>, vector<1x26x128xbf16>
    %1005 = vector.shape_cast %1004 : vector<1x26x128xbf16> to vector<26x128xbf16>
    %1006 = arith.extf %1005 : vector<26x128xbf16> to vector<26x128xf32>
    %1007 = vector.broadcast %0 : f32 to vector<26x128xf32>
    %1008 = arith.mulf %1007, %1000 : vector<26x128xf32>
    %1009 = vector.broadcast %1 : f32 to vector<26x128xf32>
    %1010 = arith.mulf %1009, %1003 : vector<26x128xf32>
    %1011 = arith.addf %1008, %1010 : vector<26x128xf32>
    %1012 = vector.broadcast %2 : f32 to vector<26x128xf32>
    %1013 = arith.mulf %1012, %1006 : vector<26x128xf32>
    %1014 = arith.addf %1011, %1013 : vector<26x128xf32>
    %1015 = vector.broadcast %3 : f32 to vector<26x128xf32>
    %1016 = arith.mulf %1015, %1000 : vector<26x128xf32>
    %1017 = vector.broadcast %4 : f32 to vector<26x128xf32>
    %1018 = arith.mulf %1017, %1003 : vector<26x128xf32>
    %1019 = arith.addf %1016, %1018 : vector<26x128xf32>
    %1020 = vector.broadcast %5 : f32 to vector<26x128xf32>
    %1021 = arith.mulf %1020, %1006 : vector<26x128xf32>
    %1022 = arith.addf %1019, %1021 : vector<26x128xf32>
    %1023 = arith.addf %973, %1022 : vector<26x128xf32>
    %1024 = vector.broadcast %6 : f32 to vector<26x128xf32>
    %1025 = arith.mulf %1024, %1000 : vector<26x128xf32>
    %1026 = vector.broadcast %7 : f32 to vector<26x128xf32>
    %1027 = arith.mulf %1026, %1003 : vector<26x128xf32>
    %1028 = arith.addf %1025, %1027 : vector<26x128xf32>
    %1029 = vector.broadcast %8 : f32 to vector<26x128xf32>
    %1030 = arith.mulf %1029, %1006 : vector<26x128xf32>
    %1031 = arith.addf %1028, %1030 : vector<26x128xf32>
    %1032 = arith.addf %982, %1031 : vector<26x128xf32>
    %1033 = vector.broadcast %9 : f32 to vector<26x128xf32>
    %1034 = arith.addf %1032, %1033 : vector<26x128xf32>
    %cst_276 = arith.constant 0.000000e+00 : f32
    %1035 = vector.broadcast %cst_276 : f32 to vector<26x128xf32>
    %1036 = arith.maximumf %1034, %1035 : vector<26x128xf32>
    %1037 = arith.truncf %1036 : vector<26x128xf32> to vector<26x128xbf16>
    %c736 = arith.constant 736 : index
    %c0_277 = arith.constant 0 : index
    %1038 = vector.load %arg7[%c736, %c0_277] : memref<832x128xbf16, #tpu.memory_space<vmem>>, vector<26x128xbf16>
    tpu.vector_store %arg7[%c736, %c0_277], %1037 {strides = array<i32>} : memref<832x128xbf16, #tpu.memory_space<vmem>>, vector<26x128xbf16>,
    %c26 = arith.constant 26 : index
    %c0_278 = arith.constant 0 : index
    %c0_279 = arith.constant 0 : index
    %1039 = vector.load %arg3[%c26, %c0_278, %c0_279] : memref<28x28x128xbf16, #tpu.memory_space<vmem>>, vector<1x26x128xbf16>
    %1040 = vector.shape_cast %1039 : vector<1x26x128xbf16> to vector<26x128xbf16>
    %1041 = arith.extf %1040 : vector<26x128xbf16> to vector<26x128xf32>
    %c26_280 = arith.constant 26 : index
    %c1_281 = arith.constant 1 : index
    %c0_282 = arith.constant 0 : index
    %1042 = vector.load %arg3[%c26_280, %c1_281, %c0_282] : memref<28x28x128xbf16, #tpu.memory_space<vmem>>, vector<1x26x128xbf16>
    %1043 = vector.shape_cast %1042 : vector<1x26x128xbf16> to vector<26x128xbf16>
    %1044 = arith.extf %1043 : vector<26x128xbf16> to vector<26x128xf32>
    %c26_283 = arith.constant 26 : index
    %c2_284 = arith.constant 2 : index
    %c0_285 = arith.constant 0 : index
    %1045 = vector.load %arg3[%c26_283, %c2_284, %c0_285] : memref<28x28x128xbf16, #tpu.memory_space<vmem>>, vector<1x26x128xbf16>
    %1046 = vector.shape_cast %1045 : vector<1x26x128xbf16> to vector<26x128xbf16>
    %1047 = arith.extf %1046 : vector<26x128xbf16> to vector<26x128xf32>
    %1048 = vector.broadcast %3 : f32 to vector<26x128xf32>
    %1049 = arith.mulf %1048, %1041 : vector<26x128xf32>
    %1050 = vector.broadcast %4 : f32 to vector<26x128xf32>
    %1051 = arith.mulf %1050, %1044 : vector<26x128xf32>
    %1052 = arith.addf %1049, %1051 : vector<26x128xf32>
    %1053 = vector.broadcast %5 : f32 to vector<26x128xf32>
    %1054 = arith.mulf %1053, %1047 : vector<26x128xf32>
    %1055 = arith.addf %1052, %1054 : vector<26x128xf32>
    %1056 = arith.addf %1014, %1055 : vector<26x128xf32>
    %1057 = vector.broadcast %6 : f32 to vector<26x128xf32>
    %1058 = arith.mulf %1057, %1041 : vector<26x128xf32>
    %1059 = vector.broadcast %7 : f32 to vector<26x128xf32>
    %1060 = arith.mulf %1059, %1044 : vector<26x128xf32>
    %1061 = arith.addf %1058, %1060 : vector<26x128xf32>
    %1062 = vector.broadcast %8 : f32 to vector<26x128xf32>
    %1063 = arith.mulf %1062, %1047 : vector<26x128xf32>
    %1064 = arith.addf %1061, %1063 : vector<26x128xf32>
    %1065 = arith.addf %1023, %1064 : vector<26x128xf32>
    %1066 = vector.broadcast %9 : f32 to vector<26x128xf32>
    %1067 = arith.addf %1065, %1066 : vector<26x128xf32>
    %cst_286 = arith.constant 0.000000e+00 : f32
    %1068 = vector.broadcast %cst_286 : f32 to vector<26x128xf32>
    %1069 = arith.maximumf %1067, %1068 : vector<26x128xf32>
    %1070 = arith.truncf %1069 : vector<26x128xf32> to vector<26x128xbf16>
    %c768 = arith.constant 768 : index
    %c0_287 = arith.constant 0 : index
    %1071 = vector.load %arg7[%c768, %c0_287] : memref<832x128xbf16, #tpu.memory_space<vmem>>, vector<26x128xbf16>
    tpu.vector_store %arg7[%c768, %c0_287], %1070 {strides = array<i32>} : memref<832x128xbf16, #tpu.memory_space<vmem>>, vector<26x128xbf16>,
    %c27 = arith.constant 27 : index
    %c0_288 = arith.constant 0 : index
    %c0_289 = arith.constant 0 : index
    %1072 = vector.load %arg3[%c27, %c0_288, %c0_289] : memref<28x28x128xbf16, #tpu.memory_space<vmem>>, vector<1x26x128xbf16>
    %1073 = vector.shape_cast %1072 : vector<1x26x128xbf16> to vector<26x128xbf16>
    %1074 = arith.extf %1073 : vector<26x128xbf16> to vector<26x128xf32>
    %c27_290 = arith.constant 27 : index
    %c1_291 = arith.constant 1 : index
    %c0_292 = arith.constant 0 : index
    %1075 = vector.load %arg3[%c27_290, %c1_291, %c0_292] : memref<28x28x128xbf16, #tpu.memory_space<vmem>>, vector<1x26x128xbf16>
    %1076 = vector.shape_cast %1075 : vector<1x26x128xbf16> to vector<26x128xbf16>
    %1077 = arith.extf %1076 : vector<26x128xbf16> to vector<26x128xf32>
    %c27_293 = arith.constant 27 : index
    %c2_294 = arith.constant 2 : index
    %c0_295 = arith.constant 0 : index
    %1078 = vector.load %arg3[%c27_293, %c2_294, %c0_295] : memref<28x28x128xbf16, #tpu.memory_space<vmem>>, vector<1x26x128xbf16>
    %1079 = vector.shape_cast %1078 : vector<1x26x128xbf16> to vector<26x128xbf16>
    %1080 = arith.extf %1079 : vector<26x128xbf16> to vector<26x128xf32>
    %1081 = vector.broadcast %6 : f32 to vector<26x128xf32>
    %1082 = arith.mulf %1081, %1074 : vector<26x128xf32>
    %1083 = vector.broadcast %7 : f32 to vector<26x128xf32>
    %1084 = arith.mulf %1083, %1077 : vector<26x128xf32>
    %1085 = arith.addf %1082, %1084 : vector<26x128xf32>
    %1086 = vector.broadcast %8 : f32 to vector<26x128xf32>
    %1087 = arith.mulf %1086, %1080 : vector<26x128xf32>
    %1088 = arith.addf %1085, %1087 : vector<26x128xf32>
    %1089 = arith.addf %1056, %1088 : vector<26x128xf32>
    %1090 = vector.broadcast %9 : f32 to vector<26x128xf32>
    %1091 = arith.addf %1089, %1090 : vector<26x128xf32>
    %cst_296 = arith.constant 0.000000e+00 : f32
    %1092 = vector.broadcast %cst_296 : f32 to vector<26x128xf32>
    %1093 = arith.maximumf %1091, %1092 : vector<26x128xf32>
    %1094 = arith.truncf %1093 : vector<26x128xf32> to vector<26x128xbf16>
    %c800 = arith.constant 800 : index
    %c0_297 = arith.constant 0 : index
    %1095 = vector.load %arg7[%c800, %c0_297] : memref<832x128xbf16, #tpu.memory_space<vmem>>, vector<26x128xbf16>
    tpu.vector_store %arg7[%c800, %c0_297], %1094 {strides = array<i32>} : memref<832x128xbf16, #tpu.memory_space<vmem>>, vector<26x128xbf16>,
    %c0_298 = arith.constant 0 : index
    %c0_299 = arith.constant 0 : index
    %1096 = vector.load %arg4[%c0_298, %c0_299] : memref<10x832xbf16, #tpu.memory_space<vmem>>, vector<10x832xbf16>
    %c0_300 = arith.constant 0 : index
    %c0_301 = arith.constant 0 : index
    %1097 = vector.load %arg7[%c0_300, %c0_301] : memref<832x128xbf16, #tpu.memory_space<vmem>>, vector<832x128xbf16>
    %cst_302 = arith.constant dense<0.000000e+00> : vector<10x128xf32>
    %1098 = tpu.matmul %1096, %1097, %cst_302 {dimension_numbers = #tpu.dot_dimension_numbers<[1], [0], [0], [1], [0, 0, 1, 1], [], []>} : vector<10x832xbf16>, vector<832x128xbf16>, vector<10x128xf32> -> vector<10x128xf32>
    %c0_303 = arith.constant 0 : index
    %c0_304 = arith.constant 0 : index
    %1099 = vector.load %arg5[%c0_303, %c0_304] : memref<10x1xf32, #tpu.memory_space<vmem>>, vector<10x1xf32>
    %1100 = vector.broadcast %1099 : vector<10x1xf32> to vector<10x128xf32>
    %1101 = arith.addf %1098, %1100 : vector<10x128xf32>
    %c0_305 = arith.constant 0 : index
    %c0_306 = arith.constant 0 : index
    %1102 = vector.load %arg6[%c0_305, %c0_306] : memref<10x128xf32, #tpu.memory_space<vmem>>, vector<10x128xf32>
    tpu.vector_store %arg6[%c0_305, %c0_306], %1101 {strides = array<i32>} : memref<10x128xf32, #tpu.memory_space<vmem>>, vector<10x128xf32>,
    return
  }
  func.func @transform_0(%arg0: i32) -> (i32, i32) {
    %c0_i32 = arith.constant 0 : i32
    %c0_i32_0 = arith.constant 0 : i32
    %c0_i32_1 = arith.constant 0 : i32
    return %c0_i32, %c0_i32_0 : i32, i32
  }
  func.func @transform_1(%arg0: i32) -> i32 {
    %c0_i32 = arith.constant 0 : i32
    %c0_i32_0 = arith.constant 0 : i32
    return %c0_i32 : i32
  }
  func.func @transform_2(%arg0: i32) -> (i32, i32, i32) {
    %c0_i32 = arith.constant 0 : i32
    %c0_i32_0 = arith.constant 0 : i32
    %c0_i32_1 = arith.constant 0 : i32
    return %c0_i32, %c0_i32_0, %arg0 : i32, i32, i32
  }
  func.func @transform_3(%arg0: i32) -> (i32, i32) {
    %c0_i32 = arith.constant 0 : i32
    %c0_i32_0 = arith.constant 0 : i32
    %c0_i32_1 = arith.constant 0 : i32
    return %c0_i32, %c0_i32_0 : i32, i32
  }
  func.func @transform_4(%arg0: i32) -> (i32, i32) {
    %c0_i32 = arith.constant 0 : i32
    %c0_i32_0 = arith.constant 0 : i32
    %c0_i32_1 = arith.constant 0 : i32
    return %c0_i32, %c0_i32_0 : i32, i32
  }
  func.func @transform_5(%arg0: i32) -> (i32, i32) {
    %c0_i32 = arith.constant 0 : i32
    %c0_i32_0 = arith.constant 0 : i32
    return %c0_i32, %arg0 : i32, i32
  }
}

</mosaic_0001>

<llo_original>
// kernel: dummy_cnn_forward.1
$region0: #{dummy_cnn_forward.1}
  #allocation0 [shape = 'u32[]', space=smem, size = 0x4, offset = 0x4, fixed_abs, tag = 'smem constant byte address 0x4 - core index']
  #allocation1 [shape = 'u32[144,128]{1,0:T(1,128)}', space=vmem, size = 0x12000, scoped, tag = 'internal scratch']
  #allocation2 [shape = 'bf16[832,128]{1,0:T(16,128)(2,1)}', space=vmem, size = 0x34000, scoped, tag = 'scratch operand']
  #allocation3 [shape = 'f32[1]{0:T(128)S(6)}', space=smem, size = 0x200, scoped, tag = 'scoped memory for dummy_cnn_forward.1']
  %s0 = inlined_call_operand.vmem [shape: f32[3,3], index: 0, kind: input, shape index: {}]
  %s1 = inlined_call_operand.<no memory space> [shape: f32[1], index: 1, kind: input, shape index: {}]
  %s2 = inlined_call_operand.vmem [shape: bf16[28,28,128], index: 2, kind: input, shape index: {}]
  %s3 = inlined_call_operand.vmem [shape: bf16[10,832], index: 3, kind: input, shape index: {}]
  %s4 = inlined_call_operand.vmem [shape: f32[10,1], index: 4, kind: input, shape index: {}]
  %s5 = inlined_call_operand.vmem [shape: f32[10,128], index: 5, kind: output, shape index: {}]
  %s6 = sld [smem:[#allocation0]]
  $region34: #{dummy_cnn_forward.1} parent=0
    _
  %s8 = ssub.s32 1, %s6
  %s9 = scalar_select 0, %s8, %s6
  %10 = sst [smem:[#allocation3]] %s1
  $region1: #{dummy_cnn_forward.1} parent=0
    #allocation4 [shape = 'u8[2048]{0}', space=smem, size = 0x800, scoped, tag = 'input window, operand 0, single buffered']
    #allocation5 [shape = 's32[1]{0}', space=sflag, size = 0x4, scoped, tag = 'scoped memory for dummy_cnn_forward.1']
    %11 = vsyncpa [#allocation5], 0
    // Predicated region
    $region2: #{dummy_cnn_forward.1} parent=1 // pred_check
      _
    $region3: #{dummy_cnn_forward.1} parent=1 // pred_check_branch
      %13 = sbr.rel (0) target = $region5
    $region4: #{dummy_cnn_forward.1} parent=1 // pred_region
      %s15 = ssub.s32 64, 64
      %16 = vsyncadd [#allocation5], %s15
      %s18 = sshll.u32 %s0, 4
      %s19 = int_to_ptr.vmem [resolvable:$true] %s18
      %21 = dma.vmem_to_smem %s19, 64, [#allocation4], [#allocation5]
    $region5: #{dummy_cnn_forward.1} parent=1 // pred_fallthru
      _
    // Predicated region
    $region6: #{dummy_cnn_forward.1} parent=1 // pred_check
      _
    $region7: #{dummy_cnn_forward.1} parent=1 // pred_check_branch
      %23 = sbr.rel (0) target = $region9
    $region8: #{dummy_cnn_forward.1} parent=1 // pred_region
      _
    $region9: #{dummy_cnn_forward.1} parent=1 // pred_fallthru
      _
    // Predicated region
    $region10: #{dummy_cnn_forward.1} parent=1 // pred_check
      _
    $region11: #{dummy_cnn_forward.1} parent=1 // pred_check_branch
      %25 = sbr.rel (0) target = $region13
    $region12: #{dummy_cnn_forward.1} parent=1 // pred_region
      _
    $region13: #{dummy_cnn_forward.1} parent=1 // pred_fallthru
      _
    // Predicated region
    $region14: #{dummy_cnn_forward.1} parent=1 // pred_check
      _
    $region15: #{dummy_cnn_forward.1} parent=1 // pred_check_branch
      %27 = sbr.rel (0) target = $region17
    $region16: #{dummy_cnn_forward.1} parent=1 // pred_region
      _
    $region17: #{dummy_cnn_forward.1} parent=1 // pred_fallthru
      _
    // Predicated region
    $region18: #{dummy_cnn_forward.1} parent=1 // pred_check
      _
    $region19: #{dummy_cnn_forward.1} parent=1 // pred_check_branch
      %29 = sbr.rel (0) target = $region21
    $region20: #{dummy_cnn_forward.1} parent=1 // pred_region
      _
    $region21: #{dummy_cnn_forward.1} parent=1 // pred_fallthru
      _
    // Predicated region
    $region22: #{dummy_cnn_forward.1} parent=1 // pred_check
      _
    $region23: #{dummy_cnn_forward.1} parent=1 // pred_check_branch
      %31 = sbr.rel (0) target = $region25
    $region24: #{dummy_cnn_forward.1} parent=1 // pred_region
      %32 = dma.done [#allocation5], 64
    $region25: #{dummy_cnn_forward.1} parent=1 // pred_fallthru
      _
    %33 = sfence
    %s35 = sld [smem:[#allocation4]]
    %s36 = sld [smem:[#allocation4 + $0x1]]
    %s37 = sld [smem:[#allocation4 + $0x2]]
    %s38 = sld [smem:[#allocation4 + $0x80]]
    %s39 = sld [smem:[#allocation4 + $0x81]]
    %s40 = sld [smem:[#allocation4 + $0x82]]
    %s41 = sld [smem:[#allocation4 + $0x100]]
    %s42 = sld [smem:[#allocation4 + $0x101]]
    %s43 = sld [smem:[#allocation4 + $0x102]]
    %s44 = sld [smem:[#allocation3]]
    %45 = vst [vmem:[#allocation2] sm:$0xff] 0
    %46 = vst [vmem:[#allocation2 + $0x8] sm:$0xff] 0
    %47 = vst [vmem:[#allocation2 + $0x10] sm:$0xff] 0
    %48 = vst [vmem:[#allocation2 + $0x18] sm:$0xff] 0
    %49 = vst [vmem:[#allocation2 + $0x20] sm:$0xff] 0
    %50 = vst [vmem:[#allocation2 + $0x28] sm:$0xff] 0
    %51 = vst [vmem:[#allocation2 + $0x30] sm:$0xff] 0
    %52 = vst [vmem:[#allocation2 + $0x38] sm:$0xff] 0
    %53 = vst [vmem:[#allocation2 + $0x40] sm:$0xff] 0
    %54 = vst [vmem:[#allocation2 + $0x48] sm:$0xff] 0
    %55 = vst [vmem:[#allocation2 + $0x50] sm:$0xff] 0
    %56 = vst [vmem:[#allocation2 + $0x58] sm:$0xff] 0
    %57 = vst [vmem:[#allocation2 + $0x60] sm:$0xff] 0
    %58 = vst [vmem:[#allocation2 + $0x68] sm:$0xff] 0
    %59 = vst [vmem:[#allocation2 + $0x70] sm:$0xff] 0
    %60 = vst [vmem:[#allocation2 + $0x78] sm:$0xff] 0
    %61 = vst [vmem:[#allocation2 + $0x80] sm:$0xff] 0
    %62 = vst [vmem:[#allocation2 + $0x88] sm:$0xff] 0
    %63 = vst [vmem:[#allocation2 + $0x90] sm:$0xff] 0
    %64 = vst [vmem:[#allocation2 + $0x98] sm:$0xff] 0
    %65 = vst [vmem:[#allocation2 + $0xa0] sm:$0xff] 0
    %66 = vst [vmem:[#allocation2 + $0xa8] sm:$0xff] 0
    %67 = vst [vmem:[#allocation2 + $0xb0] sm:$0xff] 0
    %68 = vst [vmem:[#allocation2 + $0xb8] sm:$0xff] 0
    %69 = vst [vmem:[#allocation2 + $0xc0] sm:$0xff] 0
    %70 = vst [vmem:[#allocation2 + $0xc8] sm:$0xff] 0
    %71 = vst [vmem:[#allocation2 + $0xd0] sm:$0xff] 0
    %72 = vst [vmem:[#allocation2 + $0xd8] sm:$0xff] 0
    %73 = vst [vmem:[#allocation2 + $0xe0] sm:$0xff] 0
    %74 = vst [vmem:[#allocation2 + $0xe8] sm:$0xff] 0
    %75 = vst [vmem:[#allocation2 + $0xf0] sm:$0xff] 0
    %76 = vst [vmem:[#allocation2 + $0xf8] sm:$0xff] 0
    %77 = vst [vmem:[#allocation2 + $0x100] sm:$0xff] 0
    %78 = vst [vmem:[#allocation2 + $0x108] sm:$0xff] 0
    %79 = vst [vmem:[#allocation2 + $0x110] sm:$0xff] 0
    %80 = vst [vmem:[#allocation2 + $0x118] sm:$0xff] 0
    %81 = vst [vmem:[#allocation2 + $0x120] sm:$0xff] 0
    %82 = vst [vmem:[#allocation2 + $0x128] sm:$0xff] 0
    %83 = vst [vmem:[#allocation2 + $0x130] sm:$0xff] 0
    %84 = vst [vmem:[#allocation2 + $0x138] sm:$0xff] 0
    %85 = vst [vmem:[#allocation2 + $0x140] sm:$0xff] 0
    %86 = vst [vmem:[#allocation2 + $0x148] sm:$0xff] 0
    %87 = vst [vmem:[#allocation2 + $0x150] sm:$0xff] 0
    %88 = vst [vmem:[#allocation2 + $0x158] sm:$0xff] 0
    %89 = vst [vmem:[#allocation2 + $0x160] sm:$0xff] 0
    %90 = vst [vmem:[#allocation2 + $0x168] sm:$0xff] 0
    %91 = vst [vmem:[#allocation2 + $0x170] sm:$0xff] 0
    %92 = vst [vmem:[#allocation2 + $0x178] sm:$0xff] 0
    %93 = vst [vmem:[#allocation2 + $0x180] sm:$0xff] 0
    %94 = vst [vmem:[#allocation2 + $0x188] sm:$0xff] 0
    %95 = vst [vmem:[#allocation2 + $0x190] sm:$0xff] 0
    %96 = vst [vmem:[#allocation2 + $0x198] sm:$0xff] 0
    %v97 = vld [vmem:[%s2] sm:$0xf]
    %v98 = vld [vmem:[%s2 + $0x4] sm:$0xf]
    %v99 = vld [vmem:[%s2 + $0x8] sm:$0xf]
    %v100 = vld [vmem:[%s2 + $0xc] sm:$0x1]
    %v101 = vunpack.c.l.bf16 %v97
    %v102 = vunpack.c.l.bf16 %v98
    %v103 = vunpack.c.l.bf16 %v99
    %v104 = vunpack.c.l.bf16 %v100
    %v105 = vld [vmem:[%s2 + $0xc] sm:$0x3]
    %v106 = vunpack.c.l.bf16 %v105
    %v107 = vld [vmem:[%s2] sm:$0xe]
    %v108 = vunpack.c.l.bf16 %v107
    %v109 = vstv %s35
    %v110 = vmul.f32 %v109, %v101
    %v111 = vmul.f32 %v109, %v102
    %v112 = vmul.f32 %v109, %v103
    %v113 = vmul.f32 %v109, %v104
    %v114 = vstv %s36
    %v115 = vmul.f32 %v114, %v101
    %v116 = vmul.f32 %v114, %v102
    %v117 = vmul.f32 %v114, %v103
    %v118 = vmul.f32 %v114, %v106
    %vm123 = vcmask 1046528
    %v124 = vrot.slane %v115, 1
    %v125 = vrot.slane %v116, 1
    %v126 = vsel %vm123, %v124, %v125
    %v127 = vrot.slane %v117, 1
    %v128 = vsel %vm123, %v125, %v127
    %v129 = vrot.slane %v118, 1
    %v130 = vsel %vm123, %v127, %v129
    %v135 = vadd.f32 %v110, %v126
    %v136 = vadd.f32 %v111, %v128
    %v137 = vadd.f32 %v112, %v130
    %v138 = vadd.f32 %v113, %v129
    %v139 = vstv %s37
    %v140 = vmul.f32 %v139, %v108
    %v141 = vmul.f32 %v139, %v102
    %v142 = vmul.f32 %v139, %v103
    %v143 = vmul.f32 %v139, %v106
    %vm148 = vcmask 1045504
    %v149 = vrot.slane %v140, 2
    %v150 = vrot.slane %v141, 2
    %v151 = vsel %vm148, %v149, %v150
    %v152 = vrot.slane %v142, 2
    %v153 = vsel %vm148, %v150, %v152
    %v154 = vrot.slane %v143, 2
    %v155 = vsel %vm148, %v152, %v154
    %v160 = vadd.f32 %v135, %v151
    %v161 = vadd.f32 %v136, %v153
    %v162 = vadd.f32 %v137, %v155
    %v163 = vadd.f32 %v138, %v154
    %s164 = scalar_lea.vmem %s2, 16
    %v165 = vld [vmem:[%s164] sm:$0xf]
    %v166 = vld [vmem:[%s164 + $0x4] sm:$0xf]
    %v167 = vld [vmem:[%s164 + $0x8] sm:$0xf]
    %v168 = vld [vmem:[%s164 + $0xc] sm:$0x1]
    %v169 = vunpack.c.l.bf16 %v165
    %v170 = vunpack.c.l.bf16 %v166
    %v171 = vunpack.c.l.bf16 %v167
    %v172 = vunpack.c.l.bf16 %v168
    %v173 = vld [vmem:[%s164 + $0xc] sm:$0x3]
    %v174 = vunpack.c.l.bf16 %v173
    %v175 = vld [vmem:[%s164] sm:$0xe]
    %v176 = vunpack.c.l.bf16 %v175
    %v177 = vmul.f32 %v109, %v169
    %v178 = vmul.f32 %v109, %v170
    %v179 = vmul.f32 %v109, %v171
    %v180 = vmul.f32 %v109, %v172
    %v181 = vmul.f32 %v114, %v169
    %v182 = vmul.f32 %v114, %v170
    %v183 = vmul.f32 %v114, %v171
    %v184 = vmul.f32 %v114, %v174
    %v189 = vrot.slane %v181, 1
    %v190 = vrot.slane %v182, 1
    %v191 = vsel %vm123, %v189, %v190
    %v192 = vrot.slane %v183, 1
    %v193 = vsel %vm123, %v190, %v192
    %v194 = vrot.slane %v184, 1
    %v195 = vsel %vm123, %v192, %v194
    %v200 = vadd.f32 %v177, %v191
    %v201 = vadd.f32 %v178, %v193
    %v202 = vadd.f32 %v179, %v195
    %v203 = vadd.f32 %v180, %v194
    %v204 = vmul.f32 %v139, %v176
    %v205 = vmul.f32 %v139, %v170
    %v206 = vmul.f32 %v139, %v171
    %v207 = vmul.f32 %v139, %v174
    %v212 = vrot.slane %v204, 2
    %v213 = vrot.slane %v205, 2
    %v214 = vsel %vm148, %v212, %v213
    %v215 = vrot.slane %v206, 2
    %v216 = vsel %vm148, %v213, %v215
    %v217 = vrot.slane %v207, 2
    %v218 = vsel %vm148, %v215, %v217
    %v223 = vadd.f32 %v200, %v214
    %v224 = vadd.f32 %v201, %v216
    %v225 = vadd.f32 %v202, %v218
    %v226 = vadd.f32 %v203, %v217
    %v227 = vstv %s38
    %v228 = vmul.f32 %v227, %v169
    %v229 = vmul.f32 %v227, %v170
    %v230 = vmul.f32 %v227, %v171
    %v231 = vmul.f32 %v227, %v172
    %v232 = vstv %s39
    %v233 = vmul.f32 %v232, %v169
    %v234 = vmul.f32 %v232, %v170
    %v235 = vmul.f32 %v232, %v171
    %v236 = vmul.f32 %v232, %v174
    %v241 = vrot.slane %v233, 1
    %v242 = vrot.slane %v234, 1
    %v243 = vsel %vm123, %v241, %v242
    %v244 = vrot.slane %v235, 1
    %v245 = vsel %vm123, %v242, %v244
    %v246 = vrot.slane %v236, 1
    %v247 = vsel %vm123, %v244, %v246
    %v252 = vadd.f32 %v228, %v243
    %v253 = vadd.f32 %v229, %v245
    %v254 = vadd.f32 %v230, %v247
    %v255 = vadd.f32 %v231, %v246
    %v256 = vstv %s40
    %v257 = vmul.f32 %v256, %v176
    %v258 = vmul.f32 %v256, %v170
    %v259 = vmul.f32 %v256, %v171
    %v260 = vmul.f32 %v256, %v174
    %v265 = vrot.slane %v257, 2
    %v266 = vrot.slane %v258, 2
    %v267 = vsel %vm148, %v265, %v266
    %v268 = vrot.slane %v259, 2
    %v269 = vsel %vm148, %v266, %v268
    %v270 = vrot.slane %v260, 2
    %v271 = vsel %vm148, %v268, %v270
    %v276 = vadd.f32 %v252, %v267
    %v277 = vadd.f32 %v253, %v269
    %v278 = vadd.f32 %v254, %v271
    %v279 = vadd.f32 %v255, %v270
    %v280 = vadd.f32 %v160, %v276
    %v281 = vadd.f32 %v161, %v277
    %v282 = vadd.f32 %v162, %v278
    %v283 = vadd.f32 %v163, %v279
    %s284 = scalar_lea.vmem %s2, 32
    %v285 = vld [vmem:[%s284] sm:$0xf]
    %v286 = vld [vmem:[%s284 + $0x4] sm:$0xf]
    %v287 = vld [vmem:[%s284 + $0x8] sm:$0xf]
    %v288 = vld [vmem:[%s284 + $0xc] sm:$0x1]
    %v289 = vunpack.c.l.bf16 %v285
    %v290 = vunpack.c.l.bf16 %v286
    %v291 = vunpack.c.l.bf16 %v287
    %v292 = vunpack.c.l.bf16 %v288
    %v293 = vld [vmem:[%s284 + $0xc] sm:$0x3]
    %v294 = vunpack.c.l.bf16 %v293
    %v295 = vld [vmem:[%s284] sm:$0xe]
    %v296 = vunpack.c.l.bf16 %v295
    %v297 = vmul.f32 %v109, %v289
    %v298 = vmul.f32 %v109, %v290
    %v299 = vmul.f32 %v109, %v291
    %v300 = vmul.f32 %v109, %v292
    %v301 = vmul.f32 %v114, %v289
    %v302 = vmul.f32 %v114, %v290
    %v303 = vmul.f32 %v114, %v291
    %v304 = vmul.f32 %v114, %v294
    %v309 = vrot.slane %v301, 1
    %v310 = vrot.slane %v302, 1
    %v311 = vsel %vm123, %v309, %v310
    %v312 = vrot.slane %v303, 1
    %v313 = vsel %vm123, %v310, %v312
    %v314 = vrot.slane %v304, 1
    %v315 = vsel %vm123, %v312, %v314
    %v320 = vadd.f32 %v297, %v311
    %v321 = vadd.f32 %v298, %v313
    %v322 = vadd.f32 %v299, %v315
    %v323 = vadd.f32 %v300, %v314
    %v324 = vmul.f32 %v139, %v296
    %v325 = vmul.f32 %v139, %v290
    %v326 = vmul.f32 %v139, %v291
    %v327 = vmul.f32 %v139, %v294
    %v332 = vrot.slane %v324, 2
    %v333 = vrot.slane %v325, 2
    %v334 = vsel %vm148, %v332, %v333
    %v335 = vrot.slane %v326, 2
    %v336 = vsel %vm148, %v333, %v335
    %v337 = vrot.slane %v327, 2
    %v338 = vsel %vm148, %v335, %v337
    %v343 = vadd.f32 %v320, %v334
    %v344 = vadd.f32 %v321, %v336
    %v345 = vadd.f32 %v322, %v338
    %v346 = vadd.f32 %v323, %v337
    %v347 = vmul.f32 %v227, %v289
    %v348 = vmul.f32 %v227, %v290
    %v349 = vmul.f32 %v227, %v291
    %v350 = vmul.f32 %v227, %v292
    %v351 = vmul.f32 %v232, %v289
    %v352 = vmul.f32 %v232, %v290
    %v353 = vmul.f32 %v232, %v291
    %v354 = vmul.f32 %v232, %v294
    %v359 = vrot.slane %v351, 1
    %v360 = vrot.slane %v352, 1
    %v361 = vsel %vm123, %v359, %v360
    %v362 = vrot.slane %v353, 1
    %v363 = vsel %vm123, %v360, %v362
    %v364 = vrot.slane %v354, 1
    %v365 = vsel %vm123, %v362, %v364
    %v370 = vadd.f32 %v347, %v361
    %v371 = vadd.f32 %v348, %v363
    %v372 = vadd.f32 %v349, %v365
    %v373 = vadd.f32 %v350, %v364
    %v374 = vmul.f32 %v256, %v296
    %v375 = vmul.f32 %v256, %v290
    %v376 = vmul.f32 %v256, %v291
    %v377 = vmul.f32 %v256, %v294
    %v382 = vrot.slane %v374, 2
    %v383 = vrot.slane %v375, 2
    %v384 = vsel %vm148, %v382, %v383
    %v385 = vrot.slane %v376, 2
    %v386 = vsel %vm148, %v383, %v385
    %v387 = vrot.slane %v377, 2
    %v388 = vsel %vm148, %v385, %v387
    %v393 = vadd.f32 %v370, %v384
    %v394 = vadd.f32 %v371, %v386
    %v395 = vadd.f32 %v372, %v388
    %v396 = vadd.f32 %v373, %v387
    %v397 = vadd.f32 %v223, %v393
    %v398 = vadd.f32 %v224, %v394
    %v399 = vadd.f32 %v225, %v395
    %v400 = vadd.f32 %v226, %v396
    %v401 = vstv %s41
    %v402 = vmul.f32 %v401, %v289
    %v403 = vmul.f32 %v401, %v290
    %v404 = vmul.f32 %v401, %v291
    %v405 = vmul.f32 %v401, %v292
    %v406 = vstv %s42
    %v407 = vmul.f32 %v406, %v289
    %v408 = vmul.f32 %v406, %v290
    %v409 = vmul.f32 %v406, %v291
    %v410 = vmul.f32 %v406, %v294
    %v415 = vrot.slane %v407, 1
    %v416 = vrot.slane %v408, 1
    %v417 = vsel %vm123, %v415, %v416
    %v418 = vrot.slane %v409, 1
    %v419 = vsel %vm123, %v416, %v418
    %v420 = vrot.slane %v410, 1
    %v421 = vsel %vm123, %v418, %v420
    %v426 = vadd.f32 %v402, %v417
    %v427 = vadd.f32 %v403, %v419
    %v428 = vadd.f32 %v404, %v421
    %v429 = vadd.f32 %v405, %v420
    %v430 = vstv %s43
    %v431 = vmul.f32 %v430, %v296
    %v432 = vmul.f32 %v430, %v290
    %v433 = vmul.f32 %v430, %v291
    %v434 = vmul.f32 %v430, %v294
    %v439 = vrot.slane %v431, 2
    %v440 = vrot.slane %v432, 2
    %v441 = vsel %vm148, %v439, %v440
    %v442 = vrot.slane %v433, 2
    %v443 = vsel %vm148, %v440, %v442
    %v444 = vrot.slane %v434, 2
    %v445 = vsel %vm148, %v442, %v444
    %v450 = vadd.f32 %v426, %v441
    %v451 = vadd.f32 %v427, %v443
    %v452 = vadd.f32 %v428, %v445
    %v453 = vadd.f32 %v429, %v444
    %v454 = vadd.f32 %v280, %v450
    %v455 = vadd.f32 %v281, %v451
    %v456 = vadd.f32 %v282, %v452
    %v457 = vadd.f32 %v283, %v453
    %v458 = vstv %s44
    %v459 = vadd.f32 %v454, %v458
    %v460 = vadd.f32 %v455, %v458
    %v461 = vadd.f32 %v456, %v458
    %v462 = vadd.f32 %v457, %v458
    %v463 = vmax.f32 %v459, 0.0
    %v464 = vmax.f32 %v460, 0.0
    %v465 = vmax.f32 %v461, 0.0
    %v466 = vmax.f32 %v462, 0.0
    %v467 = vpack.c.bf16 %v464, %v463
    %v468 = vpack.c.bf16 %v466, %v465
    %469 = vst [vmem:[#allocation2] sm:$0xff] %v467
    %470 = vst [vmem:[#allocation2 + $0x8] sm:$0x1f] %v468
    %s471 = scalar_lea.vmem %s2, 48
    %v472 = vld [vmem:[%s471] sm:$0xf]
    %v473 = vld [vmem:[%s471 + $0x4] sm:$0xf]
    %v474 = vld [vmem:[%s471 + $0x8] sm:$0xf]
    %v475 = vld [vmem:[%s471 + $0xc] sm:$0x1]
    %v476 = vunpack.c.l.bf16 %v472
    %v477 = vunpack.c.l.bf16 %v473
    %v478 = vunpack.c.l.bf16 %v474
    %v479 = vunpack.c.l.bf16 %v475
    %v480 = vld [vmem:[%s471 + $0xc] sm:$0x3]
    %v481 = vunpack.c.l.bf16 %v480
    %v482 = vld [vmem:[%s471] sm:$0xe]
    %v483 = vunpack.c.l.bf16 %v482
    %v484 = vmul.f32 %v109, %v476
    %v485 = vmul.f32 %v109, %v477
    %v486 = vmul.f32 %v109, %v478
    %v487 = vmul.f32 %v109, %v479
    %v488 = vmul.f32 %v114, %v476
    %v489 = vmul.f32 %v114, %v477
    %v490 = vmul.f32 %v114, %v478
    %v491 = vmul.f32 %v114, %v481
    %v496 = vrot.slane %v488, 1
    %v497 = vrot.slane %v489, 1
    %v498 = vsel %vm123, %v496, %v497
    %v499 = vrot.slane %v490, 1
    %v500 = vsel %vm123, %v497, %v499
    %v501 = vrot.slane %v491, 1
    %v502 = vsel %vm123, %v499, %v501
    %v507 = vadd.f32 %v484, %v498
    %v508 = vadd.f32 %v485, %v500
    %v509 = vadd.f32 %v486, %v502
    %v510 = vadd.f32 %v487, %v501
    %v511 = vmul.f32 %v139, %v483
    %v512 = vmul.f32 %v139, %v477
    %v513 = vmul.f32 %v139, %v478
    %v514 = vmul.f32 %v139, %v481
    %v519 = vrot.slane %v511, 2
    %v520 = vrot.slane %v512, 2
    %v521 = vsel %vm148, %v519, %v520
    %v522 = vrot.slane %v513, 2
    %v523 = vsel %vm148, %v520, %v522
    %v524 = vrot.slane %v514, 2
    %v525 = vsel %vm148, %v522, %v524
    %v530 = vadd.f32 %v507, %v521
    %v531 = vadd.f32 %v508, %v523
    %v532 = vadd.f32 %v509, %v525
    %v533 = vadd.f32 %v510, %v524
    %v534 = vmul.f32 %v227, %v476
    %v535 = vmul.f32 %v227, %v477
    %v536 = vmul.f32 %v227, %v478
    %v537 = vmul.f32 %v227, %v479
    %v538 = vmul.f32 %v232, %v476
    %v539 = vmul.f32 %v232, %v477
    %v540 = vmul.f32 %v232, %v478
    %v541 = vmul.f32 %v232, %v481
    %v546 = vrot.slane %v538, 1
    %v547 = vrot.slane %v539, 1
    %v548 = vsel %vm123, %v546, %v547
    %v549 = vrot.slane %v540, 1
    %v550 = vsel %vm123, %v547, %v549
    %v551 = vrot.slane %v541, 1
    %v552 = vsel %vm123, %v549, %v551
    %v557 = vadd.f32 %v534, %v548
    %v558 = vadd.f32 %v535, %v550
    %v559 = vadd.f32 %v536, %v552
    %v560 = vadd.f32 %v537, %v551
    %v561 = vmul.f32 %v256, %v483
    %v562 = vmul.f32 %v256, %v477
    %v563 = vmul.f32 %v256, %v478
    %v564 = vmul.f32 %v256, %v481
    %v569 = vrot.slane %v561, 2
    %v570 = vrot.slane %v562, 2
    %v571 = vsel %vm148, %v569, %v570
    %v572 = vrot.slane %v563, 2
    %v573 = vsel %vm148, %v570, %v572
    %v574 = vrot.slane %v564, 2
    %v575 = vsel %vm148, %v572, %v574
    %v580 = vadd.f32 %v557, %v571
    %v581 = vadd.f32 %v558, %v573
    %v582 = vadd.f32 %v559, %v575
    %v583 = vadd.f32 %v560, %v574
    %v584 = vadd.f32 %v343, %v580
    %v585 = vadd.f32 %v344, %v581
    %v586 = vadd.f32 %v345, %v582
    %v587 = vadd.f32 %v346, %v583
    %v588 = vmul.f32 %v401, %v476
    %v589 = vmul.f32 %v401, %v477
    %v590 = vmul.f32 %v401, %v478
    %v591 = vmul.f32 %v401, %v479
    %v592 = vmul.f32 %v406, %v476
    %v593 = vmul.f32 %v406, %v477
    %v594 = vmul.f32 %v406, %v478
    %v595 = vmul.f32 %v406, %v481
    %v600 = vrot.slane %v592, 1
    %v601 = vrot.slane %v593, 1
    %v602 = vsel %vm123, %v600, %v601
    %v603 = vrot.slane %v594, 1
    %v604 = vsel %vm123, %v601, %v603
    %v605 = vrot.slane %v595, 1
    %v606 = vsel %vm123, %v603, %v605
    %v611 = vadd.f32 %v588, %v602
    %v612 = vadd.f32 %v589, %v604
    %v613 = vadd.f32 %v590, %v606
    %v614 = vadd.f32 %v591, %v605
    %v615 = vmul.f32 %v430, %v483
    %v616 = vmul.f32 %v430, %v477
    %v617 = vmul.f32 %v430, %v478
    %v618 = vmul.f32 %v430, %v481
    %v623 = vrot.slane %v615, 2
    %v624 = vrot.slane %v616, 2
    %v625 = vsel %vm148, %v623, %v624
    %v626 = vrot.slane %v617, 2
    %v627 = vsel %vm148, %v624, %v626
    %v628 = vrot.slane %v618, 2
    %v629 = vsel %vm148, %v626, %v628
    %v634 = vadd.f32 %v611, %v625
    %v635 = vadd.f32 %v612, %v627
    %v636 = vadd.f32 %v613, %v629
    %v637 = vadd.f32 %v614, %v628
    %v638 = vadd.f32 %v397, %v634
    %v639 = vadd.f32 %v398, %v635
    %v640 = vadd.f32 %v399, %v636
    %v641 = vadd.f32 %v400, %v637
    %v642 = vadd.f32 %v638, %v458
    %v643 = vadd.f32 %v639, %v458
    %v644 = vadd.f32 %v640, %v458
    %v645 = vadd.f32 %v641, %v458
    %v646 = vmax.f32 %v642, 0.0
    %v647 = vmax.f32 %v643, 0.0
    %v648 = vmax.f32 %v644, 0.0
    %v649 = vmax.f32 %v645, 0.0
    %v650 = vpack.c.bf16 %v647, %v646
    %v651 = vpack.c.bf16 %v649, %v648
    %652 = vst [vmem:[#allocation2 + $0x10] sm:$0xff] %v650
    %653 = vst [vmem:[#allocation2 + $0x18] sm:$0x1f] %v651
    %s654 = scalar_lea.vmem %s2, 64
    %v655 = vld [vmem:[%s654] sm:$0xf]
    %v656 = vld [vmem:[%s654 + $0x4] sm:$0xf]
    %v657 = vld [vmem:[%s654 + $0x8] sm:$0xf]
    %v658 = vld [vmem:[%s654 + $0xc] sm:$0x1]
    %v659 = vunpack.c.l.bf16 %v655
    %v660 = vunpack.c.l.bf16 %v656
    %v661 = vunpack.c.l.bf16 %v657
    %v662 = vunpack.c.l.bf16 %v658
    %v663 = vld [vmem:[%s654 + $0xc] sm:$0x3]
    %v664 = vunpack.c.l.bf16 %v663
    %v665 = vld [vmem:[%s654] sm:$0xe]
    %v666 = vunpack.c.l.bf16 %v665
    %v667 = vmul.f32 %v109, %v659
    %v668 = vmul.f32 %v109, %v660
    %v669 = vmul.f32 %v109, %v661
    %v670 = vmul.f32 %v109, %v662
    %v671 = vmul.f32 %v114, %v659
    %v672 = vmul.f32 %v114, %v660
    %v673 = vmul.f32 %v114, %v661
    %v674 = vmul.f32 %v114, %v664
    %v679 = vrot.slane %v671, 1
    %v680 = vrot.slane %v672, 1
    %v681 = vsel %vm123, %v679, %v680
    %v682 = vrot.slane %v673, 1
    %v683 = vsel %vm123, %v680, %v682
    %v684 = vrot.slane %v674, 1
    %v685 = vsel %vm123, %v682, %v684
    %v690 = vadd.f32 %v667, %v681
    %v691 = vadd.f32 %v668, %v683
    %v692 = vadd.f32 %v669, %v685
    %v693 = vadd.f32 %v670, %v684
    %v694 = vmul.f32 %v139, %v666
    %v695 = vmul.f32 %v139, %v660
    %v696 = vmul.f32 %v139, %v661
    %v697 = vmul.f32 %v139, %v664
    %v702 = vrot.slane %v694, 2
    %v703 = vrot.slane %v695, 2
    %v704 = vsel %vm148, %v702, %v703
    %v705 = vrot.slane %v696, 2
    %v706 = vsel %vm148, %v703, %v705
    %v707 = vrot.slane %v697, 2
    %v708 = vsel %vm148, %v705, %v707
    %v713 = vadd.f32 %v690, %v704
    %v714 = vadd.f32 %v691, %v706
    %v715 = vadd.f32 %v692, %v708
    %v716 = vadd.f32 %v693, %v707
    %v717 = vmul.f32 %v227, %v659
    %v718 = vmul.f32 %v227, %v660
    %v719 = vmul.f32 %v227, %v661
    %v720 = vmul.f32 %v227, %v662
    %v721 = vmul.f32 %v232, %v659
    %v722 = vmul.f32 %v232, %v660
    %v723 = vmul.f32 %v232, %v661
    %v724 = vmul.f32 %v232, %v664
    %v729 = vrot.slane %v721, 1
    %v730 = vrot.slane %v722, 1
    %v731 = vsel %vm123, %v729, %v730
    %v732 = vrot.slane %v723, 1
    %v733 = vsel %vm123, %v730, %v732
    %v734 = vrot.slane %v724, 1
    %v735 = vsel %vm123, %v732, %v734
    %v740 = vadd.f32 %v717, %v731
    %v741 = vadd.f32 %v718, %v733
    %v742 = vadd.f32 %v719, %v735
    %v743 = vadd.f32 %v720, %v734
    %v744 = vmul.f32 %v256, %v666
    %v745 = vmul.f32 %v256, %v660
    %v746 = vmul.f32 %v256, %v661
    %v747 = vmul.f32 %v256, %v664
    %v752 = vrot.slane %v744, 2
    %v753 = vrot.slane %v745, 2
    %v754 = vsel %vm148, %v752, %v753
    %v755 = vrot.slane %v746, 2
    %v756 = vsel %vm148, %v753, %v755
    %v757 = vrot.slane %v747, 2
    %v758 = vsel %vm148, %v755, %v757
    %v763 = vadd.f32 %v740, %v754
    %v764 = vadd.f32 %v741, %v756
    %v765 = vadd.f32 %v742, %v758
    %v766 = vadd.f32 %v743, %v757
    %v767 = vadd.f32 %v530, %v763
    %v768 = vadd.f32 %v531, %v764
    %v769 = vadd.f32 %v532, %v765
    %v770 = vadd.f32 %v533, %v766
    %v771 = vmul.f32 %v401, %v659
    %v772 = vmul.f32 %v401, %v660
    %v773 = vmul.f32 %v401, %v661
    %v774 = vmul.f32 %v401, %v662
    %v775 = vmul.f32 %v406, %v659
    %v776 = vmul.f32 %v406, %v660
    %v777 = vmul.f32 %v406, %v661
    %v778 = vmul.f32 %v406, %v664
    %v783 = vrot.slane %v775, 1
    %v784 = vrot.slane %v776, 1
    %v785 = vsel %vm123, %v783, %v784
    %v786 = vrot.slane %v777, 1
    %v787 = vsel %vm123, %v784, %v786
    %v788 = vrot.slane %v778, 1
    %v789 = vsel %vm123, %v786, %v788
    %v794 = vadd.f32 %v771, %v785
    %v795 = vadd.f32 %v772, %v787
    %v796 = vadd.f32 %v773, %v789
    %v797 = vadd.f32 %v774, %v788
    %v798 = vmul.f32 %v430, %v666
    %v799 = vmul.f32 %v430, %v660
    %v800 = vmul.f32 %v430, %v661
    %v801 = vmul.f32 %v430, %v664
    %v806 = vrot.slane %v798, 2
    %v807 = vrot.slane %v799, 2
    %v808 = vsel %vm148, %v806, %v807
    %v809 = vrot.slane %v800, 2
    %v810 = vsel %vm148, %v807, %v809
    %v811 = vrot.slane %v801, 2
    %v812 = vsel %vm148, %v809, %v811
    %v817 = vadd.f32 %v794, %v808
    %v818 = vadd.f32 %v795, %v810
    %v819 = vadd.f32 %v796, %v812
    %v820 = vadd.f32 %v797, %v811
    %v821 = vadd.f32 %v584, %v817
    %v822 = vadd.f32 %v585, %v818
    %v823 = vadd.f32 %v586, %v819
    %v824 = vadd.f32 %v587, %v820
    %v825 = vadd.f32 %v821, %v458
    %v826 = vadd.f32 %v822, %v458
    %v827 = vadd.f32 %v823, %v458
    %v828 = vadd.f32 %v824, %v458
    %v829 = vmax.f32 %v825, 0.0
    %v830 = vmax.f32 %v826, 0.0
    %v831 = vmax.f32 %v827, 0.0
    %v832 = vmax.f32 %v828, 0.0
    %v833 = vpack.c.bf16 %v830, %v829
    %v834 = vpack.c.bf16 %v832, %v831
    %835 = vst [vmem:[#allocation2 + $0x20] sm:$0xff] %v833
    %836 = vst [vmem:[#allocation2 + $0x28] sm:$0x1f] %v834
    %s837 = scalar_lea.vmem %s2, 80
    %v838 = vld [vmem:[%s837] sm:$0xf]
    %v839 = vld [vmem:[%s837 + $0x4] sm:$0xf]
    %v840 = vld [vmem:[%s837 + $0x8] sm:$0xf]
    %v841 = vld [vmem:[%s837 + $0xc] sm:$0x1]
    %v842 = vunpack.c.l.bf16 %v838
    %v843 = vunpack.c.l.bf16 %v839
    %v844 = vunpack.c.l.bf16 %v840
    %v845 = vunpack.c.l.bf16 %v841
    %v846 = vld [vmem:[%s837 + $0xc] sm:$0x3]
    %v847 = vunpack.c.l.bf16 %v846
    %v848 = vld [vmem:[%s837] sm:$0xe]
    %v849 = vunpack.c.l.bf16 %v848
    %v850 = vmul.f32 %v109, %v842
    %v851 = vmul.f32 %v109, %v843
    %v852 = vmul.f32 %v109, %v844
    %v853 = vmul.f32 %v109, %v845
    %v854 = vmul.f32 %v114, %v842
    %v855 = vmul.f32 %v114, %v843
    %v856 = vmul.f32 %v114, %v844
    %v857 = vmul.f32 %v114, %v847
    %v862 = vrot.slane %v854, 1
    %v863 = vrot.slane %v855, 1
    %v864 = vsel %vm123, %v862, %v863
    %v865 = vrot.slane %v856, 1
    %v866 = vsel %vm123, %v863, %v865
    %v867 = vrot.slane %v857, 1
    %v868 = vsel %vm123, %v865, %v867
    %v873 = vadd.f32 %v850, %v864
    %v874 = vadd.f32 %v851, %v866
    %v875 = vadd.f32 %v852, %v868
    %v876 = vadd.f32 %v853, %v867
    %v877 = vmul.f32 %v139, %v849
    %v878 = vmul.f32 %v139, %v843
    %v879 = vmul.f32 %v139, %v844
    %v880 = vmul.f32 %v139, %v847
    %v885 = vrot.slane %v877, 2
    %v886 = vrot.slane %v878, 2
    %v887 = vsel %vm148, %v885, %v886
    %v888 = vrot.slane %v879, 2
    %v889 = vsel %vm148, %v886, %v888
    %v890 = vrot.slane %v880, 2
    %v891 = vsel %vm148, %v888, %v890
    %v896 = vadd.f32 %v873, %v887
    %v897 = vadd.f32 %v874, %v889
    %v898 = vadd.f32 %v875, %v891
    %v899 = vadd.f32 %v876, %v890
    %v900 = vmul.f32 %v227, %v842
    %v901 = vmul.f32 %v227, %v843
    %v902 = vmul.f32 %v227, %v844
    %v903 = vmul.f32 %v227, %v845
    %v904 = vmul.f32 %v232, %v842
    %v905 = vmul.f32 %v232, %v843
    %v906 = vmul.f32 %v232, %v844
    %v907 = vmul.f32 %v232, %v847
    %v912 = vrot.slane %v904, 1
    %v913 = vrot.slane %v905, 1
    %v914 = vsel %vm123, %v912, %v913
    %v915 = vrot.slane %v906, 1
    %v916 = vsel %vm123, %v913, %v915
    %v917 = vrot.slane %v907, 1
    %v918 = vsel %vm123, %v915, %v917
    %v923 = vadd.f32 %v900, %v914
    %v924 = vadd.f32 %v901, %v916
    %v925 = vadd.f32 %v902, %v918
    %v926 = vadd.f32 %v903, %v917
    %v927 = vmul.f32 %v256, %v849
    %v928 = vmul.f32 %v256, %v843
    %v929 = vmul.f32 %v256, %v844
    %v930 = vmul.f32 %v256, %v847
    %v935 = vrot.slane %v927, 2
    %v936 = vrot.slane %v928, 2
    %v937 = vsel %vm148, %v935, %v936
    %v938 = vrot.slane %v929, 2
    %v939 = vsel %vm148, %v936, %v938
    %v940 = vrot.slane %v930, 2
    %v941 = vsel %vm148, %v938, %v940
    %v946 = vadd.f32 %v923, %v937
    %v947 = vadd.f32 %v924, %v939
    %v948 = vadd.f32 %v925, %v941
    %v949 = vadd.f32 %v926, %v940
    %v950 = vadd.f32 %v713, %v946
    %v951 = vadd.f32 %v714, %v947
    %v952 = vadd.f32 %v715, %v948
    %v953 = vadd.f32 %v716, %v949
    %v954 = vmul.f32 %v401, %v842
    %v955 = vmul.f32 %v401, %v843
    %v956 = vmul.f32 %v401, %v844
    %v957 = vmul.f32 %v401, %v845
    %v958 = vmul.f32 %v406, %v842
    %v959 = vmul.f32 %v406, %v843
    %v960 = vmul.f32 %v406, %v844
    %v961 = vmul.f32 %v406, %v847
    %v966 = vrot.slane %v958, 1
    %v967 = vrot.slane %v959, 1
    %v968 = vsel %vm123, %v966, %v967
    %v969 = vrot.slane %v960, 1
    %v970 = vsel %vm123, %v967, %v969
    %v971 = vrot.slane %v961, 1
    %v972 = vsel %vm123, %v969, %v971
    %v977 = vadd.f32 %v954, %v968
    %v978 = vadd.f32 %v955, %v970
    %v979 = vadd.f32 %v956, %v972
    %v980 = vadd.f32 %v957, %v971
    %v981 = vmul.f32 %v430, %v849
    %v982 = vmul.f32 %v430, %v843
    %v983 = vmul.f32 %v430, %v844
    %v984 = vmul.f32 %v430, %v847
    %v989 = vrot.slane %v981, 2
    %v990 = vrot.slane %v982, 2
    %v991 = vsel %vm148, %v989, %v990
    %v992 = vrot.slane %v983, 2
    %v993 = vsel %vm148, %v990, %v992
    %v994 = vrot.slane %v984, 2
    %v995 = vsel %vm148, %v992, %v994
    %v1000 = vadd.f32 %v977, %v991
    %v1001 = vadd.f32 %v978, %v993
    %v1002 = vadd.f32 %v979, %v995
    %v1003 = vadd.f32 %v980, %v994
    %v1004 = vadd.f32 %v767, %v1000
    %v1005 = vadd.f32 %v768, %v1001
    %v1006 = vadd.f32 %v769, %v1002
    %v1007 = vadd.f32 %v770, %v1003
    %v1008 = vadd.f32 %v1004, %v458
    %v1009 = vadd.f32 %v1005, %v458
    %v1010 = vadd.f32 %v1006, %v458
    %v1011 = vadd.f32 %v1007, %v458
    %v1012 = vmax.f32 %v1008, 0.0
    %v1013 = vmax.f32 %v1009, 0.0
    %v1014 = vmax.f32 %v1010, 0.0
    %v1015 = vmax.f32 %v1011, 0.0
    %v1016 = vpack.c.bf16 %v1013, %v1012
    %v1017 = vpack.c.bf16 %v1015, %v1014
    %1018 = vst [vmem:[#allocation2 + $0x30] sm:$0xff] %v1016
    %1019 = vst [vmem:[#allocation2 + $0x38] sm:$0x1f] %v1017
    %s1020 = scalar_lea.vmem %s2, 96
    %v1021 = vld [vmem:[%s1020] sm:$0xf]
    %v1022 = vld [vmem:[%s1020 + $0x4] sm:$0xf]
    %v1023 = vld [vmem:[%s1020 + $0x8] sm:$0xf]
    %v1024 = vld [vmem:[%s1020 + $0xc] sm:$0x1]
    %v1025 = vunpack.c.l.bf16 %v1021
    %v1026 = vunpack.c.l.bf16 %v1022
    %v1027 = vunpack.c.l.bf16 %v1023
    %v1028 = vunpack.c.l.bf16 %v1024
    %v1029 = vld [vmem:[%s1020 + $0xc] sm:$0x3]
    %v1030 = vunpack.c.l.bf16 %v1029
    %v1031 = vld [vmem:[%s1020] sm:$0xe]
    %v1032 = vunpack.c.l.bf16 %v1031
    %v1033 = vmul.f32 %v109, %v1025
    %v1034 = vmul.f32 %v109, %v1026
    %v1035 = vmul.f32 %v109, %v1027
    %v1036 = vmul.f32 %v109, %v1028
    %v1037 = vmul.f32 %v114, %v1025
    %v1038 = vmul.f32 %v114, %v1026
    %v1039 = vmul.f32 %v114, %v1027
    %v1040 = vmul.f32 %v114, %v1030
    %v1045 = vrot.slane %v1037, 1
    %v1046 = vrot.slane %v1038, 1
    %v1047 = vsel %vm123, %v1045, %v1046
    %v1048 = vrot.slane %v1039, 1
    %v1049 = vsel %vm123, %v1046, %v1048
    %v1050 = vrot.slane %v1040, 1
    %v1051 = vsel %vm123, %v1048, %v1050
    %v1056 = vadd.f32 %v1033, %v1047
    %v1057 = vadd.f32 %v1034, %v1049
    %v1058 = vadd.f32 %v1035, %v1051
    %v1059 = vadd.f32 %v1036, %v1050
    %v1060 = vmul.f32 %v139, %v1032
    %v1061 = vmul.f32 %v139, %v1026
    %v1062 = vmul.f32 %v139, %v1027
    %v1063 = vmul.f32 %v139, %v1030
    %v1068 = vrot.slane %v1060, 2
    %v1069 = vrot.slane %v1061, 2
    %v1070 = vsel %vm148, %v1068, %v1069
    %v1071 = vrot.slane %v1062, 2
    %v1072 = vsel %vm148, %v1069, %v1071
    %v1073 = vrot.slane %v1063, 2
    %v1074 = vsel %vm148, %v1071, %v1073
    %v1079 = vadd.f32 %v1056, %v1070
    %v1080 = vadd.f32 %v1057, %v1072
    %v1081 = vadd.f32 %v1058, %v1074
    %v1082 = vadd.f32 %v1059, %v1073
    %v1083 = vmul.f32 %v227, %v1025
    %v1084 = vmul.f32 %v227, %v1026
    %v1085 = vmul.f32 %v227, %v1027
    %v1086 = vmul.f32 %v227, %v1028
    %v1087 = vmul.f32 %v232, %v1025
    %v1088 = vmul.f32 %v232, %v1026
    %v1089 = vmul.f32 %v232, %v1027
    %v1090 = vmul.f32 %v232, %v1030
    %v1095 = vrot.slane %v1087, 1
    %v1096 = vrot.slane %v1088, 1
    %v1097 = vsel %vm123, %v1095, %v1096
    %v1098 = vrot.slane %v1089, 1
    %v1099 = vsel %vm123, %v1096, %v1098
    %v1100 = vrot.slane %v1090, 1
    %v1101 = vsel %vm123, %v1098, %v1100
    %v1106 = vadd.f32 %v1083, %v1097
    %v1107 = vadd.f32 %v1084, %v1099
    %v1108 = vadd.f32 %v1085, %v1101
    %v1109 = vadd.f32 %v1086, %v1100
    %v1110 = vmul.f32 %v256, %v1032
    %v1111 = vmul.f32 %v256, %v1026
    %v1112 = vmul.f32 %v256, %v1027
    %v1113 = vmul.f32 %v256, %v1030
    %v1118 = vrot.slane %v1110, 2
    %v1119 = vrot.slane %v1111, 2
    %v1120 = vsel %vm148, %v1118, %v1119
    %v1121 = vrot.slane %v1112, 2
    %v1122 = vsel %vm148, %v1119, %v1121
    %v1123 = vrot.slane %v1113, 2
    %v1124 = vsel %vm148, %v1121, %v1123
    %v1129 = vadd.f32 %v1106, %v1120
    %v1130 = vadd.f32 %v1107, %v1122
    %v1131 = vadd.f32 %v1108, %v1124
    %v1132 = vadd.f32 %v1109, %v1123
    %v1133 = vadd.f32 %v896, %v1129
    %v1134 = vadd.f32 %v897, %v1130
    %v1135 = vadd.f32 %v898, %v1131
    %v1136 = vadd.f32 %v899, %v1132
    %v1137 = vmul.f32 %v401, %v1025
    %v1138 = vmul.f32 %v401, %v1026
    %v1139 = vmul.f32 %v401, %v1027
    %v1140 = vmul.f32 %v401, %v1028
    %v1141 = vmul.f32 %v406, %v1025
    %v1142 = vmul.f32 %v406, %v1026
    %v1143 = vmul.f32 %v406, %v1027
    %v1144 = vmul.f32 %v406, %v1030
    %v1149 = vrot.slane %v1141, 1
    %v1150 = vrot.slane %v1142, 1
    %v1151 = vsel %vm123, %v1149, %v1150
    %v1152 = vrot.slane %v1143, 1
    %v1153 = vsel %vm123, %v1150, %v1152
    %v1154 = vrot.slane %v1144, 1
    %v1155 = vsel %vm123, %v1152, %v1154
    %v1160 = vadd.f32 %v1137, %v1151
    %v1161 = vadd.f32 %v1138, %v1153
    %v1162 = vadd.f32 %v1139, %v1155
    %v1163 = vadd.f32 %v1140, %v1154
    %v1164 = vmul.f32 %v430, %v1032
    %v1165 = vmul.f32 %v430, %v1026
    %v1166 = vmul.f32 %v430, %v1027
    %v1167 = vmul.f32 %v430, %v1030
    %v1172 = vrot.slane %v1164, 2
    %v1173 = vrot.slane %v1165, 2
    %v1174 = vsel %vm148, %v1172, %v1173
    %v1175 = vrot.slane %v1166, 2
    %v1176 = vsel %vm148, %v1173, %v1175
    %v1177 = vrot.slane %v1167, 2
    %v1178 = vsel %vm148, %v1175, %v1177
    %v1183 = vadd.f32 %v1160, %v1174
    %v1184 = vadd.f32 %v1161, %v1176
    %v1185 = vadd.f32 %v1162, %v1178
    %v1186 = vadd.f32 %v1163, %v1177
    %v1187 = vadd.f32 %v950, %v1183
    %v1188 = vadd.f32 %v951, %v1184
    %v1189 = vadd.f32 %v952, %v1185
    %v1190 = vadd.f32 %v953, %v1186
    %v1191 = vadd.f32 %v1187, %v458
    %v1192 = vadd.f32 %v1188, %v458
    %v1193 = vadd.f32 %v1189, %v458
    %v1194 = vadd.f32 %v1190, %v458
    %v1195 = vmax.f32 %v1191, 0.0
    %v1196 = vmax.f32 %v1192, 0.0
    %v1197 = vmax.f32 %v1193, 0.0
    %v1198 = vmax.f32 %v1194, 0.0
    %v1199 = vpack.c.bf16 %v1196, %v1195
    %v1200 = vpack.c.bf16 %v1198, %v1197
    %1201 = vst [vmem:[#allocation2 + $0x40] sm:$0xff] %v1199
    %1202 = vst [vmem:[#allocation2 + $0x48] sm:$0x1f] %v1200
    %s1203 = scalar_lea.vmem %s2, 112
    %v1204 = vld [vmem:[%s1203] sm:$0xf]
    %v1205 = vld [vmem:[%s1203 + $0x4] sm:$0xf]
    %v1206 = vld [vmem:[%s1203 + $0x8] sm:$0xf]
    %v1207 = vld [vmem:[%s1203 + $0xc] sm:$0x1]
    %v1208 = vunpack.c.l.bf16 %v1204
    %v1209 = vunpack.c.l.bf16 %v1205
    %v1210 = vunpack.c.l.bf16 %v1206
    %v1211 = vunpack.c.l.bf16 %v1207
    %v1212 = vld [vmem:[%s1203 + $0xc] sm:$0x3]
    %v1213 = vunpack.c.l.bf16 %v1212
    %v1214 = vld [vmem:[%s1203] sm:$0xe]
    %v1215 = vunpack.c.l.bf16 %v1214
    %v1216 = vmul.f32 %v109, %v1208
    %v1217 = vmul.f32 %v109, %v1209
    %v1218 = vmul.f32 %v109, %v1210
    %v1219 = vmul.f32 %v109, %v1211
    %v1220 = vmul.f32 %v114, %v1208
    %v1221 = vmul.f32 %v114, %v1209
    %v1222 = vmul.f32 %v114, %v1210
    %v1223 = vmul.f32 %v114, %v1213
    %v1228 = vrot.slane %v1220, 1
    %v1229 = vrot.slane %v1221, 1
    %v1230 = vsel %vm123, %v1228, %v1229
    %v1231 = vrot.slane %v1222, 1
    %v1232 = vsel %vm123, %v1229, %v1231
    %v1233 = vrot.slane %v1223, 1
    %v1234 = vsel %vm123, %v1231, %v1233
    %v1239 = vadd.f32 %v1216, %v1230
    %v1240 = vadd.f32 %v1217, %v1232
    %v1241 = vadd.f32 %v1218, %v1234
    %v1242 = vadd.f32 %v1219, %v1233
    %v1243 = vmul.f32 %v139, %v1215
    %v1244 = vmul.f32 %v139, %v1209
    %v1245 = vmul.f32 %v139, %v1210
    %v1246 = vmul.f32 %v139, %v1213
    %v1251 = vrot.slane %v1243, 2
    %v1252 = vrot.slane %v1244, 2
    %v1253 = vsel %vm148, %v1251, %v1252
    %v1254 = vrot.slane %v1245, 2
    %v1255 = vsel %vm148, %v1252, %v1254
    %v1256 = vrot.slane %v1246, 2
    %v1257 = vsel %vm148, %v1254, %v1256
    %v1262 = vadd.f32 %v1239, %v1253
    %v1263 = vadd.f32 %v1240, %v1255
    %v1264 = vadd.f32 %v1241, %v1257
    %v1265 = vadd.f32 %v1242, %v1256
    %v1266 = vmul.f32 %v227, %v1208
    %v1267 = vmul.f32 %v227, %v1209
    %v1268 = vmul.f32 %v227, %v1210
    %v1269 = vmul.f32 %v227, %v1211
    %v1270 = vmul.f32 %v232, %v1208
    %v1271 = vmul.f32 %v232, %v1209
    %v1272 = vmul.f32 %v232, %v1210
    %v1273 = vmul.f32 %v232, %v1213
    %v1278 = vrot.slane %v1270, 1
    %v1279 = vrot.slane %v1271, 1
    %v1280 = vsel %vm123, %v1278, %v1279
    %v1281 = vrot.slane %v1272, 1
    %v1282 = vsel %vm123, %v1279, %v1281
    %v1283 = vrot.slane %v1273, 1
    %v1284 = vsel %vm123, %v1281, %v1283
    %v1289 = vadd.f32 %v1266, %v1280
    %v1290 = vadd.f32 %v1267, %v1282
    %v1291 = vadd.f32 %v1268, %v1284
    %v1292 = vadd.f32 %v1269, %v1283
    %v1293 = vmul.f32 %v256, %v1215
    %v1294 = vmul.f32 %v256, %v1209
    %v1295 = vmul.f32 %v256, %v1210
    %v1296 = vmul.f32 %v256, %v1213
    %v1301 = vrot.slane %v1293, 2
    %v1302 = vrot.slane %v1294, 2
    %v1303 = vsel %vm148, %v1301, %v1302
    %v1304 = vrot.slane %v1295, 2
    %v1305 = vsel %vm148, %v1302, %v1304
    %v1306 = vrot.slane %v1296, 2
    %v1307 = vsel %vm148, %v1304, %v1306
    %v1312 = vadd.f32 %v1289, %v1303
    %v1313 = vadd.f32 %v1290, %v1305
    %v1314 = vadd.f32 %v1291, %v1307
    %v1315 = vadd.f32 %v1292, %v1306
    %v1316 = vadd.f32 %v1079, %v1312
    %v1317 = vadd.f32 %v1080, %v1313
    %v1318 = vadd.f32 %v1081, %v1314
    %v1319 = vadd.f32 %v1082, %v1315
    %v1320 = vmul.f32 %v401, %v1208
    %v1321 = vmul.f32 %v401, %v1209
    %v1322 = vmul.f32 %v401, %v1210
    %v1323 = vmul.f32 %v401, %v1211
    %v1324 = vmul.f32 %v406, %v1208
    %v1325 = vmul.f32 %v406, %v1209
    %v1326 = vmul.f32 %v406, %v1210
    %v1327 = vmul.f32 %v406, %v1213
    %v1332 = vrot.slane %v1324, 1
    %v1333 = vrot.slane %v1325, 1
    %v1334 = vsel %vm123, %v1332, %v1333
    %v1335 = vrot.slane %v1326, 1
    %v1336 = vsel %vm123, %v1333, %v1335
    %v1337 = vrot.slane %v1327, 1
    %v1338 = vsel %vm123, %v1335, %v1337
    %v1343 = vadd.f32 %v1320, %v1334
    %v1344 = vadd.f32 %v1321, %v1336
    %v1345 = vadd.f32 %v1322, %v1338
    %v1346 = vadd.f32 %v1323, %v1337
    %v1347 = vmul.f32 %v430, %v1215
    %v1348 = vmul.f32 %v430, %v1209
    %v1349 = vmul.f32 %v430, %v1210
    %v1350 = vmul.f32 %v430, %v1213
    %v1355 = vrot.slane %v1347, 2
    %v1356 = vrot.slane %v1348, 2
    %v1357 = vsel %vm148, %v1355, %v1356
    %v1358 = vrot.slane %v1349, 2
    %v1359 = vsel %vm148, %v1356, %v1358
    %v1360 = vrot.slane %v1350, 2
    %v1361 = vsel %vm148, %v1358, %v1360
    %v1366 = vadd.f32 %v1343, %v1357
    %v1367 = vadd.f32 %v1344, %v1359
    %v1368 = vadd.f32 %v1345, %v1361
    %v1369 = vadd.f32 %v1346, %v1360
    %v1370 = vadd.f32 %v1133, %v1366
    %v1371 = vadd.f32 %v1134, %v1367
    %v1372 = vadd.f32 %v1135, %v1368
    %v1373 = vadd.f32 %v1136, %v1369
    %v1374 = vadd.f32 %v1370, %v458
    %v1375 = vadd.f32 %v1371, %v458
    %v1376 = vadd.f32 %v1372, %v458
    %v1377 = vadd.f32 %v1373, %v458
    %v1378 = vmax.f32 %v1374, 0.0
    %v1379 = vmax.f32 %v1375, 0.0
    %v1380 = vmax.f32 %v1376, 0.0
    %v1381 = vmax.f32 %v1377, 0.0
    %v1382 = vpack.c.bf16 %v1379, %v1378
    %v1383 = vpack.c.bf16 %v1381, %v1380
    %1384 = vst [vmem:[#allocation2 + $0x50] sm:$0xff] %v1382
    %1385 = vst [vmem:[#allocation2 + $0x58] sm:$0x1f] %v1383
    %s1386 = scalar_lea.vmem %s2, 128
    %v1387 = vld [vmem:[%s1386] sm:$0xf]
    %v1388 = vld [vmem:[%s1386 + $0x4] sm:$0xf]
    %v1389 = vld [vmem:[%s1386 + $0x8] sm:$0xf]
    %v1390 = vld [vmem:[%s1386 + $0xc] sm:$0x1]
    %v1391 = vunpack.c.l.bf16 %v1387
    %v1392 = vunpack.c.l.bf16 %v1388
    %v1393 = vunpack.c.l.bf16 %v1389
    %v1394 = vunpack.c.l.bf16 %v1390
    %v1395 = vld [vmem:[%s1386 + $0xc] sm:$0x3]
    %v1396 = vunpack.c.l.bf16 %v1395
    %v1397 = vld [vmem:[%s1386] sm:$0xe]
    %v1398 = vunpack.c.l.bf16 %v1397
    %v1399 = vmul.f32 %v109, %v1391
    %v1400 = vmul.f32 %v109, %v1392
    %v1401 = vmul.f32 %v109, %v1393
    %v1402 = vmul.f32 %v109, %v1394
    %v1403 = vmul.f32 %v114, %v1391
    %v1404 = vmul.f32 %v114, %v1392
    %v1405 = vmul.f32 %v114, %v1393
    %v1406 = vmul.f32 %v114, %v1396
    %v1411 = vrot.slane %v1403, 1
    %v1412 = vrot.slane %v1404, 1
    %v1413 = vsel %vm123, %v1411, %v1412
    %v1414 = vrot.slane %v1405, 1
    %v1415 = vsel %vm123, %v1412, %v1414
    %v1416 = vrot.slane %v1406, 1
    %v1417 = vsel %vm123, %v1414, %v1416
    %v1422 = vadd.f32 %v1399, %v1413
    %v1423 = vadd.f32 %v1400, %v1415
    %v1424 = vadd.f32 %v1401, %v1417
    %v1425 = vadd.f32 %v1402, %v1416
    %v1426 = vmul.f32 %v139, %v1398
    %v1427 = vmul.f32 %v139, %v1392
    %v1428 = vmul.f32 %v139, %v1393
    %v1429 = vmul.f32 %v139, %v1396
    %v1434 = vrot.slane %v1426, 2
    %v1435 = vrot.slane %v1427, 2
    %v1436 = vsel %vm148, %v1434, %v1435
    %v1437 = vrot.slane %v1428, 2
    %v1438 = vsel %vm148, %v1435, %v1437
    %v1439 = vrot.slane %v1429, 2
    %v1440 = vsel %vm148, %v1437, %v1439
    %v1445 = vadd.f32 %v1422, %v1436
    %v1446 = vadd.f32 %v1423, %v1438
    %v1447 = vadd.f32 %v1424, %v1440
    %v1448 = vadd.f32 %v1425, %v1439
    %v1449 = vmul.f32 %v227, %v1391
    %v1450 = vmul.f32 %v227, %v1392
    %v1451 = vmul.f32 %v227, %v1393
    %v1452 = vmul.f32 %v227, %v1394
    %v1453 = vmul.f32 %v232, %v1391
    %v1454 = vmul.f32 %v232, %v1392
    %v1455 = vmul.f32 %v232, %v1393
    %v1456 = vmul.f32 %v232, %v1396
    %v1461 = vrot.slane %v1453, 1
    %v1462 = vrot.slane %v1454, 1
    %v1463 = vsel %vm123, %v1461, %v1462
    %v1464 = vrot.slane %v1455, 1
    %v1465 = vsel %vm123, %v1462, %v1464
    %v1466 = vrot.slane %v1456, 1
    %v1467 = vsel %vm123, %v1464, %v1466
    %v1472 = vadd.f32 %v1449, %v1463
    %v1473 = vadd.f32 %v1450, %v1465
    %v1474 = vadd.f32 %v1451, %v1467
    %v1475 = vadd.f32 %v1452, %v1466
    %v1476 = vmul.f32 %v256, %v1398
    %v1477 = vmul.f32 %v256, %v1392
    %v1478 = vmul.f32 %v256, %v1393
    %v1479 = vmul.f32 %v256, %v1396
    %v1484 = vrot.slane %v1476, 2
    %v1485 = vrot.slane %v1477, 2
    %v1486 = vsel %vm148, %v1484, %v1485
    %v1487 = vrot.slane %v1478, 2
    %v1488 = vsel %vm148, %v1485, %v1487
    %v1489 = vrot.slane %v1479, 2
    %v1490 = vsel %vm148, %v1487, %v1489
    %v1495 = vadd.f32 %v1472, %v1486
    %v1496 = vadd.f32 %v1473, %v1488
    %v1497 = vadd.f32 %v1474, %v1490
    %v1498 = vadd.f32 %v1475, %v1489
    %v1499 = vadd.f32 %v1262, %v1495
    %v1500 = vadd.f32 %v1263, %v1496
    %v1501 = vadd.f32 %v1264, %v1497
    %v1502 = vadd.f32 %v1265, %v1498
    %v1503 = vmul.f32 %v401, %v1391
    %v1504 = vmul.f32 %v401, %v1392
    %v1505 = vmul.f32 %v401, %v1393
    %v1506 = vmul.f32 %v401, %v1394
    %v1507 = vmul.f32 %v406, %v1391
    %v1508 = vmul.f32 %v406, %v1392
    %v1509 = vmul.f32 %v406, %v1393
    %v1510 = vmul.f32 %v406, %v1396
    %v1515 = vrot.slane %v1507, 1
    %v1516 = vrot.slane %v1508, 1
    %v1517 = vsel %vm123, %v1515, %v1516
    %v1518 = vrot.slane %v1509, 1
    %v1519 = vsel %vm123, %v1516, %v1518
    %v1520 = vrot.slane %v1510, 1
    %v1521 = vsel %vm123, %v1518, %v1520
    %v1526 = vadd.f32 %v1503, %v1517
    %v1527 = vadd.f32 %v1504, %v1519
    %v1528 = vadd.f32 %v1505, %v1521
    %v1529 = vadd.f32 %v1506, %v1520
    %v1530 = vmul.f32 %v430, %v1398
    %v1531 = vmul.f32 %v430, %v1392
    %v1532 = vmul.f32 %v430, %v1393
    %v1533 = vmul.f32 %v430, %v1396
    %v1538 = vrot.slane %v1530, 2
    %v1539 = vrot.slane %v1531, 2
    %v1540 = vsel %vm148, %v1538, %v1539
    %v1541 = vrot.slane %v1532, 2
    %v1542 = vsel %vm148, %v1539, %v1541
    %v1543 = vrot.slane %v1533, 2
    %v1544 = vsel %vm148, %v1541, %v1543
    %v1549 = vadd.f32 %v1526, %v1540
    %v1550 = vadd.f32 %v1527, %v1542
    %v1551 = vadd.f32 %v1528, %v1544
    %v1552 = vadd.f32 %v1529, %v1543
    %v1553 = vadd.f32 %v1316, %v1549
    %v1554 = vadd.f32 %v1317, %v1550
    %v1555 = vadd.f32 %v1318, %v1551
    %v1556 = vadd.f32 %v1319, %v1552
    %v1557 = vadd.f32 %v1553, %v458
    %v1558 = vadd.f32 %v1554, %v458
    %v1559 = vadd.f32 %v1555, %v458
    %v1560 = vadd.f32 %v1556, %v458
    %v1561 = vmax.f32 %v1557, 0.0
    %v1562 = vmax.f32 %v1558, 0.0
    %v1563 = vmax.f32 %v1559, 0.0
    %v1564 = vmax.f32 %v1560, 0.0
    %v1565 = vpack.c.bf16 %v1562, %v1561
    %v1566 = vpack.c.bf16 %v1564, %v1563
    %1567 = vst [vmem:[#allocation2 + $0x60] sm:$0xff] %v1565
    %1568 = vst [vmem:[#allocation2 + $0x68] sm:$0x1f] %v1566
    %s1569 = scalar_lea.vmem %s2, 144
    %v1570 = vld [vmem:[%s1569] sm:$0xf]
    %v1571 = vld [vmem:[%s1569 + $0x4] sm:$0xf]
    %v1572 = vld [vmem:[%s1569 + $0x8] sm:$0xf]
    %v1573 = vld [vmem:[%s1569 + $0xc] sm:$0x1]
    %v1574 = vunpack.c.l.bf16 %v1570
    %v1575 = vunpack.c.l.bf16 %v1571
    %v1576 = vunpack.c.l.bf16 %v1572
    %v1577 = vunpack.c.l.bf16 %v1573
    %v1578 = vld [vmem:[%s1569 + $0xc] sm:$0x3]
    %v1579 = vunpack.c.l.bf16 %v1578
    %v1580 = vld [vmem:[%s1569] sm:$0xe]
    %v1581 = vunpack.c.l.bf16 %v1580
    %v1582 = vmul.f32 %v109, %v1574
    %v1583 = vmul.f32 %v109, %v1575
    %v1584 = vmul.f32 %v109, %v1576
    %v1585 = vmul.f32 %v109, %v1577
    %v1586 = vmul.f32 %v114, %v1574
    %v1587 = vmul.f32 %v114, %v1575
    %v1588 = vmul.f32 %v114, %v1576
    %v1589 = vmul.f32 %v114, %v1579
    %v1594 = vrot.slane %v1586, 1
    %v1595 = vrot.slane %v1587, 1
    %v1596 = vsel %vm123, %v1594, %v1595
    %v1597 = vrot.slane %v1588, 1
    %v1598 = vsel %vm123, %v1595, %v1597
    %v1599 = vrot.slane %v1589, 1
    %v1600 = vsel %vm123, %v1597, %v1599
    %v1605 = vadd.f32 %v1582, %v1596
    %v1606 = vadd.f32 %v1583, %v1598
    %v1607 = vadd.f32 %v1584, %v1600
    %v1608 = vadd.f32 %v1585, %v1599
    %v1609 = vmul.f32 %v139, %v1581
    %v1610 = vmul.f32 %v139, %v1575
    %v1611 = vmul.f32 %v139, %v1576
    %v1612 = vmul.f32 %v139, %v1579
    %v1617 = vrot.slane %v1609, 2
    %v1618 = vrot.slane %v1610, 2
    %v1619 = vsel %vm148, %v1617, %v1618
    %v1620 = vrot.slane %v1611, 2
    %v1621 = vsel %vm148, %v1618, %v1620
    %v1622 = vrot.slane %v1612, 2
    %v1623 = vsel %vm148, %v1620, %v1622
    %v1628 = vadd.f32 %v1605, %v1619
    %v1629 = vadd.f32 %v1606, %v1621
    %v1630 = vadd.f32 %v1607, %v1623
    %v1631 = vadd.f32 %v1608, %v1622
    %v1632 = vmul.f32 %v227, %v1574
    %v1633 = vmul.f32 %v227, %v1575
    %v1634 = vmul.f32 %v227, %v1576
    %v1635 = vmul.f32 %v227, %v1577
    %v1636 = vmul.f32 %v232, %v1574
    %v1637 = vmul.f32 %v232, %v1575
    %v1638 = vmul.f32 %v232, %v1576
    %v1639 = vmul.f32 %v232, %v1579
    %v1644 = vrot.slane %v1636, 1
    %v1645 = vrot.slane %v1637, 1
    %v1646 = vsel %vm123, %v1644, %v1645
    %v1647 = vrot.slane %v1638, 1
    %v1648 = vsel %vm123, %v1645, %v1647
    %v1649 = vrot.slane %v1639, 1
    %v1650 = vsel %vm123, %v1647, %v1649
    %v1655 = vadd.f32 %v1632, %v1646
    %v1656 = vadd.f32 %v1633, %v1648
    %v1657 = vadd.f32 %v1634, %v1650
    %v1658 = vadd.f32 %v1635, %v1649
    %v1659 = vmul.f32 %v256, %v1581
    %v1660 = vmul.f32 %v256, %v1575
    %v1661 = vmul.f32 %v256, %v1576
    %v1662 = vmul.f32 %v256, %v1579
    %v1667 = vrot.slane %v1659, 2
    %v1668 = vrot.slane %v1660, 2
    %v1669 = vsel %vm148, %v1667, %v1668
    %v1670 = vrot.slane %v1661, 2
    %v1671 = vsel %vm148, %v1668, %v1670
    %v1672 = vrot.slane %v1662, 2
    %v1673 = vsel %vm148, %v1670, %v1672
    %v1678 = vadd.f32 %v1655, %v1669
    %v1679 = vadd.f32 %v1656, %v1671
    %v1680 = vadd.f32 %v1657, %v1673
    %v1681 = vadd.f32 %v1658, %v1672
    %v1682 = vadd.f32 %v1445, %v1678
    %v1683 = vadd.f32 %v1446, %v1679
    %v1684 = vadd.f32 %v1447, %v1680
    %v1685 = vadd.f32 %v1448, %v1681
    %v1686 = vmul.f32 %v401, %v1574
    %v1687 = vmul.f32 %v401, %v1575
    %v1688 = vmul.f32 %v401, %v1576
    %v1689 = vmul.f32 %v401, %v1577
    %v1690 = vmul.f32 %v406, %v1574
    %v1691 = vmul.f32 %v406, %v1575
    %v1692 = vmul.f32 %v406, %v1576
    %v1693 = vmul.f32 %v406, %v1579
    %v1698 = vrot.slane %v1690, 1
    %v1699 = vrot.slane %v1691, 1
    %v1700 = vsel %vm123, %v1698, %v1699
    %v1701 = vrot.slane %v1692, 1
    %v1702 = vsel %vm123, %v1699, %v1701
    %v1703 = vrot.slane %v1693, 1
    %v1704 = vsel %vm123, %v1701, %v1703
    %v1709 = vadd.f32 %v1686, %v1700
    %v1710 = vadd.f32 %v1687, %v1702
    %v1711 = vadd.f32 %v1688, %v1704
    %v1712 = vadd.f32 %v1689, %v1703
    %v1713 = vmul.f32 %v430, %v1581
    %v1714 = vmul.f32 %v430, %v1575
    %v1715 = vmul.f32 %v430, %v1576
    %v1716 = vmul.f32 %v430, %v1579
    %v1721 = vrot.slane %v1713, 2
    %v1722 = vrot.slane %v1714, 2
    %v1723 = vsel %vm148, %v1721, %v1722
    %v1724 = vrot.slane %v1715, 2
    %v1725 = vsel %vm148, %v1722, %v1724
    %v1726 = vrot.slane %v1716, 2
    %v1727 = vsel %vm148, %v1724, %v1726
    %v1732 = vadd.f32 %v1709, %v1723
    %v1733 = vadd.f32 %v1710, %v1725
    %v1734 = vadd.f32 %v1711, %v1727
    %v1735 = vadd.f32 %v1712, %v1726
    %v1736 = vadd.f32 %v1499, %v1732
    %v1737 = vadd.f32 %v1500, %v1733
    %v1738 = vadd.f32 %v1501, %v1734
    %v1739 = vadd.f32 %v1502, %v1735
    %v1740 = vadd.f32 %v1736, %v458
    %v1741 = vadd.f32 %v1737, %v458
    %v1742 = vadd.f32 %v1738, %v458
    %v1743 = vadd.f32 %v1739, %v458
    %v1744 = vmax.f32 %v1740, 0.0
    %v1745 = vmax.f32 %v1741, 0.0
    %v1746 = vmax.f32 %v1742, 0.0
    %v1747 = vmax.f32 %v1743, 0.0
    %v1748 = vpack.c.bf16 %v1745, %v1744
    %v1749 = vpack.c.bf16 %v1747, %v1746
    %1750 = vst [vmem:[#allocation2 + $0x70] sm:$0xff] %v1748
    %1751 = vst [vmem:[#allocation2 + $0x78] sm:$0x1f] %v1749
    %s1752 = scalar_lea.vmem %s2, 160
    %v1753 = vld [vmem:[%s1752] sm:$0xf]
    %v1754 = vld [vmem:[%s1752 + $0x4] sm:$0xf]
    %v1755 = vld [vmem:[%s1752 + $0x8] sm:$0xf]
    %v1756 = vld [vmem:[%s1752 + $0xc] sm:$0x1]
    %v1757 = vunpack.c.l.bf16 %v1753
    %v1758 = vunpack.c.l.bf16 %v1754
    %v1759 = vunpack.c.l.bf16 %v1755
    %v1760 = vunpack.c.l.bf16 %v1756
    %v1761 = vld [vmem:[%s1752 + $0xc] sm:$0x3]
    %v1762 = vunpack.c.l.bf16 %v1761
    %v1763 = vld [vmem:[%s1752] sm:$0xe]
    %v1764 = vunpack.c.l.bf16 %v1763
    %v1765 = vmul.f32 %v109, %v1757
    %v1766 = vmul.f32 %v109, %v1758
    %v1767 = vmul.f32 %v109, %v1759
    %v1768 = vmul.f32 %v109, %v1760
    %v1769 = vmul.f32 %v114, %v1757
    %v1770 = vmul.f32 %v114, %v1758
    %v1771 = vmul.f32 %v114, %v1759
    %v1772 = vmul.f32 %v114, %v1762
    %v1777 = vrot.slane %v1769, 1
    %v1778 = vrot.slane %v1770, 1
    %v1779 = vsel %vm123, %v1777, %v1778
    %v1780 = vrot.slane %v1771, 1
    %v1781 = vsel %vm123, %v1778, %v1780
    %v1782 = vrot.slane %v1772, 1
    %v1783 = vsel %vm123, %v1780, %v1782
    %v1788 = vadd.f32 %v1765, %v1779
    %v1789 = vadd.f32 %v1766, %v1781
    %v1790 = vadd.f32 %v1767, %v1783
    %v1791 = vadd.f32 %v1768, %v1782
    %v1792 = vmul.f32 %v139, %v1764
    %v1793 = vmul.f32 %v139, %v1758
    %v1794 = vmul.f32 %v139, %v1759
    %v1795 = vmul.f32 %v139, %v1762
    %v1800 = vrot.slane %v1792, 2
    %v1801 = vrot.slane %v1793, 2
    %v1802 = vsel %vm148, %v1800, %v1801
    %v1803 = vrot.slane %v1794, 2
    %v1804 = vsel %vm148, %v1801, %v1803
    %v1805 = vrot.slane %v1795, 2
    %v1806 = vsel %vm148, %v1803, %v1805
    %v1811 = vadd.f32 %v1788, %v1802
    %v1812 = vadd.f32 %v1789, %v1804
    %v1813 = vadd.f32 %v1790, %v1806
    %v1814 = vadd.f32 %v1791, %v1805
    %v1815 = vmul.f32 %v227, %v1757
    %v1816 = vmul.f32 %v227, %v1758
    %v1817 = vmul.f32 %v227, %v1759
    %v1818 = vmul.f32 %v227, %v1760
    %v1819 = vmul.f32 %v232, %v1757
    %v1820 = vmul.f32 %v232, %v1758
    %v1821 = vmul.f32 %v232, %v1759
    %v1822 = vmul.f32 %v232, %v1762
    %v1827 = vrot.slane %v1819, 1
    %v1828 = vrot.slane %v1820, 1
    %v1829 = vsel %vm123, %v1827, %v1828
    %v1830 = vrot.slane %v1821, 1
    %v1831 = vsel %vm123, %v1828, %v1830
    %v1832 = vrot.slane %v1822, 1
    %v1833 = vsel %vm123, %v1830, %v1832
    %v1838 = vadd.f32 %v1815, %v1829
    %v1839 = vadd.f32 %v1816, %v1831
    %v1840 = vadd.f32 %v1817, %v1833
    %v1841 = vadd.f32 %v1818, %v1832
    %v1842 = vmul.f32 %v256, %v1764
    %v1843 = vmul.f32 %v256, %v1758
    %v1844 = vmul.f32 %v256, %v1759
    %v1845 = vmul.f32 %v256, %v1762
    %v1850 = vrot.slane %v1842, 2
    %v1851 = vrot.slane %v1843, 2
    %v1852 = vsel %vm148, %v1850, %v1851
    %v1853 = vrot.slane %v1844, 2
    %v1854 = vsel %vm148, %v1851, %v1853
    %v1855 = vrot.slane %v1845, 2
    %v1856 = vsel %vm148, %v1853, %v1855
    %v1861 = vadd.f32 %v1838, %v1852
    %v1862 = vadd.f32 %v1839, %v1854
    %v1863 = vadd.f32 %v1840, %v1856
    %v1864 = vadd.f32 %v1841, %v1855
    %v1865 = vadd.f32 %v1628, %v1861
    %v1866 = vadd.f32 %v1629, %v1862
    %v1867 = vadd.f32 %v1630, %v1863
    %v1868 = vadd.f32 %v1631, %v1864
    %v1869 = vmul.f32 %v401, %v1757
    %v1870 = vmul.f32 %v401, %v1758
    %v1871 = vmul.f32 %v401, %v1759
    %v1872 = vmul.f32 %v401, %v1760
    %v1873 = vmul.f32 %v406, %v1757
    %v1874 = vmul.f32 %v406, %v1758
    %v1875 = vmul.f32 %v406, %v1759
    %v1876 = vmul.f32 %v406, %v1762
    %v1881 = vrot.slane %v1873, 1
    %v1882 = vrot.slane %v1874, 1
    %v1883 = vsel %vm123, %v1881, %v1882
    %v1884 = vrot.slane %v1875, 1
    %v1885 = vsel %vm123, %v1882, %v1884
    %v1886 = vrot.slane %v1876, 1
    %v1887 = vsel %vm123, %v1884, %v1886
    %v1892 = vadd.f32 %v1869, %v1883
    %v1893 = vadd.f32 %v1870, %v1885
    %v1894 = vadd.f32 %v1871, %v1887
    %v1895 = vadd.f32 %v1872, %v1886
    %v1896 = vmul.f32 %v430, %v1764
    %v1897 = vmul.f32 %v430, %v1758
    %v1898 = vmul.f32 %v430, %v1759
    %v1899 = vmul.f32 %v430, %v1762
    %v1904 = vrot.slane %v1896, 2
    %v1905 = vrot.slane %v1897, 2
    %v1906 = vsel %vm148, %v1904, %v1905
    %v1907 = vrot.slane %v1898, 2
    %v1908 = vsel %vm148, %v1905, %v1907
    %v1909 = vrot.slane %v1899, 2
    %v1910 = vsel %vm148, %v1907, %v1909
    %v1915 = vadd.f32 %v1892, %v1906
    %v1916 = vadd.f32 %v1893, %v1908
    %v1917 = vadd.f32 %v1894, %v1910
    %v1918 = vadd.f32 %v1895, %v1909
    %v1919 = vadd.f32 %v1682, %v1915
    %v1920 = vadd.f32 %v1683, %v1916
    %v1921 = vadd.f32 %v1684, %v1917
    %v1922 = vadd.f32 %v1685, %v1918
    %v1923 = vadd.f32 %v1919, %v458
    %v1924 = vadd.f32 %v1920, %v458
    %v1925 = vadd.f32 %v1921, %v458
    %v1926 = vadd.f32 %v1922, %v458
    %v1927 = vmax.f32 %v1923, 0.0
    %v1928 = vmax.f32 %v1924, 0.0
    %v1929 = vmax.f32 %v1925, 0.0
    %v1930 = vmax.f32 %v1926, 0.0
    %v1931 = vpack.c.bf16 %v1928, %v1927
    %v1932 = vpack.c.bf16 %v1930, %v1929
    %1933 = vst [vmem:[#allocation2 + $0x80] sm:$0xff] %v1931
    %1934 = vst [vmem:[#allocation2 + $0x88] sm:$0x1f] %v1932
    %s1935 = scalar_lea.vmem %s2, 176
    %v1936 = vld [vmem:[%s1935] sm:$0xf]
    %v1937 = vld [vmem:[%s1935 + $0x4] sm:$0xf]
    %v1938 = vld [vmem:[%s1935 + $0x8] sm:$0xf]
    %v1939 = vld [vmem:[%s1935 + $0xc] sm:$0x1]
    %v1940 = vunpack.c.l.bf16 %v1936
    %v1941 = vunpack.c.l.bf16 %v1937
    %v1942 = vunpack.c.l.bf16 %v1938
    %v1943 = vunpack.c.l.bf16 %v1939
    %v1944 = vld [vmem:[%s1935 + $0xc] sm:$0x3]
    %v1945 = vunpack.c.l.bf16 %v1944
    %v1946 = vld [vmem:[%s1935] sm:$0xe]
    %v1947 = vunpack.c.l.bf16 %v1946
    %v1948 = vmul.f32 %v109, %v1940
    %v1949 = vmul.f32 %v109, %v1941
    %v1950 = vmul.f32 %v109, %v1942
    %v1951 = vmul.f32 %v109, %v1943
    %v1952 = vmul.f32 %v114, %v1940
    %v1953 = vmul.f32 %v114, %v1941
    %v1954 = vmul.f32 %v114, %v1942
    %v1955 = vmul.f32 %v114, %v1945
    %v1960 = vrot.slane %v1952, 1
    %v1961 = vrot.slane %v1953, 1
    %v1962 = vsel %vm123, %v1960, %v1961
    %v1963 = vrot.slane %v1954, 1
    %v1964 = vsel %vm123, %v1961, %v1963
    %v1965 = vrot.slane %v1955, 1
    %v1966 = vsel %vm123, %v1963, %v1965
    %v1971 = vadd.f32 %v1948, %v1962
    %v1972 = vadd.f32 %v1949, %v1964
    %v1973 = vadd.f32 %v1950, %v1966
    %v1974 = vadd.f32 %v1951, %v1965
    %v1975 = vmul.f32 %v139, %v1947
    %v1976 = vmul.f32 %v139, %v1941
    %v1977 = vmul.f32 %v139, %v1942
    %v1978 = vmul.f32 %v139, %v1945
    %v1983 = vrot.slane %v1975, 2
    %v1984 = vrot.slane %v1976, 2
    %v1985 = vsel %vm148, %v1983, %v1984
    %v1986 = vrot.slane %v1977, 2
    %v1987 = vsel %vm148, %v1984, %v1986
    %v1988 = vrot.slane %v1978, 2
    %v1989 = vsel %vm148, %v1986, %v1988
    %v1994 = vadd.f32 %v1971, %v1985
    %v1995 = vadd.f32 %v1972, %v1987
    %v1996 = vadd.f32 %v1973, %v1989
    %v1997 = vadd.f32 %v1974, %v1988
    %v1998 = vmul.f32 %v227, %v1940
    %v1999 = vmul.f32 %v227, %v1941
    %v2000 = vmul.f32 %v227, %v1942
    %v2001 = vmul.f32 %v227, %v1943
    %v2002 = vmul.f32 %v232, %v1940
    %v2003 = vmul.f32 %v232, %v1941
    %v2004 = vmul.f32 %v232, %v1942
    %v2005 = vmul.f32 %v232, %v1945
    %v2010 = vrot.slane %v2002, 1
    %v2011 = vrot.slane %v2003, 1
    %v2012 = vsel %vm123, %v2010, %v2011
    %v2013 = vrot.slane %v2004, 1
    %v2014 = vsel %vm123, %v2011, %v2013
    %v2015 = vrot.slane %v2005, 1
    %v2016 = vsel %vm123, %v2013, %v2015
    %v2021 = vadd.f32 %v1998, %v2012
    %v2022 = vadd.f32 %v1999, %v2014
    %v2023 = vadd.f32 %v2000, %v2016
    %v2024 = vadd.f32 %v2001, %v2015
    %v2025 = vmul.f32 %v256, %v1947
    %v2026 = vmul.f32 %v256, %v1941
    %v2027 = vmul.f32 %v256, %v1942
    %v2028 = vmul.f32 %v256, %v1945
    %v2033 = vrot.slane %v2025, 2
    %v2034 = vrot.slane %v2026, 2
    %v2035 = vsel %vm148, %v2033, %v2034
    %v2036 = vrot.slane %v2027, 2
    %v2037 = vsel %vm148, %v2034, %v2036
    %v2038 = vrot.slane %v2028, 2
    %v2039 = vsel %vm148, %v2036, %v2038
    %v2044 = vadd.f32 %v2021, %v2035
    %v2045 = vadd.f32 %v2022, %v2037
    %v2046 = vadd.f32 %v2023, %v2039
    %v2047 = vadd.f32 %v2024, %v2038
    %v2048 = vadd.f32 %v1811, %v2044
    %v2049 = vadd.f32 %v1812, %v2045
    %v2050 = vadd.f32 %v1813, %v2046
    %v2051 = vadd.f32 %v1814, %v2047
    %v2052 = vmul.f32 %v401, %v1940
    %v2053 = vmul.f32 %v401, %v1941
    %v2054 = vmul.f32 %v401, %v1942
    %v2055 = vmul.f32 %v401, %v1943
    %v2056 = vmul.f32 %v406, %v1940
    %v2057 = vmul.f32 %v406, %v1941
    %v2058 = vmul.f32 %v406, %v1942
    %v2059 = vmul.f32 %v406, %v1945
    %v2064 = vrot.slane %v2056, 1
    %v2065 = vrot.slane %v2057, 1
    %v2066 = vsel %vm123, %v2064, %v2065
    %v2067 = vrot.slane %v2058, 1
    %v2068 = vsel %vm123, %v2065, %v2067
    %v2069 = vrot.slane %v2059, 1
    %v2070 = vsel %vm123, %v2067, %v2069
    %v2075 = vadd.f32 %v2052, %v2066
    %v2076 = vadd.f32 %v2053, %v2068
    %v2077 = vadd.f32 %v2054, %v2070
    %v2078 = vadd.f32 %v2055, %v2069
    %v2079 = vmul.f32 %v430, %v1947
    %v2080 = vmul.f32 %v430, %v1941
    %v2081 = vmul.f32 %v430, %v1942
    %v2082 = vmul.f32 %v430, %v1945
    %v2087 = vrot.slane %v2079, 2
    %v2088 = vrot.slane %v2080, 2
    %v2089 = vsel %vm148, %v2087, %v2088
    %v2090 = vrot.slane %v2081, 2
    %v2091 = vsel %vm148, %v2088, %v2090
    %v2092 = vrot.slane %v2082, 2
    %v2093 = vsel %vm148, %v2090, %v2092
    %v2098 = vadd.f32 %v2075, %v2089
    %v2099 = vadd.f32 %v2076, %v2091
    %v2100 = vadd.f32 %v2077, %v2093
    %v2101 = vadd.f32 %v2078, %v2092
    %v2102 = vadd.f32 %v1865, %v2098
    %v2103 = vadd.f32 %v1866, %v2099
    %v2104 = vadd.f32 %v1867, %v2100
    %v2105 = vadd.f32 %v1868, %v2101
    %v2106 = vadd.f32 %v2102, %v458
    %v2107 = vadd.f32 %v2103, %v458
    %v2108 = vadd.f32 %v2104, %v458
    %v2109 = vadd.f32 %v2105, %v458
    %v2110 = vmax.f32 %v2106, 0.0
    %v2111 = vmax.f32 %v2107, 0.0
    %v2112 = vmax.f32 %v2108, 0.0
    %v2113 = vmax.f32 %v2109, 0.0
    %v2114 = vpack.c.bf16 %v2111, %v2110
    %v2115 = vpack.c.bf16 %v2113, %v2112
    %2116 = vst [vmem:[#allocation2 + $0x90] sm:$0xff] %v2114
    %2117 = vst [vmem:[#allocation2 + $0x98] sm:$0x1f] %v2115
    %s2118 = scalar_lea.vmem %s2, 192
    %v2119 = vld [vmem:[%s2118] sm:$0xf]
    %v2120 = vld [vmem:[%s2118 + $0x4] sm:$0xf]
    %v2121 = vld [vmem:[%s2118 + $0x8] sm:$0xf]
    %v2122 = vld [vmem:[%s2118 + $0xc] sm:$0x1]
    %v2123 = vunpack.c.l.bf16 %v2119
    %v2124 = vunpack.c.l.bf16 %v2120
    %v2125 = vunpack.c.l.bf16 %v2121
    %v2126 = vunpack.c.l.bf16 %v2122
    %v2127 = vld [vmem:[%s2118 + $0xc] sm:$0x3]
    %v2128 = vunpack.c.l.bf16 %v2127
    %v2129 = vld [vmem:[%s2118] sm:$0xe]
    %v2130 = vunpack.c.l.bf16 %v2129
    %v2131 = vmul.f32 %v109, %v2123
    %v2132 = vmul.f32 %v109, %v2124
    %v2133 = vmul.f32 %v109, %v2125
    %v2134 = vmul.f32 %v109, %v2126
    %v2135 = vmul.f32 %v114, %v2123
    %v2136 = vmul.f32 %v114, %v2124
    %v2137 = vmul.f32 %v114, %v2125
    %v2138 = vmul.f32 %v114, %v2128
    %v2143 = vrot.slane %v2135, 1
    %v2144 = vrot.slane %v2136, 1
    %v2145 = vsel %vm123, %v2143, %v2144
    %v2146 = vrot.slane %v2137, 1
    %v2147 = vsel %vm123, %v2144, %v2146
    %v2148 = vrot.slane %v2138, 1
    %v2149 = vsel %vm123, %v2146, %v2148
    %v2154 = vadd.f32 %v2131, %v2145
    %v2155 = vadd.f32 %v2132, %v2147
    %v2156 = vadd.f32 %v2133, %v2149
    %v2157 = vadd.f32 %v2134, %v2148
    %v2158 = vmul.f32 %v139, %v2130
    %v2159 = vmul.f32 %v139, %v2124
    %v2160 = vmul.f32 %v139, %v2125
    %v2161 = vmul.f32 %v139, %v2128
    %v2166 = vrot.slane %v2158, 2
    %v2167 = vrot.slane %v2159, 2
    %v2168 = vsel %vm148, %v2166, %v2167
    %v2169 = vrot.slane %v2160, 2
    %v2170 = vsel %vm148, %v2167, %v2169
    %v2171 = vrot.slane %v2161, 2
    %v2172 = vsel %vm148, %v2169, %v2171
    %v2177 = vadd.f32 %v2154, %v2168
    %v2178 = vadd.f32 %v2155, %v2170
    %v2179 = vadd.f32 %v2156, %v2172
    %v2180 = vadd.f32 %v2157, %v2171
    %v2181 = vmul.f32 %v227, %v2123
    %v2182 = vmul.f32 %v227, %v2124
    %v2183 = vmul.f32 %v227, %v2125
    %v2184 = vmul.f32 %v227, %v2126
    %v2185 = vmul.f32 %v232, %v2123
    %v2186 = vmul.f32 %v232, %v2124
    %v2187 = vmul.f32 %v232, %v2125
    %v2188 = vmul.f32 %v232, %v2128
    %v2193 = vrot.slane %v2185, 1
    %v2194 = vrot.slane %v2186, 1
    %v2195 = vsel %vm123, %v2193, %v2194
    %v2196 = vrot.slane %v2187, 1
    %v2197 = vsel %vm123, %v2194, %v2196
    %v2198 = vrot.slane %v2188, 1
    %v2199 = vsel %vm123, %v2196, %v2198
    %v2204 = vadd.f32 %v2181, %v2195
    %v2205 = vadd.f32 %v2182, %v2197
    %v2206 = vadd.f32 %v2183, %v2199
    %v2207 = vadd.f32 %v2184, %v2198
    %v2208 = vmul.f32 %v256, %v2130
    %v2209 = vmul.f32 %v256, %v2124
    %v2210 = vmul.f32 %v256, %v2125
    %v2211 = vmul.f32 %v256, %v2128
    %v2216 = vrot.slane %v2208, 2
    %v2217 = vrot.slane %v2209, 2
    %v2218 = vsel %vm148, %v2216, %v2217
    %v2219 = vrot.slane %v2210, 2
    %v2220 = vsel %vm148, %v2217, %v2219
    %v2221 = vrot.slane %v2211, 2
    %v2222 = vsel %vm148, %v2219, %v2221
    %v2227 = vadd.f32 %v2204, %v2218
    %v2228 = vadd.f32 %v2205, %v2220
    %v2229 = vadd.f32 %v2206, %v2222
    %v2230 = vadd.f32 %v2207, %v2221
    %v2231 = vadd.f32 %v1994, %v2227
    %v2232 = vadd.f32 %v1995, %v2228
    %v2233 = vadd.f32 %v1996, %v2229
    %v2234 = vadd.f32 %v1997, %v2230
    %v2235 = vmul.f32 %v401, %v2123
    %v2236 = vmul.f32 %v401, %v2124
    %v2237 = vmul.f32 %v401, %v2125
    %v2238 = vmul.f32 %v401, %v2126
    %v2239 = vmul.f32 %v406, %v2123
    %v2240 = vmul.f32 %v406, %v2124
    %v2241 = vmul.f32 %v406, %v2125
    %v2242 = vmul.f32 %v406, %v2128
    %v2247 = vrot.slane %v2239, 1
    %v2248 = vrot.slane %v2240, 1
    %v2249 = vsel %vm123, %v2247, %v2248
    %v2250 = vrot.slane %v2241, 1
    %v2251 = vsel %vm123, %v2248, %v2250
    %v2252 = vrot.slane %v2242, 1
    %v2253 = vsel %vm123, %v2250, %v2252
    %v2258 = vadd.f32 %v2235, %v2249
    %v2259 = vadd.f32 %v2236, %v2251
    %v2260 = vadd.f32 %v2237, %v2253
    %v2261 = vadd.f32 %v2238, %v2252
    %v2262 = vmul.f32 %v430, %v2130
    %v2263 = vmul.f32 %v430, %v2124
    %v2264 = vmul.f32 %v430, %v2125
    %v2265 = vmul.f32 %v430, %v2128
    %v2270 = vrot.slane %v2262, 2
    %v2271 = vrot.slane %v2263, 2
    %v2272 = vsel %vm148, %v2270, %v2271
    %v2273 = vrot.slane %v2264, 2
    %v2274 = vsel %vm148, %v2271, %v2273
    %v2275 = vrot.slane %v2265, 2
    %v2276 = vsel %vm148, %v2273, %v2275
    %v2281 = vadd.f32 %v2258, %v2272
    %v2282 = vadd.f32 %v2259, %v2274
    %v2283 = vadd.f32 %v2260, %v2276
    %v2284 = vadd.f32 %v2261, %v2275
    %v2285 = vadd.f32 %v2048, %v2281
    %v2286 = vadd.f32 %v2049, %v2282
    %v2287 = vadd.f32 %v2050, %v2283
    %v2288 = vadd.f32 %v2051, %v2284
    %v2289 = vadd.f32 %v2285, %v458
    %v2290 = vadd.f32 %v2286, %v458
    %v2291 = vadd.f32 %v2287, %v458
    %v2292 = vadd.f32 %v2288, %v458
    %v2293 = vmax.f32 %v2289, 0.0
    %v2294 = vmax.f32 %v2290, 0.0
    %v2295 = vmax.f32 %v2291, 0.0
    %v2296 = vmax.f32 %v2292, 0.0
    %v2297 = vpack.c.bf16 %v2294, %v2293
    %v2298 = vpack.c.bf16 %v2296, %v2295
    %2299 = vst [vmem:[#allocation2 + $0xa0] sm:$0xff] %v2297
    %2300 = vst [vmem:[#allocation2 + $0xa8] sm:$0x1f] %v2298
    %s2301 = scalar_lea.vmem %s2, 208
    %v2302 = vld [vmem:[%s2301] sm:$0xf]
    %v2303 = vld [vmem:[%s2301 + $0x4] sm:$0xf]
    %v2304 = vld [vmem:[%s2301 + $0x8] sm:$0xf]
    %v2305 = vld [vmem:[%s2301 + $0xc] sm:$0x1]
    %v2306 = vunpack.c.l.bf16 %v2302
    %v2307 = vunpack.c.l.bf16 %v2303
    %v2308 = vunpack.c.l.bf16 %v2304
    %v2309 = vunpack.c.l.bf16 %v2305
    %v2310 = vld [vmem:[%s2301 + $0xc] sm:$0x3]
    %v2311 = vunpack.c.l.bf16 %v2310
    %v2312 = vld [vmem:[%s2301] sm:$0xe]
    %v2313 = vunpack.c.l.bf16 %v2312
    %v2314 = vmul.f32 %v109, %v2306
    %v2315 = vmul.f32 %v109, %v2307
    %v2316 = vmul.f32 %v109, %v2308
    %v2317 = vmul.f32 %v109, %v2309
    %v2318 = vmul.f32 %v114, %v2306
    %v2319 = vmul.f32 %v114, %v2307
    %v2320 = vmul.f32 %v114, %v2308
    %v2321 = vmul.f32 %v114, %v2311
    %v2326 = vrot.slane %v2318, 1
    %v2327 = vrot.slane %v2319, 1
    %v2328 = vsel %vm123, %v2326, %v2327
    %v2329 = vrot.slane %v2320, 1
    %v2330 = vsel %vm123, %v2327, %v2329
    %v2331 = vrot.slane %v2321, 1
    %v2332 = vsel %vm123, %v2329, %v2331
    %v2337 = vadd.f32 %v2314, %v2328
    %v2338 = vadd.f32 %v2315, %v2330
    %v2339 = vadd.f32 %v2316, %v2332
    %v2340 = vadd.f32 %v2317, %v2331
    %v2341 = vmul.f32 %v139, %v2313
    %v2342 = vmul.f32 %v139, %v2307
    %v2343 = vmul.f32 %v139, %v2308
    %v2344 = vmul.f32 %v139, %v2311
    %v2349 = vrot.slane %v2341, 2
    %v2350 = vrot.slane %v2342, 2
    %v2351 = vsel %vm148, %v2349, %v2350
    %v2352 = vrot.slane %v2343, 2
    %v2353 = vsel %vm148, %v2350, %v2352
    %v2354 = vrot.slane %v2344, 2
    %v2355 = vsel %vm148, %v2352, %v2354
    %v2360 = vadd.f32 %v2337, %v2351
    %v2361 = vadd.f32 %v2338, %v2353
    %v2362 = vadd.f32 %v2339, %v2355
    %v2363 = vadd.f32 %v2340, %v2354
    %v2364 = vmul.f32 %v227, %v2306
    %v2365 = vmul.f32 %v227, %v2307
    %v2366 = vmul.f32 %v227, %v2308
    %v2367 = vmul.f32 %v227, %v2309
    %v2368 = vmul.f32 %v232, %v2306
    %v2369 = vmul.f32 %v232, %v2307
    %v2370 = vmul.f32 %v232, %v2308
    %v2371 = vmul.f32 %v232, %v2311
    %v2376 = vrot.slane %v2368, 1
    %v2377 = vrot.slane %v2369, 1
    %v2378 = vsel %vm123, %v2376, %v2377
    %v2379 = vrot.slane %v2370, 1
    %v2380 = vsel %vm123, %v2377, %v2379
    %v2381 = vrot.slane %v2371, 1
    %v2382 = vsel %vm123, %v2379, %v2381
    %v2387 = vadd.f32 %v2364, %v2378
    %v2388 = vadd.f32 %v2365, %v2380
    %v2389 = vadd.f32 %v2366, %v2382
    %v2390 = vadd.f32 %v2367, %v2381
    %v2391 = vmul.f32 %v256, %v2313
    %v2392 = vmul.f32 %v256, %v2307
    %v2393 = vmul.f32 %v256, %v2308
    %v2394 = vmul.f32 %v256, %v2311
    %v2399 = vrot.slane %v2391, 2
    %v2400 = vrot.slane %v2392, 2
    %v2401 = vsel %vm148, %v2399, %v2400
    %v2402 = vrot.slane %v2393, 2
    %v2403 = vsel %vm148, %v2400, %v2402
    %v2404 = vrot.slane %v2394, 2
    %v2405 = vsel %vm148, %v2402, %v2404
    %v2410 = vadd.f32 %v2387, %v2401
    %v2411 = vadd.f32 %v2388, %v2403
    %v2412 = vadd.f32 %v2389, %v2405
    %v2413 = vadd.f32 %v2390, %v2404
    %v2414 = vadd.f32 %v2177, %v2410
    %v2415 = vadd.f32 %v2178, %v2411
    %v2416 = vadd.f32 %v2179, %v2412
    %v2417 = vadd.f32 %v2180, %v2413
    %v2418 = vmul.f32 %v401, %v2306
    %v2419 = vmul.f32 %v401, %v2307
    %v2420 = vmul.f32 %v401, %v2308
    %v2421 = vmul.f32 %v401, %v2309
    %v2422 = vmul.f32 %v406, %v2306
    %v2423 = vmul.f32 %v406, %v2307
    %v2424 = vmul.f32 %v406, %v2308
    %v2425 = vmul.f32 %v406, %v2311
    %v2430 = vrot.slane %v2422, 1
    %v2431 = vrot.slane %v2423, 1
    %v2432 = vsel %vm123, %v2430, %v2431
    %v2433 = vrot.slane %v2424, 1
    %v2434 = vsel %vm123, %v2431, %v2433
    %v2435 = vrot.slane %v2425, 1
    %v2436 = vsel %vm123, %v2433, %v2435
    %v2441 = vadd.f32 %v2418, %v2432
    %v2442 = vadd.f32 %v2419, %v2434
    %v2443 = vadd.f32 %v2420, %v2436
    %v2444 = vadd.f32 %v2421, %v2435
    %v2445 = vmul.f32 %v430, %v2313
    %v2446 = vmul.f32 %v430, %v2307
    %v2447 = vmul.f32 %v430, %v2308
    %v2448 = vmul.f32 %v430, %v2311
    %v2453 = vrot.slane %v2445, 2
    %v2454 = vrot.slane %v2446, 2
    %v2455 = vsel %vm148, %v2453, %v2454
    %v2456 = vrot.slane %v2447, 2
    %v2457 = vsel %vm148, %v2454, %v2456
    %v2458 = vrot.slane %v2448, 2
    %v2459 = vsel %vm148, %v2456, %v2458
    %v2464 = vadd.f32 %v2441, %v2455
    %v2465 = vadd.f32 %v2442, %v2457
    %v2466 = vadd.f32 %v2443, %v2459
    %v2467 = vadd.f32 %v2444, %v2458
    %v2468 = vadd.f32 %v2231, %v2464
    %v2469 = vadd.f32 %v2232, %v2465
    %v2470 = vadd.f32 %v2233, %v2466
    %v2471 = vadd.f32 %v2234, %v2467
    %v2472 = vadd.f32 %v2468, %v458
    %v2473 = vadd.f32 %v2469, %v458
    %v2474 = vadd.f32 %v2470, %v458
    %v2475 = vadd.f32 %v2471, %v458
    %v2476 = vmax.f32 %v2472, 0.0
    %v2477 = vmax.f32 %v2473, 0.0
    %v2478 = vmax.f32 %v2474, 0.0
    %v2479 = vmax.f32 %v2475, 0.0
    %v2480 = vpack.c.bf16 %v2477, %v2476
    %v2481 = vpack.c.bf16 %v2479, %v2478
    %2482 = vst [vmem:[#allocation2 + $0xb0] sm:$0xff] %v2480
    %2483 = vst [vmem:[#allocation2 + $0xb8] sm:$0x1f] %v2481
    %s2484 = scalar_lea.vmem %s2, 224
    %v2485 = vld [vmem:[%s2484] sm:$0xf]
    %v2486 = vld [vmem:[%s2484 + $0x4] sm:$0xf]
    %v2487 = vld [vmem:[%s2484 + $0x8] sm:$0xf]
    %v2488 = vld [vmem:[%s2484 + $0xc] sm:$0x1]
    %v2489 = vunpack.c.l.bf16 %v2485
    %v2490 = vunpack.c.l.bf16 %v2486
    %v2491 = vunpack.c.l.bf16 %v2487
    %v2492 = vunpack.c.l.bf16 %v2488
    %v2493 = vld [vmem:[%s2484 + $0xc] sm:$0x3]
    %v2494 = vunpack.c.l.bf16 %v2493
    %v2495 = vld [vmem:[%s2484] sm:$0xe]
    %v2496 = vunpack.c.l.bf16 %v2495
    %v2497 = vmul.f32 %v109, %v2489
    %v2498 = vmul.f32 %v109, %v2490
    %v2499 = vmul.f32 %v109, %v2491
    %v2500 = vmul.f32 %v109, %v2492
    %v2501 = vmul.f32 %v114, %v2489
    %v2502 = vmul.f32 %v114, %v2490
    %v2503 = vmul.f32 %v114, %v2491
    %v2504 = vmul.f32 %v114, %v2494
    %v2509 = vrot.slane %v2501, 1
    %v2510 = vrot.slane %v2502, 1
    %v2511 = vsel %vm123, %v2509, %v2510
    %v2512 = vrot.slane %v2503, 1
    %v2513 = vsel %vm123, %v2510, %v2512
    %v2514 = vrot.slane %v2504, 1
    %v2515 = vsel %vm123, %v2512, %v2514
    %v2520 = vadd.f32 %v2497, %v2511
    %v2521 = vadd.f32 %v2498, %v2513
    %v2522 = vadd.f32 %v2499, %v2515
    %v2523 = vadd.f32 %v2500, %v2514
    %v2524 = vmul.f32 %v139, %v2496
    %v2525 = vmul.f32 %v139, %v2490
    %v2526 = vmul.f32 %v139, %v2491
    %v2527 = vmul.f32 %v139, %v2494
    %v2532 = vrot.slane %v2524, 2
    %v2533 = vrot.slane %v2525, 2
    %v2534 = vsel %vm148, %v2532, %v2533
    %v2535 = vrot.slane %v2526, 2
    %v2536 = vsel %vm148, %v2533, %v2535
    %v2537 = vrot.slane %v2527, 2
    %v2538 = vsel %vm148, %v2535, %v2537
    %v2543 = vadd.f32 %v2520, %v2534
    %v2544 = vadd.f32 %v2521, %v2536
    %v2545 = vadd.f32 %v2522, %v2538
    %v2546 = vadd.f32 %v2523, %v2537
    %v2547 = vmul.f32 %v227, %v2489
    %v2548 = vmul.f32 %v227, %v2490
    %v2549 = vmul.f32 %v227, %v2491
    %v2550 = vmul.f32 %v227, %v2492
    %v2551 = vmul.f32 %v232, %v2489
    %v2552 = vmul.f32 %v232, %v2490
    %v2553 = vmul.f32 %v232, %v2491
    %v2554 = vmul.f32 %v232, %v2494
    %v2559 = vrot.slane %v2551, 1
    %v2560 = vrot.slane %v2552, 1
    %v2561 = vsel %vm123, %v2559, %v2560
    %v2562 = vrot.slane %v2553, 1
    %v2563 = vsel %vm123, %v2560, %v2562
    %v2564 = vrot.slane %v2554, 1
    %v2565 = vsel %vm123, %v2562, %v2564
    %v2570 = vadd.f32 %v2547, %v2561
    %v2571 = vadd.f32 %v2548, %v2563
    %v2572 = vadd.f32 %v2549, %v2565
    %v2573 = vadd.f32 %v2550, %v2564
    %v2574 = vmul.f32 %v256, %v2496
    %v2575 = vmul.f32 %v256, %v2490
    %v2576 = vmul.f32 %v256, %v2491
    %v2577 = vmul.f32 %v256, %v2494
    %v2582 = vrot.slane %v2574, 2
    %v2583 = vrot.slane %v2575, 2
    %v2584 = vsel %vm148, %v2582, %v2583
    %v2585 = vrot.slane %v2576, 2
    %v2586 = vsel %vm148, %v2583, %v2585
    %v2587 = vrot.slane %v2577, 2
    %v2588 = vsel %vm148, %v2585, %v2587
    %v2593 = vadd.f32 %v2570, %v2584
    %v2594 = vadd.f32 %v2571, %v2586
    %v2595 = vadd.f32 %v2572, %v2588
    %v2596 = vadd.f32 %v2573, %v2587
    %v2597 = vadd.f32 %v2360, %v2593
    %v2598 = vadd.f32 %v2361, %v2594
    %v2599 = vadd.f32 %v2362, %v2595
    %v2600 = vadd.f32 %v2363, %v2596
    %v2601 = vmul.f32 %v401, %v2489
    %v2602 = vmul.f32 %v401, %v2490
    %v2603 = vmul.f32 %v401, %v2491
    %v2604 = vmul.f32 %v401, %v2492
    %v2605 = vmul.f32 %v406, %v2489
    %v2606 = vmul.f32 %v406, %v2490
    %v2607 = vmul.f32 %v406, %v2491
    %v2608 = vmul.f32 %v406, %v2494
    %v2613 = vrot.slane %v2605, 1
    %v2614 = vrot.slane %v2606, 1
    %v2615 = vsel %vm123, %v2613, %v2614
    %v2616 = vrot.slane %v2607, 1
    %v2617 = vsel %vm123, %v2614, %v2616
    %v2618 = vrot.slane %v2608, 1
    %v2619 = vsel %vm123, %v2616, %v2618
    %v2624 = vadd.f32 %v2601, %v2615
    %v2625 = vadd.f32 %v2602, %v2617
    %v2626 = vadd.f32 %v2603, %v2619
    %v2627 = vadd.f32 %v2604, %v2618
    %v2628 = vmul.f32 %v430, %v2496
    %v2629 = vmul.f32 %v430, %v2490
    %v2630 = vmul.f32 %v430, %v2491
    %v2631 = vmul.f32 %v430, %v2494
    %v2636 = vrot.slane %v2628, 2
    %v2637 = vrot.slane %v2629, 2
    %v2638 = vsel %vm148, %v2636, %v2637
    %v2639 = vrot.slane %v2630, 2
    %v2640 = vsel %vm148, %v2637, %v2639
    %v2641 = vrot.slane %v2631, 2
    %v2642 = vsel %vm148, %v2639, %v2641
    %v2647 = vadd.f32 %v2624, %v2638
    %v2648 = vadd.f32 %v2625, %v2640
    %v2649 = vadd.f32 %v2626, %v2642
    %v2650 = vadd.f32 %v2627, %v2641
    %v2651 = vadd.f32 %v2414, %v2647
    %v2652 = vadd.f32 %v2415, %v2648
    %v2653 = vadd.f32 %v2416, %v2649
    %v2654 = vadd.f32 %v2417, %v2650
    %v2655 = vadd.f32 %v2651, %v458
    %v2656 = vadd.f32 %v2652, %v458
    %v2657 = vadd.f32 %v2653, %v458
    %v2658 = vadd.f32 %v2654, %v458
    %v2659 = vmax.f32 %v2655, 0.0
    %v2660 = vmax.f32 %v2656, 0.0
    %v2661 = vmax.f32 %v2657, 0.0
    %v2662 = vmax.f32 %v2658, 0.0
    %v2663 = vpack.c.bf16 %v2660, %v2659
    %v2664 = vpack.c.bf16 %v2662, %v2661
    %2665 = vst [vmem:[#allocation2 + $0xc0] sm:$0xff] %v2663
    %2666 = vst [vmem:[#allocation2 + $0xc8] sm:$0x1f] %v2664
    %s2667 = scalar_lea.vmem %s2, 240
    %v2668 = vld [vmem:[%s2667] sm:$0xf]
    %v2669 = vld [vmem:[%s2667 + $0x4] sm:$0xf]
    %v2670 = vld [vmem:[%s2667 + $0x8] sm:$0xf]
    %v2671 = vld [vmem:[%s2667 + $0xc] sm:$0x1]
    %v2672 = vunpack.c.l.bf16 %v2668
    %v2673 = vunpack.c.l.bf16 %v2669
    %v2674 = vunpack.c.l.bf16 %v2670
    %v2675 = vunpack.c.l.bf16 %v2671
    %v2676 = vld [vmem:[%s2667 + $0xc] sm:$0x3]
    %v2677 = vunpack.c.l.bf16 %v2676
    %v2678 = vld [vmem:[%s2667] sm:$0xe]
    %v2679 = vunpack.c.l.bf16 %v2678
    %v2680 = vmul.f32 %v109, %v2672
    %v2681 = vmul.f32 %v109, %v2673
    %v2682 = vmul.f32 %v109, %v2674
    %v2683 = vmul.f32 %v109, %v2675
    %v2684 = vmul.f32 %v114, %v2672
    %v2685 = vmul.f32 %v114, %v2673
    %v2686 = vmul.f32 %v114, %v2674
    %v2687 = vmul.f32 %v114, %v2677
    %v2692 = vrot.slane %v2684, 1
    %v2693 = vrot.slane %v2685, 1
    %v2694 = vsel %vm123, %v2692, %v2693
    %v2695 = vrot.slane %v2686, 1
    %v2696 = vsel %vm123, %v2693, %v2695
    %v2697 = vrot.slane %v2687, 1
    %v2698 = vsel %vm123, %v2695, %v2697
    %v2703 = vadd.f32 %v2680, %v2694
    %v2704 = vadd.f32 %v2681, %v2696
    %v2705 = vadd.f32 %v2682, %v2698
    %v2706 = vadd.f32 %v2683, %v2697
    %v2707 = vmul.f32 %v139, %v2679
    %v2708 = vmul.f32 %v139, %v2673
    %v2709 = vmul.f32 %v139, %v2674
    %v2710 = vmul.f32 %v139, %v2677
    %v2715 = vrot.slane %v2707, 2
    %v2716 = vrot.slane %v2708, 2
    %v2717 = vsel %vm148, %v2715, %v2716
    %v2718 = vrot.slane %v2709, 2
    %v2719 = vsel %vm148, %v2716, %v2718
    %v2720 = vrot.slane %v2710, 2
    %v2721 = vsel %vm148, %v2718, %v2720
    %v2726 = vadd.f32 %v2703, %v2717
    %v2727 = vadd.f32 %v2704, %v2719
    %v2728 = vadd.f32 %v2705, %v2721
    %v2729 = vadd.f32 %v2706, %v2720
    %v2730 = vmul.f32 %v227, %v2672
    %v2731 = vmul.f32 %v227, %v2673
    %v2732 = vmul.f32 %v227, %v2674
    %v2733 = vmul.f32 %v227, %v2675
    %v2734 = vmul.f32 %v232, %v2672
    %v2735 = vmul.f32 %v232, %v2673
    %v2736 = vmul.f32 %v232, %v2674
    %v2737 = vmul.f32 %v232, %v2677
    %v2742 = vrot.slane %v2734, 1
    %v2743 = vrot.slane %v2735, 1
    %v2744 = vsel %vm123, %v2742, %v2743
    %v2745 = vrot.slane %v2736, 1
    %v2746 = vsel %vm123, %v2743, %v2745
    %v2747 = vrot.slane %v2737, 1
    %v2748 = vsel %vm123, %v2745, %v2747
    %v2753 = vadd.f32 %v2730, %v2744
    %v2754 = vadd.f32 %v2731, %v2746
    %v2755 = vadd.f32 %v2732, %v2748
    %v2756 = vadd.f32 %v2733, %v2747
    %v2757 = vmul.f32 %v256, %v2679
    %v2758 = vmul.f32 %v256, %v2673
    %v2759 = vmul.f32 %v256, %v2674
    %v2760 = vmul.f32 %v256, %v2677
    %v2765 = vrot.slane %v2757, 2
    %v2766 = vrot.slane %v2758, 2
    %v2767 = vsel %vm148, %v2765, %v2766
    %v2768 = vrot.slane %v2759, 2
    %v2769 = vsel %vm148, %v2766, %v2768
    %v2770 = vrot.slane %v2760, 2
    %v2771 = vsel %vm148, %v2768, %v2770
    %v2776 = vadd.f32 %v2753, %v2767
    %v2777 = vadd.f32 %v2754, %v2769
    %v2778 = vadd.f32 %v2755, %v2771
    %v2779 = vadd.f32 %v2756, %v2770
    %v2780 = vadd.f32 %v2543, %v2776
    %v2781 = vadd.f32 %v2544, %v2777
    %v2782 = vadd.f32 %v2545, %v2778
    %v2783 = vadd.f32 %v2546, %v2779
    %v2784 = vmul.f32 %v401, %v2672
    %v2785 = vmul.f32 %v401, %v2673
    %v2786 = vmul.f32 %v401, %v2674
    %v2787 = vmul.f32 %v401, %v2675
    %v2788 = vmul.f32 %v406, %v2672
    %v2789 = vmul.f32 %v406, %v2673
    %v2790 = vmul.f32 %v406, %v2674
    %v2791 = vmul.f32 %v406, %v2677
    %v2796 = vrot.slane %v2788, 1
    %v2797 = vrot.slane %v2789, 1
    %v2798 = vsel %vm123, %v2796, %v2797
    %v2799 = vrot.slane %v2790, 1
    %v2800 = vsel %vm123, %v2797, %v2799
    %v2801 = vrot.slane %v2791, 1
    %v2802 = vsel %vm123, %v2799, %v2801
    %v2807 = vadd.f32 %v2784, %v2798
    %v2808 = vadd.f32 %v2785, %v2800
    %v2809 = vadd.f32 %v2786, %v2802
    %v2810 = vadd.f32 %v2787, %v2801
    %v2811 = vmul.f32 %v430, %v2679
    %v2812 = vmul.f32 %v430, %v2673
    %v2813 = vmul.f32 %v430, %v2674
    %v2814 = vmul.f32 %v430, %v2677
    %v2819 = vrot.slane %v2811, 2
    %v2820 = vrot.slane %v2812, 2
    %v2821 = vsel %vm148, %v2819, %v2820
    %v2822 = vrot.slane %v2813, 2
    %v2823 = vsel %vm148, %v2820, %v2822
    %v2824 = vrot.slane %v2814, 2
    %v2825 = vsel %vm148, %v2822, %v2824
    %v2830 = vadd.f32 %v2807, %v2821
    %v2831 = vadd.f32 %v2808, %v2823
    %v2832 = vadd.f32 %v2809, %v2825
    %v2833 = vadd.f32 %v2810, %v2824
    %v2834 = vadd.f32 %v2597, %v2830
    %v2835 = vadd.f32 %v2598, %v2831
    %v2836 = vadd.f32 %v2599, %v2832
    %v2837 = vadd.f32 %v2600, %v2833
    %v2838 = vadd.f32 %v2834, %v458
    %v2839 = vadd.f32 %v2835, %v458
    %v2840 = vadd.f32 %v2836, %v458
    %v2841 = vadd.f32 %v2837, %v458
    %v2842 = vmax.f32 %v2838, 0.0
    %v2843 = vmax.f32 %v2839, 0.0
    %v2844 = vmax.f32 %v2840, 0.0
    %v2845 = vmax.f32 %v2841, 0.0
    %v2846 = vpack.c.bf16 %v2843, %v2842
    %v2847 = vpack.c.bf16 %v2845, %v2844
    %2848 = vst [vmem:[#allocation2 + $0xd0] sm:$0xff] %v2846
    %2849 = vst [vmem:[#allocation2 + $0xd8] sm:$0x1f] %v2847
    %s2850 = scalar_lea.vmem %s2, 256
    %v2851 = vld [vmem:[%s2850] sm:$0xf]
    %v2852 = vld [vmem:[%s2850 + $0x4] sm:$0xf]
    %v2853 = vld [vmem:[%s2850 + $0x8] sm:$0xf]
    %v2854 = vld [vmem:[%s2850 + $0xc] sm:$0x1]
    %v2855 = vunpack.c.l.bf16 %v2851
    %v2856 = vunpack.c.l.bf16 %v2852
    %v2857 = vunpack.c.l.bf16 %v2853
    %v2858 = vunpack.c.l.bf16 %v2854
    %v2859 = vld [vmem:[%s2850 + $0xc] sm:$0x3]
    %v2860 = vunpack.c.l.bf16 %v2859
    %v2861 = vld [vmem:[%s2850] sm:$0xe]
    %v2862 = vunpack.c.l.bf16 %v2861
    %v2863 = vmul.f32 %v109, %v2855
    %v2864 = vmul.f32 %v109, %v2856
    %v2865 = vmul.f32 %v109, %v2857
    %v2866 = vmul.f32 %v109, %v2858
    %v2867 = vmul.f32 %v114, %v2855
    %v2868 = vmul.f32 %v114, %v2856
    %v2869 = vmul.f32 %v114, %v2857
    %v2870 = vmul.f32 %v114, %v2860
    %v2875 = vrot.slane %v2867, 1
    %v2876 = vrot.slane %v2868, 1
    %v2877 = vsel %vm123, %v2875, %v2876
    %v2878 = vrot.slane %v2869, 1
    %v2879 = vsel %vm123, %v2876, %v2878
    %v2880 = vrot.slane %v2870, 1
    %v2881 = vsel %vm123, %v2878, %v2880
    %v2886 = vadd.f32 %v2863, %v2877
    %v2887 = vadd.f32 %v2864, %v2879
    %v2888 = vadd.f32 %v2865, %v2881
    %v2889 = vadd.f32 %v2866, %v2880
    %v2890 = vmul.f32 %v139, %v2862
    %v2891 = vmul.f32 %v139, %v2856
    %v2892 = vmul.f32 %v139, %v2857
    %v2893 = vmul.f32 %v139, %v2860
    %v2898 = vrot.slane %v2890, 2
    %v2899 = vrot.slane %v2891, 2
    %v2900 = vsel %vm148, %v2898, %v2899
    %v2901 = vrot.slane %v2892, 2
    %v2902 = vsel %vm148, %v2899, %v2901
    %v2903 = vrot.slane %v2893, 2
    %v2904 = vsel %vm148, %v2901, %v2903
    %v2909 = vadd.f32 %v2886, %v2900
    %v2910 = vadd.f32 %v2887, %v2902
    %v2911 = vadd.f32 %v2888, %v2904
    %v2912 = vadd.f32 %v2889, %v2903
    %v2913 = vmul.f32 %v227, %v2855
    %v2914 = vmul.f32 %v227, %v2856
    %v2915 = vmul.f32 %v227, %v2857
    %v2916 = vmul.f32 %v227, %v2858
    %v2917 = vmul.f32 %v232, %v2855
    %v2918 = vmul.f32 %v232, %v2856
    %v2919 = vmul.f32 %v232, %v2857
    %v2920 = vmul.f32 %v232, %v2860
    %v2925 = vrot.slane %v2917, 1
    %v2926 = vrot.slane %v2918, 1
    %v2927 = vsel %vm123, %v2925, %v2926
    %v2928 = vrot.slane %v2919, 1
    %v2929 = vsel %vm123, %v2926, %v2928
    %v2930 = vrot.slane %v2920, 1
    %v2931 = vsel %vm123, %v2928, %v2930
    %v2936 = vadd.f32 %v2913, %v2927
    %v2937 = vadd.f32 %v2914, %v2929
    %v2938 = vadd.f32 %v2915, %v2931
    %v2939 = vadd.f32 %v2916, %v2930
    %v2940 = vmul.f32 %v256, %v2862
    %v2941 = vmul.f32 %v256, %v2856
    %v2942 = vmul.f32 %v256, %v2857
    %v2943 = vmul.f32 %v256, %v2860
    %v2948 = vrot.slane %v2940, 2
    %v2949 = vrot.slane %v2941, 2
    %v2950 = vsel %vm148, %v2948, %v2949
    %v2951 = vrot.slane %v2942, 2
    %v2952 = vsel %vm148, %v2949, %v2951
    %v2953 = vrot.slane %v2943, 2
    %v2954 = vsel %vm148, %v2951, %v2953
    %v2959 = vadd.f32 %v2936, %v2950
    %v2960 = vadd.f32 %v2937, %v2952
    %v2961 = vadd.f32 %v2938, %v2954
    %v2962 = vadd.f32 %v2939, %v2953
    %v2963 = vadd.f32 %v2726, %v2959
    %v2964 = vadd.f32 %v2727, %v2960
    %v2965 = vadd.f32 %v2728, %v2961
    %v2966 = vadd.f32 %v2729, %v2962
    %v2967 = vmul.f32 %v401, %v2855
    %v2968 = vmul.f32 %v401, %v2856
    %v2969 = vmul.f32 %v401, %v2857
    %v2970 = vmul.f32 %v401, %v2858
    %v2971 = vmul.f32 %v406, %v2855
    %v2972 = vmul.f32 %v406, %v2856
    %v2973 = vmul.f32 %v406, %v2857
    %v2974 = vmul.f32 %v406, %v2860
    %v2979 = vrot.slane %v2971, 1
    %v2980 = vrot.slane %v2972, 1
    %v2981 = vsel %vm123, %v2979, %v2980
    %v2982 = vrot.slane %v2973, 1
    %v2983 = vsel %vm123, %v2980, %v2982
    %v2984 = vrot.slane %v2974, 1
    %v2985 = vsel %vm123, %v2982, %v2984
    %v2990 = vadd.f32 %v2967, %v2981
    %v2991 = vadd.f32 %v2968, %v2983
    %v2992 = vadd.f32 %v2969, %v2985
    %v2993 = vadd.f32 %v2970, %v2984
    %v2994 = vmul.f32 %v430, %v2862
    %v2995 = vmul.f32 %v430, %v2856
    %v2996 = vmul.f32 %v430, %v2857
    %v2997 = vmul.f32 %v430, %v2860
    %v3002 = vrot.slane %v2994, 2
    %v3003 = vrot.slane %v2995, 2
    %v3004 = vsel %vm148, %v3002, %v3003
    %v3005 = vrot.slane %v2996, 2
    %v3006 = vsel %vm148, %v3003, %v3005
    %v3007 = vrot.slane %v2997, 2
    %v3008 = vsel %vm148, %v3005, %v3007
    %v3013 = vadd.f32 %v2990, %v3004
    %v3014 = vadd.f32 %v2991, %v3006
    %v3015 = vadd.f32 %v2992, %v3008
    %v3016 = vadd.f32 %v2993, %v3007
    %v3017 = vadd.f32 %v2780, %v3013
    %v3018 = vadd.f32 %v2781, %v3014
    %v3019 = vadd.f32 %v2782, %v3015
    %v3020 = vadd.f32 %v2783, %v3016
    %v3021 = vadd.f32 %v3017, %v458
    %v3022 = vadd.f32 %v3018, %v458
    %v3023 = vadd.f32 %v3019, %v458
    %v3024 = vadd.f32 %v3020, %v458
    %v3025 = vmax.f32 %v3021, 0.0
    %v3026 = vmax.f32 %v3022, 0.0
    %v3027 = vmax.f32 %v3023, 0.0
    %v3028 = vmax.f32 %v3024, 0.0
    %v3029 = vpack.c.bf16 %v3026, %v3025
    %v3030 = vpack.c.bf16 %v3028, %v3027
    %3031 = vst [vmem:[#allocation2 + $0xe0] sm:$0xff] %v3029
    %3032 = vst [vmem:[#allocation2 + $0xe8] sm:$0x1f] %v3030
    %s3033 = scalar_lea.vmem %s2, 272
    %v3034 = vld [vmem:[%s3033] sm:$0xf]
    %v3035 = vld [vmem:[%s3033 + $0x4] sm:$0xf]
    %v3036 = vld [vmem:[%s3033 + $0x8] sm:$0xf]
    %v3037 = vld [vmem:[%s3033 + $0xc] sm:$0x1]
    %v3038 = vunpack.c.l.bf16 %v3034
    %v3039 = vunpack.c.l.bf16 %v3035
    %v3040 = vunpack.c.l.bf16 %v3036
    %v3041 = vunpack.c.l.bf16 %v3037
    %v3042 = vld [vmem:[%s3033 + $0xc] sm:$0x3]
    %v3043 = vunpack.c.l.bf16 %v3042
    %v3044 = vld [vmem:[%s3033] sm:$0xe]
    %v3045 = vunpack.c.l.bf16 %v3044
    %v3046 = vmul.f32 %v109, %v3038
    %v3047 = vmul.f32 %v109, %v3039
    %v3048 = vmul.f32 %v109, %v3040
    %v3049 = vmul.f32 %v109, %v3041
    %v3050 = vmul.f32 %v114, %v3038
    %v3051 = vmul.f32 %v114, %v3039
    %v3052 = vmul.f32 %v114, %v3040
    %v3053 = vmul.f32 %v114, %v3043
    %v3058 = vrot.slane %v3050, 1
    %v3059 = vrot.slane %v3051, 1
    %v3060 = vsel %vm123, %v3058, %v3059
    %v3061 = vrot.slane %v3052, 1
    %v3062 = vsel %vm123, %v3059, %v3061
    %v3063 = vrot.slane %v3053, 1
    %v3064 = vsel %vm123, %v3061, %v3063
    %v3069 = vadd.f32 %v3046, %v3060
    %v3070 = vadd.f32 %v3047, %v3062
    %v3071 = vadd.f32 %v3048, %v3064
    %v3072 = vadd.f32 %v3049, %v3063
    %v3073 = vmul.f32 %v139, %v3045
    %v3074 = vmul.f32 %v139, %v3039
    %v3075 = vmul.f32 %v139, %v3040
    %v3076 = vmul.f32 %v139, %v3043
    %v3081 = vrot.slane %v3073, 2
    %v3082 = vrot.slane %v3074, 2
    %v3083 = vsel %vm148, %v3081, %v3082
    %v3084 = vrot.slane %v3075, 2
    %v3085 = vsel %vm148, %v3082, %v3084
    %v3086 = vrot.slane %v3076, 2
    %v3087 = vsel %vm148, %v3084, %v3086
    %v3092 = vadd.f32 %v3069, %v3083
    %v3093 = vadd.f32 %v3070, %v3085
    %v3094 = vadd.f32 %v3071, %v3087
    %v3095 = vadd.f32 %v3072, %v3086
    %v3096 = vmul.f32 %v227, %v3038
    %v3097 = vmul.f32 %v227, %v3039
    %v3098 = vmul.f32 %v227, %v3040
    %v3099 = vmul.f32 %v227, %v3041
    %v3100 = vmul.f32 %v232, %v3038
    %v3101 = vmul.f32 %v232, %v3039
    %v3102 = vmul.f32 %v232, %v3040
    %v3103 = vmul.f32 %v232, %v3043
    %v3108 = vrot.slane %v3100, 1
    %v3109 = vrot.slane %v3101, 1
    %v3110 = vsel %vm123, %v3108, %v3109
    %v3111 = vrot.slane %v3102, 1
    %v3112 = vsel %vm123, %v3109, %v3111
    %v3113 = vrot.slane %v3103, 1
    %v3114 = vsel %vm123, %v3111, %v3113
    %v3119 = vadd.f32 %v3096, %v3110
    %v3120 = vadd.f32 %v3097, %v3112
    %v3121 = vadd.f32 %v3098, %v3114
    %v3122 = vadd.f32 %v3099, %v3113
    %v3123 = vmul.f32 %v256, %v3045
    %v3124 = vmul.f32 %v256, %v3039
    %v3125 = vmul.f32 %v256, %v3040
    %v3126 = vmul.f32 %v256, %v3043
    %v3131 = vrot.slane %v3123, 2
    %v3132 = vrot.slane %v3124, 2
    %v3133 = vsel %vm148, %v3131, %v3132
    %v3134 = vrot.slane %v3125, 2
    %v3135 = vsel %vm148, %v3132, %v3134
    %v3136 = vrot.slane %v3126, 2
    %v3137 = vsel %vm148, %v3134, %v3136
    %v3142 = vadd.f32 %v3119, %v3133
    %v3143 = vadd.f32 %v3120, %v3135
    %v3144 = vadd.f32 %v3121, %v3137
    %v3145 = vadd.f32 %v3122, %v3136
    %v3146 = vadd.f32 %v2909, %v3142
    %v3147 = vadd.f32 %v2910, %v3143
    %v3148 = vadd.f32 %v2911, %v3144
    %v3149 = vadd.f32 %v2912, %v3145
    %v3150 = vmul.f32 %v401, %v3038
    %v3151 = vmul.f32 %v401, %v3039
    %v3152 = vmul.f32 %v401, %v3040
    %v3153 = vmul.f32 %v401, %v3041
    %v3154 = vmul.f32 %v406, %v3038
    %v3155 = vmul.f32 %v406, %v3039
    %v3156 = vmul.f32 %v406, %v3040
    %v3157 = vmul.f32 %v406, %v3043
    %v3162 = vrot.slane %v3154, 1
    %v3163 = vrot.slane %v3155, 1
    %v3164 = vsel %vm123, %v3162, %v3163
    %v3165 = vrot.slane %v3156, 1
    %v3166 = vsel %vm123, %v3163, %v3165
    %v3167 = vrot.slane %v3157, 1
    %v3168 = vsel %vm123, %v3165, %v3167
    %v3173 = vadd.f32 %v3150, %v3164
    %v3174 = vadd.f32 %v3151, %v3166
    %v3175 = vadd.f32 %v3152, %v3168
    %v3176 = vadd.f32 %v3153, %v3167
    %v3177 = vmul.f32 %v430, %v3045
    %v3178 = vmul.f32 %v430, %v3039
    %v3179 = vmul.f32 %v430, %v3040
    %v3180 = vmul.f32 %v430, %v3043
    %v3185 = vrot.slane %v3177, 2
    %v3186 = vrot.slane %v3178, 2
    %v3187 = vsel %vm148, %v3185, %v3186
    %v3188 = vrot.slane %v3179, 2
    %v3189 = vsel %vm148, %v3186, %v3188
    %v3190 = vrot.slane %v3180, 2
    %v3191 = vsel %vm148, %v3188, %v3190
    %v3196 = vadd.f32 %v3173, %v3187
    %v3197 = vadd.f32 %v3174, %v3189
    %v3198 = vadd.f32 %v3175, %v3191
    %v3199 = vadd.f32 %v3176, %v3190
    %v3200 = vadd.f32 %v2963, %v3196
    %v3201 = vadd.f32 %v2964, %v3197
    %v3202 = vadd.f32 %v2965, %v3198
    %v3203 = vadd.f32 %v2966, %v3199
    %v3204 = vadd.f32 %v3200, %v458
    %v3205 = vadd.f32 %v3201, %v458
    %v3206 = vadd.f32 %v3202, %v458
    %v3207 = vadd.f32 %v3203, %v458
    %v3208 = vmax.f32 %v3204, 0.0
    %v3209 = vmax.f32 %v3205, 0.0
    %v3210 = vmax.f32 %v3206, 0.0
    %v3211 = vmax.f32 %v3207, 0.0
    %v3212 = vpack.c.bf16 %v3209, %v3208
    %v3213 = vpack.c.bf16 %v3211, %v3210
    %3214 = vst [vmem:[#allocation2 + $0xf0] sm:$0xff] %v3212
    %3215 = vst [vmem:[#allocation2 + $0xf8] sm:$0x1f] %v3213
    %s3216 = scalar_lea.vmem %s2, 288
    %v3217 = vld [vmem:[%s3216] sm:$0xf]
    %v3218 = vld [vmem:[%s3216 + $0x4] sm:$0xf]
    %v3219 = vld [vmem:[%s3216 + $0x8] sm:$0xf]
    %v3220 = vld [vmem:[%s3216 + $0xc] sm:$0x1]
    %v3221 = vunpack.c.l.bf16 %v3217
    %v3222 = vunpack.c.l.bf16 %v3218
    %v3223 = vunpack.c.l.bf16 %v3219
    %v3224 = vunpack.c.l.bf16 %v3220
    %v3225 = vld [vmem:[%s3216 + $0xc] sm:$0x3]
    %v3226 = vunpack.c.l.bf16 %v3225
    %v3227 = vld [vmem:[%s3216] sm:$0xe]
    %v3228 = vunpack.c.l.bf16 %v3227
    %v3229 = vmul.f32 %v109, %v3221
    %v3230 = vmul.f32 %v109, %v3222
    %v3231 = vmul.f32 %v109, %v3223
    %v3232 = vmul.f32 %v109, %v3224
    %v3233 = vmul.f32 %v114, %v3221
    %v3234 = vmul.f32 %v114, %v3222
    %v3235 = vmul.f32 %v114, %v3223
    %v3236 = vmul.f32 %v114, %v3226
    %v3241 = vrot.slane %v3233, 1
    %v3242 = vrot.slane %v3234, 1
    %v3243 = vsel %vm123, %v3241, %v3242
    %v3244 = vrot.slane %v3235, 1
    %v3245 = vsel %vm123, %v3242, %v3244
    %v3246 = vrot.slane %v3236, 1
    %v3247 = vsel %vm123, %v3244, %v3246
    %v3252 = vadd.f32 %v3229, %v3243
    %v3253 = vadd.f32 %v3230, %v3245
    %v3254 = vadd.f32 %v3231, %v3247
    %v3255 = vadd.f32 %v3232, %v3246
    %v3256 = vmul.f32 %v139, %v3228
    %v3257 = vmul.f32 %v139, %v3222
    %v3258 = vmul.f32 %v139, %v3223
    %v3259 = vmul.f32 %v139, %v3226
    %v3264 = vrot.slane %v3256, 2
    %v3265 = vrot.slane %v3257, 2
    %v3266 = vsel %vm148, %v3264, %v3265
    %v3267 = vrot.slane %v3258, 2
    %v3268 = vsel %vm148, %v3265, %v3267
    %v3269 = vrot.slane %v3259, 2
    %v3270 = vsel %vm148, %v3267, %v3269
    %v3275 = vadd.f32 %v3252, %v3266
    %v3276 = vadd.f32 %v3253, %v3268
    %v3277 = vadd.f32 %v3254, %v3270
    %v3278 = vadd.f32 %v3255, %v3269
    %v3279 = vmul.f32 %v227, %v3221
    %v3280 = vmul.f32 %v227, %v3222
    %v3281 = vmul.f32 %v227, %v3223
    %v3282 = vmul.f32 %v227, %v3224
    %v3283 = vmul.f32 %v232, %v3221
    %v3284 = vmul.f32 %v232, %v3222
    %v3285 = vmul.f32 %v232, %v3223
    %v3286 = vmul.f32 %v232, %v3226
    %v3291 = vrot.slane %v3283, 1
    %v3292 = vrot.slane %v3284, 1
    %v3293 = vsel %vm123, %v3291, %v3292
    %v3294 = vrot.slane %v3285, 1
    %v3295 = vsel %vm123, %v3292, %v3294
    %v3296 = vrot.slane %v3286, 1
    %v3297 = vsel %vm123, %v3294, %v3296
    %v3302 = vadd.f32 %v3279, %v3293
    %v3303 = vadd.f32 %v3280, %v3295
    %v3304 = vadd.f32 %v3281, %v3297
    %v3305 = vadd.f32 %v3282, %v3296
    %v3306 = vmul.f32 %v256, %v3228
    %v3307 = vmul.f32 %v256, %v3222
    %v3308 = vmul.f32 %v256, %v3223
    %v3309 = vmul.f32 %v256, %v3226
    %v3314 = vrot.slane %v3306, 2
    %v3315 = vrot.slane %v3307, 2
    %v3316 = vsel %vm148, %v3314, %v3315
    %v3317 = vrot.slane %v3308, 2
    %v3318 = vsel %vm148, %v3315, %v3317
    %v3319 = vrot.slane %v3309, 2
    %v3320 = vsel %vm148, %v3317, %v3319
    %v3325 = vadd.f32 %v3302, %v3316
    %v3326 = vadd.f32 %v3303, %v3318
    %v3327 = vadd.f32 %v3304, %v3320
    %v3328 = vadd.f32 %v3305, %v3319
    %v3329 = vadd.f32 %v3092, %v3325
    %v3330 = vadd.f32 %v3093, %v3326
    %v3331 = vadd.f32 %v3094, %v3327
    %v3332 = vadd.f32 %v3095, %v3328
    %v3333 = vmul.f32 %v401, %v3221
    %v3334 = vmul.f32 %v401, %v3222
    %v3335 = vmul.f32 %v401, %v3223
    %v3336 = vmul.f32 %v401, %v3224
    %v3337 = vmul.f32 %v406, %v3221
    %v3338 = vmul.f32 %v406, %v3222
    %v3339 = vmul.f32 %v406, %v3223
    %v3340 = vmul.f32 %v406, %v3226
    %v3345 = vrot.slane %v3337, 1
    %v3346 = vrot.slane %v3338, 1
    %v3347 = vsel %vm123, %v3345, %v3346
    %v3348 = vrot.slane %v3339, 1
    %v3349 = vsel %vm123, %v3346, %v3348
    %v3350 = vrot.slane %v3340, 1
    %v3351 = vsel %vm123, %v3348, %v3350
    %v3356 = vadd.f32 %v3333, %v3347
    %v3357 = vadd.f32 %v3334, %v3349
    %v3358 = vadd.f32 %v3335, %v3351
    %v3359 = vadd.f32 %v3336, %v3350
    %v3360 = vmul.f32 %v430, %v3228
    %v3361 = vmul.f32 %v430, %v3222
    %v3362 = vmul.f32 %v430, %v3223
    %v3363 = vmul.f32 %v430, %v3226
    %v3368 = vrot.slane %v3360, 2
    %v3369 = vrot.slane %v3361, 2
    %v3370 = vsel %vm148, %v3368, %v3369
    %v3371 = vrot.slane %v3362, 2
    %v3372 = vsel %vm148, %v3369, %v3371
    %v3373 = vrot.slane %v3363, 2
    %v3374 = vsel %vm148, %v3371, %v3373
    %v3379 = vadd.f32 %v3356, %v3370
    %v3380 = vadd.f32 %v3357, %v3372
    %v3381 = vadd.f32 %v3358, %v3374
    %v3382 = vadd.f32 %v3359, %v3373
    %v3383 = vadd.f32 %v3146, %v3379
    %v3384 = vadd.f32 %v3147, %v3380
    %v3385 = vadd.f32 %v3148, %v3381
    %v3386 = vadd.f32 %v3149, %v3382
    %v3387 = vadd.f32 %v3383, %v458
    %v3388 = vadd.f32 %v3384, %v458
    %v3389 = vadd.f32 %v3385, %v458
    %v3390 = vadd.f32 %v3386, %v458
    %v3391 = vmax.f32 %v3387, 0.0
    %v3392 = vmax.f32 %v3388, 0.0
    %v3393 = vmax.f32 %v3389, 0.0
    %v3394 = vmax.f32 %v3390, 0.0
    %v3395 = vpack.c.bf16 %v3392, %v3391
    %v3396 = vpack.c.bf16 %v3394, %v3393
    %3397 = vst [vmem:[#allocation2 + $0x100] sm:$0xff] %v3395
    %3398 = vst [vmem:[#allocation2 + $0x108] sm:$0x1f] %v3396
    %s3399 = scalar_lea.vmem %s2, 304
    %v3400 = vld [vmem:[%s3399] sm:$0xf]
    %v3401 = vld [vmem:[%s3399 + $0x4] sm:$0xf]
    %v3402 = vld [vmem:[%s3399 + $0x8] sm:$0xf]
    %v3403 = vld [vmem:[%s3399 + $0xc] sm:$0x1]
    %v3404 = vunpack.c.l.bf16 %v3400
    %v3405 = vunpack.c.l.bf16 %v3401
    %v3406 = vunpack.c.l.bf16 %v3402
    %v3407 = vunpack.c.l.bf16 %v3403
    %v3408 = vld [vmem:[%s3399 + $0xc] sm:$0x3]
    %v3409 = vunpack.c.l.bf16 %v3408
    %v3410 = vld [vmem:[%s3399] sm:$0xe]
    %v3411 = vunpack.c.l.bf16 %v3410
    %v3412 = vmul.f32 %v109, %v3404
    %v3413 = vmul.f32 %v109, %v3405
    %v3414 = vmul.f32 %v109, %v3406
    %v3415 = vmul.f32 %v109, %v3407
    %v3416 = vmul.f32 %v114, %v3404
    %v3417 = vmul.f32 %v114, %v3405
    %v3418 = vmul.f32 %v114, %v3406
    %v3419 = vmul.f32 %v114, %v3409
    %v3424 = vrot.slane %v3416, 1
    %v3425 = vrot.slane %v3417, 1
    %v3426 = vsel %vm123, %v3424, %v3425
    %v3427 = vrot.slane %v3418, 1
    %v3428 = vsel %vm123, %v3425, %v3427
    %v3429 = vrot.slane %v3419, 1
    %v3430 = vsel %vm123, %v3427, %v3429
    %v3435 = vadd.f32 %v3412, %v3426
    %v3436 = vadd.f32 %v3413, %v3428
    %v3437 = vadd.f32 %v3414, %v3430
    %v3438 = vadd.f32 %v3415, %v3429
    %v3439 = vmul.f32 %v139, %v3411
    %v3440 = vmul.f32 %v139, %v3405
    %v3441 = vmul.f32 %v139, %v3406
    %v3442 = vmul.f32 %v139, %v3409
    %v3447 = vrot.slane %v3439, 2
    %v3448 = vrot.slane %v3440, 2
    %v3449 = vsel %vm148, %v3447, %v3448
    %v3450 = vrot.slane %v3441, 2
    %v3451 = vsel %vm148, %v3448, %v3450
    %v3452 = vrot.slane %v3442, 2
    %v3453 = vsel %vm148, %v3450, %v3452
    %v3458 = vadd.f32 %v3435, %v3449
    %v3459 = vadd.f32 %v3436, %v3451
    %v3460 = vadd.f32 %v3437, %v3453
    %v3461 = vadd.f32 %v3438, %v3452
    %v3462 = vmul.f32 %v227, %v3404
    %v3463 = vmul.f32 %v227, %v3405
    %v3464 = vmul.f32 %v227, %v3406
    %v3465 = vmul.f32 %v227, %v3407
    %v3466 = vmul.f32 %v232, %v3404
    %v3467 = vmul.f32 %v232, %v3405
    %v3468 = vmul.f32 %v232, %v3406
    %v3469 = vmul.f32 %v232, %v3409
    %v3474 = vrot.slane %v3466, 1
    %v3475 = vrot.slane %v3467, 1
    %v3476 = vsel %vm123, %v3474, %v3475
    %v3477 = vrot.slane %v3468, 1
    %v3478 = vsel %vm123, %v3475, %v3477
    %v3479 = vrot.slane %v3469, 1
    %v3480 = vsel %vm123, %v3477, %v3479
    %v3485 = vadd.f32 %v3462, %v3476
    %v3486 = vadd.f32 %v3463, %v3478
    %v3487 = vadd.f32 %v3464, %v3480
    %v3488 = vadd.f32 %v3465, %v3479
    %v3489 = vmul.f32 %v256, %v3411
    %v3490 = vmul.f32 %v256, %v3405
    %v3491 = vmul.f32 %v256, %v3406
    %v3492 = vmul.f32 %v256, %v3409
    %v3497 = vrot.slane %v3489, 2
    %v3498 = vrot.slane %v3490, 2
    %v3499 = vsel %vm148, %v3497, %v3498
    %v3500 = vrot.slane %v3491, 2
    %v3501 = vsel %vm148, %v3498, %v3500
    %v3502 = vrot.slane %v3492, 2
    %v3503 = vsel %vm148, %v3500, %v3502
    %v3508 = vadd.f32 %v3485, %v3499
    %v3509 = vadd.f32 %v3486, %v3501
    %v3510 = vadd.f32 %v3487, %v3503
    %v3511 = vadd.f32 %v3488, %v3502
    %v3512 = vadd.f32 %v3275, %v3508
    %v3513 = vadd.f32 %v3276, %v3509
    %v3514 = vadd.f32 %v3277, %v3510
    %v3515 = vadd.f32 %v3278, %v3511
    %v3516 = vmul.f32 %v401, %v3404
    %v3517 = vmul.f32 %v401, %v3405
    %v3518 = vmul.f32 %v401, %v3406
    %v3519 = vmul.f32 %v401, %v3407
    %v3520 = vmul.f32 %v406, %v3404
    %v3521 = vmul.f32 %v406, %v3405
    %v3522 = vmul.f32 %v406, %v3406
    %v3523 = vmul.f32 %v406, %v3409
    %v3528 = vrot.slane %v3520, 1
    %v3529 = vrot.slane %v3521, 1
    %v3530 = vsel %vm123, %v3528, %v3529
    %v3531 = vrot.slane %v3522, 1
    %v3532 = vsel %vm123, %v3529, %v3531
    %v3533 = vrot.slane %v3523, 1
    %v3534 = vsel %vm123, %v3531, %v3533
    %v3539 = vadd.f32 %v3516, %v3530
    %v3540 = vadd.f32 %v3517, %v3532
    %v3541 = vadd.f32 %v3518, %v3534
    %v3542 = vadd.f32 %v3519, %v3533
    %v3543 = vmul.f32 %v430, %v3411
    %v3544 = vmul.f32 %v430, %v3405
    %v3545 = vmul.f32 %v430, %v3406
    %v3546 = vmul.f32 %v430, %v3409
    %v3551 = vrot.slane %v3543, 2
    %v3552 = vrot.slane %v3544, 2
    %v3553 = vsel %vm148, %v3551, %v3552
    %v3554 = vrot.slane %v3545, 2
    %v3555 = vsel %vm148, %v3552, %v3554
    %v3556 = vrot.slane %v3546, 2
    %v3557 = vsel %vm148, %v3554, %v3556
    %v3562 = vadd.f32 %v3539, %v3553
    %v3563 = vadd.f32 %v3540, %v3555
    %v3564 = vadd.f32 %v3541, %v3557
    %v3565 = vadd.f32 %v3542, %v3556
    %v3566 = vadd.f32 %v3329, %v3562
    %v3567 = vadd.f32 %v3330, %v3563
    %v3568 = vadd.f32 %v3331, %v3564
    %v3569 = vadd.f32 %v3332, %v3565
    %v3570 = vadd.f32 %v3566, %v458
    %v3571 = vadd.f32 %v3567, %v458
    %v3572 = vadd.f32 %v3568, %v458
    %v3573 = vadd.f32 %v3569, %v458
    %v3574 = vmax.f32 %v3570, 0.0
    %v3575 = vmax.f32 %v3571, 0.0
    %v3576 = vmax.f32 %v3572, 0.0
    %v3577 = vmax.f32 %v3573, 0.0
    %v3578 = vpack.c.bf16 %v3575, %v3574
    %v3579 = vpack.c.bf16 %v3577, %v3576
    %3580 = vst [vmem:[#allocation2 + $0x110] sm:$0xff] %v3578
    %3581 = vst [vmem:[#allocation2 + $0x118] sm:$0x1f] %v3579
    %s3582 = scalar_lea.vmem %s2, 320
    %v3583 = vld [vmem:[%s3582] sm:$0xf]
    %v3584 = vld [vmem:[%s3582 + $0x4] sm:$0xf]
    %v3585 = vld [vmem:[%s3582 + $0x8] sm:$0xf]
    %v3586 = vld [vmem:[%s3582 + $0xc] sm:$0x1]
    %v3587 = vunpack.c.l.bf16 %v3583
    %v3588 = vunpack.c.l.bf16 %v3584
    %v3589 = vunpack.c.l.bf16 %v3585
    %v3590 = vunpack.c.l.bf16 %v3586
    %v3591 = vld [vmem:[%s3582 + $0xc] sm:$0x3]
    %v3592 = vunpack.c.l.bf16 %v3591
    %v3593 = vld [vmem:[%s3582] sm:$0xe]
    %v3594 = vunpack.c.l.bf16 %v3593
    %v3595 = vmul.f32 %v109, %v3587
    %v3596 = vmul.f32 %v109, %v3588
    %v3597 = vmul.f32 %v109, %v3589
    %v3598 = vmul.f32 %v109, %v3590
    %v3599 = vmul.f32 %v114, %v3587
    %v3600 = vmul.f32 %v114, %v3588
    %v3601 = vmul.f32 %v114, %v3589
    %v3602 = vmul.f32 %v114, %v3592
    %v3607 = vrot.slane %v3599, 1
    %v3608 = vrot.slane %v3600, 1
    %v3609 = vsel %vm123, %v3607, %v3608
    %v3610 = vrot.slane %v3601, 1
    %v3611 = vsel %vm123, %v3608, %v3610
    %v3612 = vrot.slane %v3602, 1
    %v3613 = vsel %vm123, %v3610, %v3612
    %v3618 = vadd.f32 %v3595, %v3609
    %v3619 = vadd.f32 %v3596, %v3611
    %v3620 = vadd.f32 %v3597, %v3613
    %v3621 = vadd.f32 %v3598, %v3612
    %v3622 = vmul.f32 %v139, %v3594
    %v3623 = vmul.f32 %v139, %v3588
    %v3624 = vmul.f32 %v139, %v3589
    %v3625 = vmul.f32 %v139, %v3592
    %v3630 = vrot.slane %v3622, 2
    %v3631 = vrot.slane %v3623, 2
    %v3632 = vsel %vm148, %v3630, %v3631
    %v3633 = vrot.slane %v3624, 2
    %v3634 = vsel %vm148, %v3631, %v3633
    %v3635 = vrot.slane %v3625, 2
    %v3636 = vsel %vm148, %v3633, %v3635
    %v3641 = vadd.f32 %v3618, %v3632
    %v3642 = vadd.f32 %v3619, %v3634
    %v3643 = vadd.f32 %v3620, %v3636
    %v3644 = vadd.f32 %v3621, %v3635
    %v3645 = vmul.f32 %v227, %v3587
    %v3646 = vmul.f32 %v227, %v3588
    %v3647 = vmul.f32 %v227, %v3589
    %v3648 = vmul.f32 %v227, %v3590
    %v3649 = vmul.f32 %v232, %v3587
    %v3650 = vmul.f32 %v232, %v3588
    %v3651 = vmul.f32 %v232, %v3589
    %v3652 = vmul.f32 %v232, %v3592
    %v3657 = vrot.slane %v3649, 1
    %v3658 = vrot.slane %v3650, 1
    %v3659 = vsel %vm123, %v3657, %v3658
    %v3660 = vrot.slane %v3651, 1
    %v3661 = vsel %vm123, %v3658, %v3660
    %v3662 = vrot.slane %v3652, 1
    %v3663 = vsel %vm123, %v3660, %v3662
    %v3668 = vadd.f32 %v3645, %v3659
    %v3669 = vadd.f32 %v3646, %v3661
    %v3670 = vadd.f32 %v3647, %v3663
    %v3671 = vadd.f32 %v3648, %v3662
    %v3672 = vmul.f32 %v256, %v3594
    %v3673 = vmul.f32 %v256, %v3588
    %v3674 = vmul.f32 %v256, %v3589
    %v3675 = vmul.f32 %v256, %v3592
    %v3680 = vrot.slane %v3672, 2
    %v3681 = vrot.slane %v3673, 2
    %v3682 = vsel %vm148, %v3680, %v3681
    %v3683 = vrot.slane %v3674, 2
    %v3684 = vsel %vm148, %v3681, %v3683
    %v3685 = vrot.slane %v3675, 2
    %v3686 = vsel %vm148, %v3683, %v3685
    %v3691 = vadd.f32 %v3668, %v3682
    %v3692 = vadd.f32 %v3669, %v3684
    %v3693 = vadd.f32 %v3670, %v3686
    %v3694 = vadd.f32 %v3671, %v3685
    %v3695 = vadd.f32 %v3458, %v3691
    %v3696 = vadd.f32 %v3459, %v3692
    %v3697 = vadd.f32 %v3460, %v3693
    %v3698 = vadd.f32 %v3461, %v3694
    %v3699 = vmul.f32 %v401, %v3587
    %v3700 = vmul.f32 %v401, %v3588
    %v3701 = vmul.f32 %v401, %v3589
    %v3702 = vmul.f32 %v401, %v3590
    %v3703 = vmul.f32 %v406, %v3587
    %v3704 = vmul.f32 %v406, %v3588
    %v3705 = vmul.f32 %v406, %v3589
    %v3706 = vmul.f32 %v406, %v3592
    %v3711 = vrot.slane %v3703, 1
    %v3712 = vrot.slane %v3704, 1
    %v3713 = vsel %vm123, %v3711, %v3712
    %v3714 = vrot.slane %v3705, 1
    %v3715 = vsel %vm123, %v3712, %v3714
    %v3716 = vrot.slane %v3706, 1
    %v3717 = vsel %vm123, %v3714, %v3716
    %v3722 = vadd.f32 %v3699, %v3713
    %v3723 = vadd.f32 %v3700, %v3715
    %v3724 = vadd.f32 %v3701, %v3717
    %v3725 = vadd.f32 %v3702, %v3716
    %v3726 = vmul.f32 %v430, %v3594
    %v3727 = vmul.f32 %v430, %v3588
    %v3728 = vmul.f32 %v430, %v3589
    %v3729 = vmul.f32 %v430, %v3592
    %v3734 = vrot.slane %v3726, 2
    %v3735 = vrot.slane %v3727, 2
    %v3736 = vsel %vm148, %v3734, %v3735
    %v3737 = vrot.slane %v3728, 2
    %v3738 = vsel %vm148, %v3735, %v3737
    %v3739 = vrot.slane %v3729, 2
    %v3740 = vsel %vm148, %v3737, %v3739
    %v3745 = vadd.f32 %v3722, %v3736
    %v3746 = vadd.f32 %v3723, %v3738
    %v3747 = vadd.f32 %v3724, %v3740
    %v3748 = vadd.f32 %v3725, %v3739
    %v3749 = vadd.f32 %v3512, %v3745
    %v3750 = vadd.f32 %v3513, %v3746
    %v3751 = vadd.f32 %v3514, %v3747
    %v3752 = vadd.f32 %v3515, %v3748
    %v3753 = vadd.f32 %v3749, %v458
    %v3754 = vadd.f32 %v3750, %v458
    %v3755 = vadd.f32 %v3751, %v458
    %v3756 = vadd.f32 %v3752, %v458
    %v3757 = vmax.f32 %v3753, 0.0
    %v3758 = vmax.f32 %v3754, 0.0
    %v3759 = vmax.f32 %v3755, 0.0
    %v3760 = vmax.f32 %v3756, 0.0
    %v3761 = vpack.c.bf16 %v3758, %v3757
    %v3762 = vpack.c.bf16 %v3760, %v3759
    %3763 = vst [vmem:[#allocation2 + $0x120] sm:$0xff] %v3761
    %3764 = vst [vmem:[#allocation2 + $0x128] sm:$0x1f] %v3762
    %s3765 = scalar_lea.vmem %s2, 336
    %v3766 = vld [vmem:[%s3765] sm:$0xf]
    %v3767 = vld [vmem:[%s3765 + $0x4] sm:$0xf]
    %v3768 = vld [vmem:[%s3765 + $0x8] sm:$0xf]
    %v3769 = vld [vmem:[%s3765 + $0xc] sm:$0x1]
    %v3770 = vunpack.c.l.bf16 %v3766
    %v3771 = vunpack.c.l.bf16 %v3767
    %v3772 = vunpack.c.l.bf16 %v3768
    %v3773 = vunpack.c.l.bf16 %v3769
    %v3774 = vld [vmem:[%s3765 + $0xc] sm:$0x3]
    %v3775 = vunpack.c.l.bf16 %v3774
    %v3776 = vld [vmem:[%s3765] sm:$0xe]
    %v3777 = vunpack.c.l.bf16 %v3776
    %v3778 = vmul.f32 %v109, %v3770
    %v3779 = vmul.f32 %v109, %v3771
    %v3780 = vmul.f32 %v109, %v3772
    %v3781 = vmul.f32 %v109, %v3773
    %v3782 = vmul.f32 %v114, %v3770
    %v3783 = vmul.f32 %v114, %v3771
    %v3784 = vmul.f32 %v114, %v3772
    %v3785 = vmul.f32 %v114, %v3775
    %v3790 = vrot.slane %v3782, 1
    %v3791 = vrot.slane %v3783, 1
    %v3792 = vsel %vm123, %v3790, %v3791
    %v3793 = vrot.slane %v3784, 1
    %v3794 = vsel %vm123, %v3791, %v3793
    %v3795 = vrot.slane %v3785, 1
    %v3796 = vsel %vm123, %v3793, %v3795
    %v3801 = vadd.f32 %v3778, %v3792
    %v3802 = vadd.f32 %v3779, %v3794
    %v3803 = vadd.f32 %v3780, %v3796
    %v3804 = vadd.f32 %v3781, %v3795
    %v3805 = vmul.f32 %v139, %v3777
    %v3806 = vmul.f32 %v139, %v3771
    %v3807 = vmul.f32 %v139, %v3772
    %v3808 = vmul.f32 %v139, %v3775
    %v3813 = vrot.slane %v3805, 2
    %v3814 = vrot.slane %v3806, 2
    %v3815 = vsel %vm148, %v3813, %v3814
    %v3816 = vrot.slane %v3807, 2
    %v3817 = vsel %vm148, %v3814, %v3816
    %v3818 = vrot.slane %v3808, 2
    %v3819 = vsel %vm148, %v3816, %v3818
    %v3824 = vadd.f32 %v3801, %v3815
    %v3825 = vadd.f32 %v3802, %v3817
    %v3826 = vadd.f32 %v3803, %v3819
    %v3827 = vadd.f32 %v3804, %v3818
    %v3828 = vmul.f32 %v227, %v3770
    %v3829 = vmul.f32 %v227, %v3771
    %v3830 = vmul.f32 %v227, %v3772
    %v3831 = vmul.f32 %v227, %v3773
    %v3832 = vmul.f32 %v232, %v3770
    %v3833 = vmul.f32 %v232, %v3771
    %v3834 = vmul.f32 %v232, %v3772
    %v3835 = vmul.f32 %v232, %v3775
    %v3840 = vrot.slane %v3832, 1
    %v3841 = vrot.slane %v3833, 1
    %v3842 = vsel %vm123, %v3840, %v3841
    %v3843 = vrot.slane %v3834, 1
    %v3844 = vsel %vm123, %v3841, %v3843
    %v3845 = vrot.slane %v3835, 1
    %v3846 = vsel %vm123, %v3843, %v3845
    %v3851 = vadd.f32 %v3828, %v3842
    %v3852 = vadd.f32 %v3829, %v3844
    %v3853 = vadd.f32 %v3830, %v3846
    %v3854 = vadd.f32 %v3831, %v3845
    %v3855 = vmul.f32 %v256, %v3777
    %v3856 = vmul.f32 %v256, %v3771
    %v3857 = vmul.f32 %v256, %v3772
    %v3858 = vmul.f32 %v256, %v3775
    %v3863 = vrot.slane %v3855, 2
    %v3864 = vrot.slane %v3856, 2
    %v3865 = vsel %vm148, %v3863, %v3864
    %v3866 = vrot.slane %v3857, 2
    %v3867 = vsel %vm148, %v3864, %v3866
    %v3868 = vrot.slane %v3858, 2
    %v3869 = vsel %vm148, %v3866, %v3868
    %v3874 = vadd.f32 %v3851, %v3865
    %v3875 = vadd.f32 %v3852, %v3867
    %v3876 = vadd.f32 %v3853, %v3869
    %v3877 = vadd.f32 %v3854, %v3868
    %v3878 = vadd.f32 %v3641, %v3874
    %v3879 = vadd.f32 %v3642, %v3875
    %v3880 = vadd.f32 %v3643, %v3876
    %v3881 = vadd.f32 %v3644, %v3877
    %v3882 = vmul.f32 %v401, %v3770
    %v3883 = vmul.f32 %v401, %v3771
    %v3884 = vmul.f32 %v401, %v3772
    %v3885 = vmul.f32 %v401, %v3773
    %v3886 = vmul.f32 %v406, %v3770
    %v3887 = vmul.f32 %v406, %v3771
    %v3888 = vmul.f32 %v406, %v3772
    %v3889 = vmul.f32 %v406, %v3775
    %v3894 = vrot.slane %v3886, 1
    %v3895 = vrot.slane %v3887, 1
    %v3896 = vsel %vm123, %v3894, %v3895
    %v3897 = vrot.slane %v3888, 1
    %v3898 = vsel %vm123, %v3895, %v3897
    %v3899 = vrot.slane %v3889, 1
    %v3900 = vsel %vm123, %v3897, %v3899
    %v3905 = vadd.f32 %v3882, %v3896
    %v3906 = vadd.f32 %v3883, %v3898
    %v3907 = vadd.f32 %v3884, %v3900
    %v3908 = vadd.f32 %v3885, %v3899
    %v3909 = vmul.f32 %v430, %v3777
    %v3910 = vmul.f32 %v430, %v3771
    %v3911 = vmul.f32 %v430, %v3772
    %v3912 = vmul.f32 %v430, %v3775
    %v3917 = vrot.slane %v3909, 2
    %v3918 = vrot.slane %v3910, 2
    %v3919 = vsel %vm148, %v3917, %v3918
    %v3920 = vrot.slane %v3911, 2
    %v3921 = vsel %vm148, %v3918, %v3920
    %v3922 = vrot.slane %v3912, 2
    %v3923 = vsel %vm148, %v3920, %v3922
    %v3928 = vadd.f32 %v3905, %v3919
    %v3929 = vadd.f32 %v3906, %v3921
    %v3930 = vadd.f32 %v3907, %v3923
    %v3931 = vadd.f32 %v3908, %v3922
    %v3932 = vadd.f32 %v3695, %v3928
    %v3933 = vadd.f32 %v3696, %v3929
    %v3934 = vadd.f32 %v3697, %v3930
    %v3935 = vadd.f32 %v3698, %v3931
    %v3936 = vadd.f32 %v3932, %v458
    %v3937 = vadd.f32 %v3933, %v458
    %v3938 = vadd.f32 %v3934, %v458
    %v3939 = vadd.f32 %v3935, %v458
    %v3940 = vmax.f32 %v3936, 0.0
    %v3941 = vmax.f32 %v3937, 0.0
    %v3942 = vmax.f32 %v3938, 0.0
    %v3943 = vmax.f32 %v3939, 0.0
    %v3944 = vpack.c.bf16 %v3941, %v3940
    %v3945 = vpack.c.bf16 %v3943, %v3942
    %3946 = vst [vmem:[#allocation2 + $0x130] sm:$0xff] %v3944
    %3947 = vst [vmem:[#allocation2 + $0x138] sm:$0x1f] %v3945
    %s3948 = scalar_lea.vmem %s2, 352
    %v3949 = vld [vmem:[%s3948] sm:$0xf]
    %v3950 = vld [vmem:[%s3948 + $0x4] sm:$0xf]
    %v3951 = vld [vmem:[%s3948 + $0x8] sm:$0xf]
    %v3952 = vld [vmem:[%s3948 + $0xc] sm:$0x1]
    %v3953 = vunpack.c.l.bf16 %v3949
    %v3954 = vunpack.c.l.bf16 %v3950
    %v3955 = vunpack.c.l.bf16 %v3951
    %v3956 = vunpack.c.l.bf16 %v3952
    %v3957 = vld [vmem:[%s3948 + $0xc] sm:$0x3]
    %v3958 = vunpack.c.l.bf16 %v3957
    %v3959 = vld [vmem:[%s3948] sm:$0xe]
    %v3960 = vunpack.c.l.bf16 %v3959
    %v3961 = vmul.f32 %v109, %v3953
    %v3962 = vmul.f32 %v109, %v3954
    %v3963 = vmul.f32 %v109, %v3955
    %v3964 = vmul.f32 %v109, %v3956
    %v3965 = vmul.f32 %v114, %v3953
    %v3966 = vmul.f32 %v114, %v3954
    %v3967 = vmul.f32 %v114, %v3955
    %v3968 = vmul.f32 %v114, %v3958
    %v3973 = vrot.slane %v3965, 1
    %v3974 = vrot.slane %v3966, 1
    %v3975 = vsel %vm123, %v3973, %v3974
    %v3976 = vrot.slane %v3967, 1
    %v3977 = vsel %vm123, %v3974, %v3976
    %v3978 = vrot.slane %v3968, 1
    %v3979 = vsel %vm123, %v3976, %v3978
    %v3984 = vadd.f32 %v3961, %v3975
    %v3985 = vadd.f32 %v3962, %v3977
    %v3986 = vadd.f32 %v3963, %v3979
    %v3987 = vadd.f32 %v3964, %v3978
    %v3988 = vmul.f32 %v139, %v3960
    %v3989 = vmul.f32 %v139, %v3954
    %v3990 = vmul.f32 %v139, %v3955
    %v3991 = vmul.f32 %v139, %v3958
    %v3996 = vrot.slane %v3988, 2
    %v3997 = vrot.slane %v3989, 2
    %v3998 = vsel %vm148, %v3996, %v3997
    %v3999 = vrot.slane %v3990, 2
    %v4000 = vsel %vm148, %v3997, %v3999
    %v4001 = vrot.slane %v3991, 2
    %v4002 = vsel %vm148, %v3999, %v4001
    %v4007 = vadd.f32 %v3984, %v3998
    %v4008 = vadd.f32 %v3985, %v4000
    %v4009 = vadd.f32 %v3986, %v4002
    %v4010 = vadd.f32 %v3987, %v4001
    %v4011 = vmul.f32 %v227, %v3953
    %v4012 = vmul.f32 %v227, %v3954
    %v4013 = vmul.f32 %v227, %v3955
    %v4014 = vmul.f32 %v227, %v3956
    %v4015 = vmul.f32 %v232, %v3953
    %v4016 = vmul.f32 %v232, %v3954
    %v4017 = vmul.f32 %v232, %v3955
    %v4018 = vmul.f32 %v232, %v3958
    %v4023 = vrot.slane %v4015, 1
    %v4024 = vrot.slane %v4016, 1
    %v4025 = vsel %vm123, %v4023, %v4024
    %v4026 = vrot.slane %v4017, 1
    %v4027 = vsel %vm123, %v4024, %v4026
    %v4028 = vrot.slane %v4018, 1
    %v4029 = vsel %vm123, %v4026, %v4028
    %v4034 = vadd.f32 %v4011, %v4025
    %v4035 = vadd.f32 %v4012, %v4027
    %v4036 = vadd.f32 %v4013, %v4029
    %v4037 = vadd.f32 %v4014, %v4028
    %v4038 = vmul.f32 %v256, %v3960
    %v4039 = vmul.f32 %v256, %v3954
    %v4040 = vmul.f32 %v256, %v3955
    %v4041 = vmul.f32 %v256, %v3958
    %v4046 = vrot.slane %v4038, 2
    %v4047 = vrot.slane %v4039, 2
    %v4048 = vsel %vm148, %v4046, %v4047
    %v4049 = vrot.slane %v4040, 2
    %v4050 = vsel %vm148, %v4047, %v4049
    %v4051 = vrot.slane %v4041, 2
    %v4052 = vsel %vm148, %v4049, %v4051
    %v4057 = vadd.f32 %v4034, %v4048
    %v4058 = vadd.f32 %v4035, %v4050
    %v4059 = vadd.f32 %v4036, %v4052
    %v4060 = vadd.f32 %v4037, %v4051
    %v4061 = vadd.f32 %v3824, %v4057
    %v4062 = vadd.f32 %v3825, %v4058
    %v4063 = vadd.f32 %v3826, %v4059
    %v4064 = vadd.f32 %v3827, %v4060
    %v4065 = vmul.f32 %v401, %v3953
    %v4066 = vmul.f32 %v401, %v3954
    %v4067 = vmul.f32 %v401, %v3955
    %v4068 = vmul.f32 %v401, %v3956
    %v4069 = vmul.f32 %v406, %v3953
    %v4070 = vmul.f32 %v406, %v3954
    %v4071 = vmul.f32 %v406, %v3955
    %v4072 = vmul.f32 %v406, %v3958
    %v4077 = vrot.slane %v4069, 1
    %v4078 = vrot.slane %v4070, 1
    %v4079 = vsel %vm123, %v4077, %v4078
    %v4080 = vrot.slane %v4071, 1
    %v4081 = vsel %vm123, %v4078, %v4080
    %v4082 = vrot.slane %v4072, 1
    %v4083 = vsel %vm123, %v4080, %v4082
    %v4088 = vadd.f32 %v4065, %v4079
    %v4089 = vadd.f32 %v4066, %v4081
    %v4090 = vadd.f32 %v4067, %v4083
    %v4091 = vadd.f32 %v4068, %v4082
    %v4092 = vmul.f32 %v430, %v3960
    %v4093 = vmul.f32 %v430, %v3954
    %v4094 = vmul.f32 %v430, %v3955
    %v4095 = vmul.f32 %v430, %v3958
    %v4100 = vrot.slane %v4092, 2
    %v4101 = vrot.slane %v4093, 2
    %v4102 = vsel %vm148, %v4100, %v4101
    %v4103 = vrot.slane %v4094, 2
    %v4104 = vsel %vm148, %v4101, %v4103
    %v4105 = vrot.slane %v4095, 2
    %v4106 = vsel %vm148, %v4103, %v4105
    %v4111 = vadd.f32 %v4088, %v4102
    %v4112 = vadd.f32 %v4089, %v4104
    %v4113 = vadd.f32 %v4090, %v4106
    %v4114 = vadd.f32 %v4091, %v4105
    %v4115 = vadd.f32 %v3878, %v4111
    %v4116 = vadd.f32 %v3879, %v4112
    %v4117 = vadd.f32 %v3880, %v4113
    %v4118 = vadd.f32 %v3881, %v4114
    %v4119 = vadd.f32 %v4115, %v458
    %v4120 = vadd.f32 %v4116, %v458
    %v4121 = vadd.f32 %v4117, %v458
    %v4122 = vadd.f32 %v4118, %v458
    %v4123 = vmax.f32 %v4119, 0.0
    %v4124 = vmax.f32 %v4120, 0.0
    %v4125 = vmax.f32 %v4121, 0.0
    %v4126 = vmax.f32 %v4122, 0.0
    %v4127 = vpack.c.bf16 %v4124, %v4123
    %v4128 = vpack.c.bf16 %v4126, %v4125
    %4129 = vst [vmem:[#allocation2 + $0x140] sm:$0xff] %v4127
    %4130 = vst [vmem:[#allocation2 + $0x148] sm:$0x1f] %v4128
    %s4131 = scalar_lea.vmem %s2, 368
    %v4132 = vld [vmem:[%s4131] sm:$0xf]
    %v4133 = vld [vmem:[%s4131 + $0x4] sm:$0xf]
    %v4134 = vld [vmem:[%s4131 + $0x8] sm:$0xf]
    %v4135 = vld [vmem:[%s4131 + $0xc] sm:$0x1]
    %v4136 = vunpack.c.l.bf16 %v4132
    %v4137 = vunpack.c.l.bf16 %v4133
    %v4138 = vunpack.c.l.bf16 %v4134
    %v4139 = vunpack.c.l.bf16 %v4135
    %v4140 = vld [vmem:[%s4131 + $0xc] sm:$0x3]
    %v4141 = vunpack.c.l.bf16 %v4140
    %v4142 = vld [vmem:[%s4131] sm:$0xe]
    %v4143 = vunpack.c.l.bf16 %v4142
    %v4144 = vmul.f32 %v109, %v4136
    %v4145 = vmul.f32 %v109, %v4137
    %v4146 = vmul.f32 %v109, %v4138
    %v4147 = vmul.f32 %v109, %v4139
    %v4148 = vmul.f32 %v114, %v4136
    %v4149 = vmul.f32 %v114, %v4137
    %v4150 = vmul.f32 %v114, %v4138
    %v4151 = vmul.f32 %v114, %v4141
    %v4156 = vrot.slane %v4148, 1
    %v4157 = vrot.slane %v4149, 1
    %v4158 = vsel %vm123, %v4156, %v4157
    %v4159 = vrot.slane %v4150, 1
    %v4160 = vsel %vm123, %v4157, %v4159
    %v4161 = vrot.slane %v4151, 1
    %v4162 = vsel %vm123, %v4159, %v4161
    %v4167 = vadd.f32 %v4144, %v4158
    %v4168 = vadd.f32 %v4145, %v4160
    %v4169 = vadd.f32 %v4146, %v4162
    %v4170 = vadd.f32 %v4147, %v4161
    %v4171 = vmul.f32 %v139, %v4143
    %v4172 = vmul.f32 %v139, %v4137
    %v4173 = vmul.f32 %v139, %v4138
    %v4174 = vmul.f32 %v139, %v4141
    %v4179 = vrot.slane %v4171, 2
    %v4180 = vrot.slane %v4172, 2
    %v4181 = vsel %vm148, %v4179, %v4180
    %v4182 = vrot.slane %v4173, 2
    %v4183 = vsel %vm148, %v4180, %v4182
    %v4184 = vrot.slane %v4174, 2
    %v4185 = vsel %vm148, %v4182, %v4184
    %v4190 = vadd.f32 %v4167, %v4181
    %v4191 = vadd.f32 %v4168, %v4183
    %v4192 = vadd.f32 %v4169, %v4185
    %v4193 = vadd.f32 %v4170, %v4184
    %v4194 = vmul.f32 %v227, %v4136
    %v4195 = vmul.f32 %v227, %v4137
    %v4196 = vmul.f32 %v227, %v4138
    %v4197 = vmul.f32 %v227, %v4139
    %v4198 = vmul.f32 %v232, %v4136
    %v4199 = vmul.f32 %v232, %v4137
    %v4200 = vmul.f32 %v232, %v4138
    %v4201 = vmul.f32 %v232, %v4141
    %v4206 = vrot.slane %v4198, 1
    %v4207 = vrot.slane %v4199, 1
    %v4208 = vsel %vm123, %v4206, %v4207
    %v4209 = vrot.slane %v4200, 1
    %v4210 = vsel %vm123, %v4207, %v4209
    %v4211 = vrot.slane %v4201, 1
    %v4212 = vsel %vm123, %v4209, %v4211
    %v4217 = vadd.f32 %v4194, %v4208
    %v4218 = vadd.f32 %v4195, %v4210
    %v4219 = vadd.f32 %v4196, %v4212
    %v4220 = vadd.f32 %v4197, %v4211
    %v4221 = vmul.f32 %v256, %v4143
    %v4222 = vmul.f32 %v256, %v4137
    %v4223 = vmul.f32 %v256, %v4138
    %v4224 = vmul.f32 %v256, %v4141
    %v4229 = vrot.slane %v4221, 2
    %v4230 = vrot.slane %v4222, 2
    %v4231 = vsel %vm148, %v4229, %v4230
    %v4232 = vrot.slane %v4223, 2
    %v4233 = vsel %vm148, %v4230, %v4232
    %v4234 = vrot.slane %v4224, 2
    %v4235 = vsel %vm148, %v4232, %v4234
    %v4240 = vadd.f32 %v4217, %v4231
    %v4241 = vadd.f32 %v4218, %v4233
    %v4242 = vadd.f32 %v4219, %v4235
    %v4243 = vadd.f32 %v4220, %v4234
    %v4244 = vadd.f32 %v4007, %v4240
    %v4245 = vadd.f32 %v4008, %v4241
    %v4246 = vadd.f32 %v4009, %v4242
    %v4247 = vadd.f32 %v4010, %v4243
    %v4248 = vmul.f32 %v401, %v4136
    %v4249 = vmul.f32 %v401, %v4137
    %v4250 = vmul.f32 %v401, %v4138
    %v4251 = vmul.f32 %v401, %v4139
    %v4252 = vmul.f32 %v406, %v4136
    %v4253 = vmul.f32 %v406, %v4137
    %v4254 = vmul.f32 %v406, %v4138
    %v4255 = vmul.f32 %v406, %v4141
    %v4260 = vrot.slane %v4252, 1
    %v4261 = vrot.slane %v4253, 1
    %v4262 = vsel %vm123, %v4260, %v4261
    %v4263 = vrot.slane %v4254, 1
    %v4264 = vsel %vm123, %v4261, %v4263
    %v4265 = vrot.slane %v4255, 1
    %v4266 = vsel %vm123, %v4263, %v4265
    %v4271 = vadd.f32 %v4248, %v4262
    %v4272 = vadd.f32 %v4249, %v4264
    %v4273 = vadd.f32 %v4250, %v4266
    %v4274 = vadd.f32 %v4251, %v4265
    %v4275 = vmul.f32 %v430, %v4143
    %v4276 = vmul.f32 %v430, %v4137
    %v4277 = vmul.f32 %v430, %v4138
    %v4278 = vmul.f32 %v430, %v4141
    %v4283 = vrot.slane %v4275, 2
    %v4284 = vrot.slane %v4276, 2
    %v4285 = vsel %vm148, %v4283, %v4284
    %v4286 = vrot.slane %v4277, 2
    %v4287 = vsel %vm148, %v4284, %v4286
    %v4288 = vrot.slane %v4278, 2
    %v4289 = vsel %vm148, %v4286, %v4288
    %v4294 = vadd.f32 %v4271, %v4285
    %v4295 = vadd.f32 %v4272, %v4287
    %v4296 = vadd.f32 %v4273, %v4289
    %v4297 = vadd.f32 %v4274, %v4288
    %v4298 = vadd.f32 %v4061, %v4294
    %v4299 = vadd.f32 %v4062, %v4295
    %v4300 = vadd.f32 %v4063, %v4296
    %v4301 = vadd.f32 %v4064, %v4297
    %v4302 = vadd.f32 %v4298, %v458
    %v4303 = vadd.f32 %v4299, %v458
    %v4304 = vadd.f32 %v4300, %v458
    %v4305 = vadd.f32 %v4301, %v458
    %v4306 = vmax.f32 %v4302, 0.0
    %v4307 = vmax.f32 %v4303, 0.0
    %v4308 = vmax.f32 %v4304, 0.0
    %v4309 = vmax.f32 %v4305, 0.0
    %v4310 = vpack.c.bf16 %v4307, %v4306
    %v4311 = vpack.c.bf16 %v4309, %v4308
    %4312 = vst [vmem:[#allocation2 + $0x150] sm:$0xff] %v4310
    %4313 = vst [vmem:[#allocation2 + $0x158] sm:$0x1f] %v4311
    %s4314 = scalar_lea.vmem %s2, 384
    %v4315 = vld [vmem:[%s4314] sm:$0xf]
    %v4316 = vld [vmem:[%s4314 + $0x4] sm:$0xf]
    %v4317 = vld [vmem:[%s4314 + $0x8] sm:$0xf]
    %v4318 = vld [vmem:[%s4314 + $0xc] sm:$0x1]
    %v4319 = vunpack.c.l.bf16 %v4315
    %v4320 = vunpack.c.l.bf16 %v4316
    %v4321 = vunpack.c.l.bf16 %v4317
    %v4322 = vunpack.c.l.bf16 %v4318
    %v4323 = vld [vmem:[%s4314 + $0xc] sm:$0x3]
    %v4324 = vunpack.c.l.bf16 %v4323
    %v4325 = vld [vmem:[%s4314] sm:$0xe]
    %v4326 = vunpack.c.l.bf16 %v4325
    %v4327 = vmul.f32 %v109, %v4319
    %v4328 = vmul.f32 %v109, %v4320
    %v4329 = vmul.f32 %v109, %v4321
    %v4330 = vmul.f32 %v109, %v4322
    %v4331 = vmul.f32 %v114, %v4319
    %v4332 = vmul.f32 %v114, %v4320
    %v4333 = vmul.f32 %v114, %v4321
    %v4334 = vmul.f32 %v114, %v4324
    %v4339 = vrot.slane %v4331, 1
    %v4340 = vrot.slane %v4332, 1
    %v4341 = vsel %vm123, %v4339, %v4340
    %v4342 = vrot.slane %v4333, 1
    %v4343 = vsel %vm123, %v4340, %v4342
    %v4344 = vrot.slane %v4334, 1
    %v4345 = vsel %vm123, %v4342, %v4344
    %v4350 = vadd.f32 %v4327, %v4341
    %v4351 = vadd.f32 %v4328, %v4343
    %v4352 = vadd.f32 %v4329, %v4345
    %v4353 = vadd.f32 %v4330, %v4344
    %v4354 = vmul.f32 %v139, %v4326
    %v4355 = vmul.f32 %v139, %v4320
    %v4356 = vmul.f32 %v139, %v4321
    %v4357 = vmul.f32 %v139, %v4324
    %v4362 = vrot.slane %v4354, 2
    %v4363 = vrot.slane %v4355, 2
    %v4364 = vsel %vm148, %v4362, %v4363
    %v4365 = vrot.slane %v4356, 2
    %v4366 = vsel %vm148, %v4363, %v4365
    %v4367 = vrot.slane %v4357, 2
    %v4368 = vsel %vm148, %v4365, %v4367
    %v4373 = vadd.f32 %v4350, %v4364
    %v4374 = vadd.f32 %v4351, %v4366
    %v4375 = vadd.f32 %v4352, %v4368
    %v4376 = vadd.f32 %v4353, %v4367
    %v4377 = vmul.f32 %v227, %v4319
    %v4378 = vmul.f32 %v227, %v4320
    %v4379 = vmul.f32 %v227, %v4321
    %v4380 = vmul.f32 %v227, %v4322
    %v4381 = vmul.f32 %v232, %v4319
    %v4382 = vmul.f32 %v232, %v4320
    %v4383 = vmul.f32 %v232, %v4321
    %v4384 = vmul.f32 %v232, %v4324
    %v4389 = vrot.slane %v4381, 1
    %v4390 = vrot.slane %v4382, 1
    %v4391 = vsel %vm123, %v4389, %v4390
    %v4392 = vrot.slane %v4383, 1
    %v4393 = vsel %vm123, %v4390, %v4392
    %v4394 = vrot.slane %v4384, 1
    %v4395 = vsel %vm123, %v4392, %v4394
    %v4400 = vadd.f32 %v4377, %v4391
    %v4401 = vadd.f32 %v4378, %v4393
    %v4402 = vadd.f32 %v4379, %v4395
    %v4403 = vadd.f32 %v4380, %v4394
    %v4404 = vmul.f32 %v256, %v4326
    %v4405 = vmul.f32 %v256, %v4320
    %v4406 = vmul.f32 %v256, %v4321
    %v4407 = vmul.f32 %v256, %v4324
    %v4412 = vrot.slane %v4404, 2
    %v4413 = vrot.slane %v4405, 2
    %v4414 = vsel %vm148, %v4412, %v4413
    %v4415 = vrot.slane %v4406, 2
    %v4416 = vsel %vm148, %v4413, %v4415
    %v4417 = vrot.slane %v4407, 2
    %v4418 = vsel %vm148, %v4415, %v4417
    %v4423 = vadd.f32 %v4400, %v4414
    %v4424 = vadd.f32 %v4401, %v4416
    %v4425 = vadd.f32 %v4402, %v4418
    %v4426 = vadd.f32 %v4403, %v4417
    %v4427 = vadd.f32 %v4190, %v4423
    %v4428 = vadd.f32 %v4191, %v4424
    %v4429 = vadd.f32 %v4192, %v4425
    %v4430 = vadd.f32 %v4193, %v4426
    %v4431 = vmul.f32 %v401, %v4319
    %v4432 = vmul.f32 %v401, %v4320
    %v4433 = vmul.f32 %v401, %v4321
    %v4434 = vmul.f32 %v401, %v4322
    %v4435 = vmul.f32 %v406, %v4319
    %v4436 = vmul.f32 %v406, %v4320
    %v4437 = vmul.f32 %v406, %v4321
    %v4438 = vmul.f32 %v406, %v4324
    %v4443 = vrot.slane %v4435, 1
    %v4444 = vrot.slane %v4436, 1
    %v4445 = vsel %vm123, %v4443, %v4444
    %v4446 = vrot.slane %v4437, 1
    %v4447 = vsel %vm123, %v4444, %v4446
    %v4448 = vrot.slane %v4438, 1
    %v4449 = vsel %vm123, %v4446, %v4448
    %v4454 = vadd.f32 %v4431, %v4445
    %v4455 = vadd.f32 %v4432, %v4447
    %v4456 = vadd.f32 %v4433, %v4449
    %v4457 = vadd.f32 %v4434, %v4448
    %v4458 = vmul.f32 %v430, %v4326
    %v4459 = vmul.f32 %v430, %v4320
    %v4460 = vmul.f32 %v430, %v4321
    %v4461 = vmul.f32 %v430, %v4324
    %v4466 = vrot.slane %v4458, 2
    %v4467 = vrot.slane %v4459, 2
    %v4468 = vsel %vm148, %v4466, %v4467
    %v4469 = vrot.slane %v4460, 2
    %v4470 = vsel %vm148, %v4467, %v4469
    %v4471 = vrot.slane %v4461, 2
    %v4472 = vsel %vm148, %v4469, %v4471
    %v4477 = vadd.f32 %v4454, %v4468
    %v4478 = vadd.f32 %v4455, %v4470
    %v4479 = vadd.f32 %v4456, %v4472
    %v4480 = vadd.f32 %v4457, %v4471
    %v4481 = vadd.f32 %v4244, %v4477
    %v4482 = vadd.f32 %v4245, %v4478
    %v4483 = vadd.f32 %v4246, %v4479
    %v4484 = vadd.f32 %v4247, %v4480
    %v4485 = vadd.f32 %v4481, %v458
    %v4486 = vadd.f32 %v4482, %v458
    %v4487 = vadd.f32 %v4483, %v458
    %v4488 = vadd.f32 %v4484, %v458
    %v4489 = vmax.f32 %v4485, 0.0
    %v4490 = vmax.f32 %v4486, 0.0
    %v4491 = vmax.f32 %v4487, 0.0
    %v4492 = vmax.f32 %v4488, 0.0
    %v4493 = vpack.c.bf16 %v4490, %v4489
    %v4494 = vpack.c.bf16 %v4492, %v4491
    %4495 = vst [vmem:[#allocation2 + $0x160] sm:$0xff] %v4493
    %4496 = vst [vmem:[#allocation2 + $0x168] sm:$0x1f] %v4494
    %s4497 = scalar_lea.vmem %s2, 400
    %v4498 = vld [vmem:[%s4497] sm:$0xf]
    %v4499 = vld [vmem:[%s4497 + $0x4] sm:$0xf]
    %v4500 = vld [vmem:[%s4497 + $0x8] sm:$0xf]
    %v4501 = vld [vmem:[%s4497 + $0xc] sm:$0x1]
    %v4502 = vunpack.c.l.bf16 %v4498
    %v4503 = vunpack.c.l.bf16 %v4499
    %v4504 = vunpack.c.l.bf16 %v4500
    %v4505 = vunpack.c.l.bf16 %v4501
    %v4506 = vld [vmem:[%s4497 + $0xc] sm:$0x3]
    %v4507 = vunpack.c.l.bf16 %v4506
    %v4508 = vld [vmem:[%s4497] sm:$0xe]
    %v4509 = vunpack.c.l.bf16 %v4508
    %v4510 = vmul.f32 %v109, %v4502
    %v4511 = vmul.f32 %v109, %v4503
    %v4512 = vmul.f32 %v109, %v4504
    %v4513 = vmul.f32 %v109, %v4505
    %v4514 = vmul.f32 %v114, %v4502
    %v4515 = vmul.f32 %v114, %v4503
    %v4516 = vmul.f32 %v114, %v4504
    %v4517 = vmul.f32 %v114, %v4507
    %v4522 = vrot.slane %v4514, 1
    %v4523 = vrot.slane %v4515, 1
    %v4524 = vsel %vm123, %v4522, %v4523
    %v4525 = vrot.slane %v4516, 1
    %v4526 = vsel %vm123, %v4523, %v4525
    %v4527 = vrot.slane %v4517, 1
    %v4528 = vsel %vm123, %v4525, %v4527
    %v4533 = vadd.f32 %v4510, %v4524
    %v4534 = vadd.f32 %v4511, %v4526
    %v4535 = vadd.f32 %v4512, %v4528
    %v4536 = vadd.f32 %v4513, %v4527
    %v4537 = vmul.f32 %v139, %v4509
    %v4538 = vmul.f32 %v139, %v4503
    %v4539 = vmul.f32 %v139, %v4504
    %v4540 = vmul.f32 %v139, %v4507
    %v4545 = vrot.slane %v4537, 2
    %v4546 = vrot.slane %v4538, 2
    %v4547 = vsel %vm148, %v4545, %v4546
    %v4548 = vrot.slane %v4539, 2
    %v4549 = vsel %vm148, %v4546, %v4548
    %v4550 = vrot.slane %v4540, 2
    %v4551 = vsel %vm148, %v4548, %v4550
    %v4556 = vadd.f32 %v4533, %v4547
    %v4557 = vadd.f32 %v4534, %v4549
    %v4558 = vadd.f32 %v4535, %v4551
    %v4559 = vadd.f32 %v4536, %v4550
    %v4560 = vmul.f32 %v227, %v4502
    %v4561 = vmul.f32 %v227, %v4503
    %v4562 = vmul.f32 %v227, %v4504
    %v4563 = vmul.f32 %v227, %v4505
    %v4564 = vmul.f32 %v232, %v4502
    %v4565 = vmul.f32 %v232, %v4503
    %v4566 = vmul.f32 %v232, %v4504
    %v4567 = vmul.f32 %v232, %v4507
    %v4572 = vrot.slane %v4564, 1
    %v4573 = vrot.slane %v4565, 1
    %v4574 = vsel %vm123, %v4572, %v4573
    %v4575 = vrot.slane %v4566, 1
    %v4576 = vsel %vm123, %v4573, %v4575
    %v4577 = vrot.slane %v4567, 1
    %v4578 = vsel %vm123, %v4575, %v4577
    %v4583 = vadd.f32 %v4560, %v4574
    %v4584 = vadd.f32 %v4561, %v4576
    %v4585 = vadd.f32 %v4562, %v4578
    %v4586 = vadd.f32 %v4563, %v4577
    %v4587 = vmul.f32 %v256, %v4509
    %v4588 = vmul.f32 %v256, %v4503
    %v4589 = vmul.f32 %v256, %v4504
    %v4590 = vmul.f32 %v256, %v4507
    %v4595 = vrot.slane %v4587, 2
    %v4596 = vrot.slane %v4588, 2
    %v4597 = vsel %vm148, %v4595, %v4596
    %v4598 = vrot.slane %v4589, 2
    %v4599 = vsel %vm148, %v4596, %v4598
    %v4600 = vrot.slane %v4590, 2
    %v4601 = vsel %vm148, %v4598, %v4600
    %v4606 = vadd.f32 %v4583, %v4597
    %v4607 = vadd.f32 %v4584, %v4599
    %v4608 = vadd.f32 %v4585, %v4601
    %v4609 = vadd.f32 %v4586, %v4600
    %v4610 = vadd.f32 %v4373, %v4606
    %v4611 = vadd.f32 %v4374, %v4607
    %v4612 = vadd.f32 %v4375, %v4608
    %v4613 = vadd.f32 %v4376, %v4609
    %v4614 = vmul.f32 %v401, %v4502
    %v4615 = vmul.f32 %v401, %v4503
    %v4616 = vmul.f32 %v401, %v4504
    %v4617 = vmul.f32 %v401, %v4505
    %v4618 = vmul.f32 %v406, %v4502
    %v4619 = vmul.f32 %v406, %v4503
    %v4620 = vmul.f32 %v406, %v4504
    %v4621 = vmul.f32 %v406, %v4507
    %v4626 = vrot.slane %v4618, 1
    %v4627 = vrot.slane %v4619, 1
    %v4628 = vsel %vm123, %v4626, %v4627
    %v4629 = vrot.slane %v4620, 1
    %v4630 = vsel %vm123, %v4627, %v4629
    %v4631 = vrot.slane %v4621, 1
    %v4632 = vsel %vm123, %v4629, %v4631
    %v4637 = vadd.f32 %v4614, %v4628
    %v4638 = vadd.f32 %v4615, %v4630
    %v4639 = vadd.f32 %v4616, %v4632
    %v4640 = vadd.f32 %v4617, %v4631
    %v4641 = vmul.f32 %v430, %v4509
    %v4642 = vmul.f32 %v430, %v4503
    %v4643 = vmul.f32 %v430, %v4504
    %v4644 = vmul.f32 %v430, %v4507
    %v4649 = vrot.slane %v4641, 2
    %v4650 = vrot.slane %v4642, 2
    %v4651 = vsel %vm148, %v4649, %v4650
    %v4652 = vrot.slane %v4643, 2
    %v4653 = vsel %vm148, %v4650, %v4652
    %v4654 = vrot.slane %v4644, 2
    %v4655 = vsel %vm148, %v4652, %v4654
    %v4660 = vadd.f32 %v4637, %v4651
    %v4661 = vadd.f32 %v4638, %v4653
    %v4662 = vadd.f32 %v4639, %v4655
    %v4663 = vadd.f32 %v4640, %v4654
    %v4664 = vadd.f32 %v4427, %v4660
    %v4665 = vadd.f32 %v4428, %v4661
    %v4666 = vadd.f32 %v4429, %v4662
    %v4667 = vadd.f32 %v4430, %v4663
    %v4668 = vadd.f32 %v4664, %v458
    %v4669 = vadd.f32 %v4665, %v458
    %v4670 = vadd.f32 %v4666, %v458
    %v4671 = vadd.f32 %v4667, %v458
    %v4672 = vmax.f32 %v4668, 0.0
    %v4673 = vmax.f32 %v4669, 0.0
    %v4674 = vmax.f32 %v4670, 0.0
    %v4675 = vmax.f32 %v4671, 0.0
    %v4676 = vpack.c.bf16 %v4673, %v4672
    %v4677 = vpack.c.bf16 %v4675, %v4674
    %4678 = vst [vmem:[#allocation2 + $0x170] sm:$0xff] %v4676
    %4679 = vst [vmem:[#allocation2 + $0x178] sm:$0x1f] %v4677
    %s4680 = scalar_lea.vmem %s2, 416
    %v4681 = vld [vmem:[%s4680] sm:$0xf]
    %v4682 = vld [vmem:[%s4680 + $0x4] sm:$0xf]
    %v4683 = vld [vmem:[%s4680 + $0x8] sm:$0xf]
    %v4684 = vld [vmem:[%s4680 + $0xc] sm:$0x1]
    %v4685 = vunpack.c.l.bf16 %v4681
    %v4686 = vunpack.c.l.bf16 %v4682
    %v4687 = vunpack.c.l.bf16 %v4683
    %v4688 = vunpack.c.l.bf16 %v4684
    %v4689 = vld [vmem:[%s4680 + $0xc] sm:$0x3]
    %v4690 = vunpack.c.l.bf16 %v4689
    %v4691 = vld [vmem:[%s4680] sm:$0xe]
    %v4692 = vunpack.c.l.bf16 %v4691
    %v4693 = vmul.f32 %v227, %v4685
    %v4694 = vmul.f32 %v227, %v4686
    %v4695 = vmul.f32 %v227, %v4687
    %v4696 = vmul.f32 %v227, %v4688
    %v4697 = vmul.f32 %v232, %v4685
    %v4698 = vmul.f32 %v232, %v4686
    %v4699 = vmul.f32 %v232, %v4687
    %v4700 = vmul.f32 %v232, %v4690
    %v4705 = vrot.slane %v4697, 1
    %v4706 = vrot.slane %v4698, 1
    %v4707 = vsel %vm123, %v4705, %v4706
    %v4708 = vrot.slane %v4699, 1
    %v4709 = vsel %vm123, %v4706, %v4708
    %v4710 = vrot.slane %v4700, 1
    %v4711 = vsel %vm123, %v4708, %v4710
    %v4716 = vadd.f32 %v4693, %v4707
    %v4717 = vadd.f32 %v4694, %v4709
    %v4718 = vadd.f32 %v4695, %v4711
    %v4719 = vadd.f32 %v4696, %v4710
    %v4720 = vmul.f32 %v256, %v4692
    %v4721 = vmul.f32 %v256, %v4686
    %v4722 = vmul.f32 %v256, %v4687
    %v4723 = vmul.f32 %v256, %v4690
    %v4728 = vrot.slane %v4720, 2
    %v4729 = vrot.slane %v4721, 2
    %v4730 = vsel %vm148, %v4728, %v4729
    %v4731 = vrot.slane %v4722, 2
    %v4732 = vsel %vm148, %v4729, %v4731
    %v4733 = vrot.slane %v4723, 2
    %v4734 = vsel %vm148, %v4731, %v4733
    %v4739 = vadd.f32 %v4716, %v4730
    %v4740 = vadd.f32 %v4717, %v4732
    %v4741 = vadd.f32 %v4718, %v4734
    %v4742 = vadd.f32 %v4719, %v4733
    %v4743 = vadd.f32 %v4556, %v4739
    %v4744 = vadd.f32 %v4557, %v4740
    %v4745 = vadd.f32 %v4558, %v4741
    %v4746 = vadd.f32 %v4559, %v4742
    %v4747 = vmul.f32 %v401, %v4685
    %v4748 = vmul.f32 %v401, %v4686
    %v4749 = vmul.f32 %v401, %v4687
    %v4750 = vmul.f32 %v401, %v4688
    %v4751 = vmul.f32 %v406, %v4685
    %v4752 = vmul.f32 %v406, %v4686
    %v4753 = vmul.f32 %v406, %v4687
    %v4754 = vmul.f32 %v406, %v4690
    %v4759 = vrot.slane %v4751, 1
    %v4760 = vrot.slane %v4752, 1
    %v4761 = vsel %vm123, %v4759, %v4760
    %v4762 = vrot.slane %v4753, 1
    %v4763 = vsel %vm123, %v4760, %v4762
    %v4764 = vrot.slane %v4754, 1
    %v4765 = vsel %vm123, %v4762, %v4764
    %v4770 = vadd.f32 %v4747, %v4761
    %v4771 = vadd.f32 %v4748, %v4763
    %v4772 = vadd.f32 %v4749, %v4765
    %v4773 = vadd.f32 %v4750, %v4764
    %v4774 = vmul.f32 %v430, %v4692
    %v4775 = vmul.f32 %v430, %v4686
    %v4776 = vmul.f32 %v430, %v4687
    %v4777 = vmul.f32 %v430, %v4690
    %v4782 = vrot.slane %v4774, 2
    %v4783 = vrot.slane %v4775, 2
    %v4784 = vsel %vm148, %v4782, %v4783
    %v4785 = vrot.slane %v4776, 2
    %v4786 = vsel %vm148, %v4783, %v4785
    %v4787 = vrot.slane %v4777, 2
    %v4788 = vsel %vm148, %v4785, %v4787
    %v4793 = vadd.f32 %v4770, %v4784
    %v4794 = vadd.f32 %v4771, %v4786
    %v4795 = vadd.f32 %v4772, %v4788
    %v4796 = vadd.f32 %v4773, %v4787
    %v4797 = vadd.f32 %v4610, %v4793
    %v4798 = vadd.f32 %v4611, %v4794
    %v4799 = vadd.f32 %v4612, %v4795
    %v4800 = vadd.f32 %v4613, %v4796
    %v4801 = vadd.f32 %v4797, %v458
    %v4802 = vadd.f32 %v4798, %v458
    %v4803 = vadd.f32 %v4799, %v458
    %v4804 = vadd.f32 %v4800, %v458
    %v4805 = vmax.f32 %v4801, 0.0
    %v4806 = vmax.f32 %v4802, 0.0
    %v4807 = vmax.f32 %v4803, 0.0
    %v4808 = vmax.f32 %v4804, 0.0
    %v4809 = vpack.c.bf16 %v4806, %v4805
    %v4810 = vpack.c.bf16 %v4808, %v4807
    %4811 = vst [vmem:[#allocation2 + $0x180] sm:$0xff] %v4809
    %4812 = vst [vmem:[#allocation2 + $0x188] sm:$0x1f] %v4810
    %s4813 = scalar_lea.vmem %s2, 432
    %v4814 = vld [vmem:[%s4813] sm:$0xf]
    %v4815 = vld [vmem:[%s4813 + $0x4] sm:$0xf]
    %v4816 = vld [vmem:[%s4813 + $0x8] sm:$0xf]
    %v4817 = vld [vmem:[%s4813 + $0xc] sm:$0x1]
    %v4818 = vunpack.c.l.bf16 %v4814
    %v4819 = vunpack.c.l.bf16 %v4815
    %v4820 = vunpack.c.l.bf16 %v4816
    %v4821 = vunpack.c.l.bf16 %v4817
    %v4822 = vld [vmem:[%s4813 + $0xc] sm:$0x3]
    %v4823 = vunpack.c.l.bf16 %v4822
    %v4824 = vld [vmem:[%s4813] sm:$0xe]
    %v4825 = vunpack.c.l.bf16 %v4824
    %v4826 = vmul.f32 %v401, %v4818
    %v4827 = vmul.f32 %v401, %v4819
    %v4828 = vmul.f32 %v401, %v4820
    %v4829 = vmul.f32 %v401, %v4821
    %v4830 = vmul.f32 %v406, %v4818
    %v4831 = vmul.f32 %v406, %v4819
    %v4832 = vmul.f32 %v406, %v4820
    %v4833 = vmul.f32 %v406, %v4823
    %v4838 = vrot.slane %v4830, 1
    %v4839 = vrot.slane %v4831, 1
    %v4840 = vsel %vm123, %v4838, %v4839
    %v4841 = vrot.slane %v4832, 1
    %v4842 = vsel %vm123, %v4839, %v4841
    %v4843 = vrot.slane %v4833, 1
    %v4844 = vsel %vm123, %v4841, %v4843
    %v4849 = vadd.f32 %v4826, %v4840
    %v4850 = vadd.f32 %v4827, %v4842
    %v4851 = vadd.f32 %v4828, %v4844
    %v4852 = vadd.f32 %v4829, %v4843
    %v4853 = vmul.f32 %v430, %v4825
    %v4854 = vmul.f32 %v430, %v4819
    %v4855 = vmul.f32 %v430, %v4820
    %v4856 = vmul.f32 %v430, %v4823
    %v4861 = vrot.slane %v4853, 2
    %v4862 = vrot.slane %v4854, 2
    %v4863 = vsel %vm148, %v4861, %v4862
    %v4864 = vrot.slane %v4855, 2
    %v4865 = vsel %vm148, %v4862, %v4864
    %v4866 = vrot.slane %v4856, 2
    %v4867 = vsel %vm148, %v4864, %v4866
    %v4872 = vadd.f32 %v4849, %v4863
    %v4873 = vadd.f32 %v4850, %v4865
    %v4874 = vadd.f32 %v4851, %v4867
    %v4875 = vadd.f32 %v4852, %v4866
    %v4876 = vadd.f32 %v4743, %v4872
    %v4877 = vadd.f32 %v4744, %v4873
    %v4878 = vadd.f32 %v4745, %v4874
    %v4879 = vadd.f32 %v4746, %v4875
    %v4880 = vadd.f32 %v4876, %v458
    %v4881 = vadd.f32 %v4877, %v458
    %v4882 = vadd.f32 %v4878, %v458
    %v4883 = vadd.f32 %v4879, %v458
    %v4884 = vmax.f32 %v4880, 0.0
    %v4885 = vmax.f32 %v4881, 0.0
    %v4886 = vmax.f32 %v4882, 0.0
    %v4887 = vmax.f32 %v4883, 0.0
    %v4888 = vpack.c.bf16 %v4885, %v4884
    %v4889 = vpack.c.bf16 %v4887, %v4886
    %4890 = vst [vmem:[#allocation2 + $0x190] sm:$0xff] %v4888
    %4891 = vst [vmem:[#allocation2 + $0x198] sm:$0x1f] %v4889
    %v4892 = vld [vmem:[%s3] sm:$0xff]
    %v4893 = vld [vmem:[%s3 + $0x8] sm:$0xff]
    %v4894 = vld [vmem:[%s3 + $0x10] sm:$0xff]
    %v4895 = vld [vmem:[%s3 + $0x18] sm:$0xf]
    %v4896 = vld [vmem:[%s3 + $0x1c] sm:$0x11]
    %v4897 = vld [vmem:[%s3 + $0x24] sm:$0x11]
    %v4898 = vld [vmem:[%s3 + $0x2c] sm:$0x11]
    %v4899 = vld [vmem:[%s3 + $0x34] sm:$0x1]
    %v4900 = vld [vmem:[#allocation2] sm:$0xff]
    %v4901 = vld [vmem:[#allocation2 + $0x8] sm:$0xff]
    %v4902 = vld [vmem:[#allocation2 + $0x10] sm:$0xff]
    %v4903 = vld [vmem:[#allocation2 + $0x18] sm:$0xff]
    %v4904 = vld [vmem:[#allocation2 + $0x20] sm:$0xff]
    %v4905 = vld [vmem:[#allocation2 + $0x28] sm:$0xff]
    %v4906 = vld [vmem:[#allocation2 + $0x30] sm:$0xff]
    %v4907 = vld [vmem:[#allocation2 + $0x38] sm:$0xff]
    %v4908 = vld [vmem:[#allocation2 + $0x40] sm:$0xff]
    %v4909 = vld [vmem:[#allocation2 + $0x48] sm:$0xff]
    %v4910 = vld [vmem:[#allocation2 + $0x50] sm:$0xff]
    %v4911 = vld [vmem:[#allocation2 + $0x58] sm:$0xff]
    %v4912 = vld [vmem:[#allocation2 + $0x60] sm:$0xff]
    %v4913 = vld [vmem:[#allocation2 + $0x68] sm:$0xff]
    %v4914 = vld [vmem:[#allocation2 + $0x70] sm:$0xff]
    %v4915 = vld [vmem:[#allocation2 + $0x78] sm:$0xff]
    %v4916 = vld [vmem:[#allocation2 + $0x80] sm:$0xff]
    %v4917 = vld [vmem:[#allocation2 + $0x88] sm:$0xff]
    %v4918 = vld [vmem:[#allocation2 + $0x90] sm:$0xff]
    %v4919 = vld [vmem:[#allocation2 + $0x98] sm:$0xff]
    %v4920 = vld [vmem:[#allocation2 + $0xa0] sm:$0xff]
    %v4921 = vld [vmem:[#allocation2 + $0xa8] sm:$0xff]
    %v4922 = vld [vmem:[#allocation2 + $0xb0] sm:$0xff]
    %v4923 = vld [vmem:[#allocation2 + $0xb8] sm:$0xff]
    %v4924 = vld [vmem:[#allocation2 + $0xc0] sm:$0xff]
    %v4925 = vld [vmem:[#allocation2 + $0xc8] sm:$0xff]
    %v4926 = vld [vmem:[#allocation2 + $0xd0] sm:$0xff]
    %v4927 = vld [vmem:[#allocation2 + $0xd8] sm:$0xff]
    %v4928 = vld [vmem:[#allocation2 + $0xe0] sm:$0xff]
    %v4929 = vld [vmem:[#allocation2 + $0xe8] sm:$0xff]
    %v4930 = vld [vmem:[#allocation2 + $0xf0] sm:$0xff]
    %v4931 = vld [vmem:[#allocation2 + $0xf8] sm:$0xff]
    %v4932 = vld [vmem:[#allocation2 + $0x100] sm:$0xff]
    %v4933 = vld [vmem:[#allocation2 + $0x108] sm:$0xff]
    %v4934 = vld [vmem:[#allocation2 + $0x110] sm:$0xff]
    %v4935 = vld [vmem:[#allocation2 + $0x118] sm:$0xff]
    %v4936 = vld [vmem:[#allocation2 + $0x120] sm:$0xff]
    %v4937 = vld [vmem:[#allocation2 + $0x128] sm:$0xff]
    %v4938 = vld [vmem:[#allocation2 + $0x130] sm:$0xff]
    %v4939 = vld [vmem:[#allocation2 + $0x138] sm:$0xff]
    %v4940 = vld [vmem:[#allocation2 + $0x140] sm:$0xff]
    %v4941 = vld [vmem:[#allocation2 + $0x148] sm:$0xff]
    %v4942 = vld [vmem:[#allocation2 + $0x150] sm:$0xff]
    %v4943 = vld [vmem:[#allocation2 + $0x158] sm:$0xff]
    %v4944 = vld [vmem:[#allocation2 + $0x160] sm:$0xff]
    %v4945 = vld [vmem:[#allocation2 + $0x168] sm:$0xff]
    %v4946 = vld [vmem:[#allocation2 + $0x170] sm:$0xff]
    %v4947 = vld [vmem:[#allocation2 + $0x178] sm:$0xff]
    %v4948 = vld [vmem:[#allocation2 + $0x180] sm:$0xff]
    %v4949 = vld [vmem:[#allocation2 + $0x188] sm:$0xff]
    %v4950 = vld [vmem:[#allocation2 + $0x190] sm:$0xff]
    %v4951 = vld [vmem:[#allocation2 + $0x198] sm:$0xff]
    %v4952 = vld [vmem:[%s4] sm:$0xff]
    %v4953 = vld [vmem:[%s4 + $0x8] sm:$0x3]
    %4955 = vset.pattern.permute.xlu0 0
    %4956 = vperm.xlu0 %4955, %v4952
    %v4957 = vpop.permute.xlu0 %4956
    %4960 = vset.pattern.permute.xlu0 0
    %4961 = vperm.xlu0 %4960, %v4953
    %v4962 = vpop.permute.xlu0 %4961
    %v4972 = vunpack.c.l.b16 %v4892
    %v4973 = vunpack.c.h.b16 %v4892
    %v4974 = vunpack.c.l.b16 %v4893
    %v4975 = vunpack.c.h.b16 %v4893
    %v4976 = vunpack.c.l.b16 %v4894
    %v4977 = vunpack.c.h.b16 %v4894
    %v4978 = vunpack.c.l.b16 %v4895
    %v4979 = vunpack.c.l.b16 %v4896
    %v4980 = vunpack.c.h.b16 %v4896
    %v4981 = vunpack.c.l.b16 %v4897
    %v4982 = vunpack.c.h.b16 %v4897
    %v4983 = vunpack.c.l.b16 %v4898
    %v4984 = vunpack.c.h.b16 %v4898
    %v4985 = vunpack.c.l.b16 %v4899
    %v4986 = vpack.c.b16 %v4979, %v4972
    %v4987 = vpack.c.b16 %v4980, %v4973
    %v4988 = vpack.c.b16 %v4981, %v4974
    %v4989 = vpack.c.b16 %v4982, %v4975
    %v4990 = vpack.c.b16 %v4983, %v4976
    %v4991 = vpack.c.b16 %v4984, %v4977
    %v4992 = vpack.c.b16 %v4985, %v4978
    %vm4999 = vcmask 523264
    %v5001 = vsel %vm4999, %v4992, 0
    %5003 = vmatprep.subr.bf16.mxu0 0
    %5004 = vmatpush1.bf16.msra.mxu0 %v4900
    %5005 = vmatprep.subr.bf16.mxu0 0
    %5006 = vmatpush1.bf16.msra.mxu0 %v4901
    %5007 = vmatprep.subr.bf16.mxu0 0
    %5008 = vmatpush1.bf16.msra.mxu0 %v4902
    %5009 = vmatprep.subr.bf16.mxu0 0
    %5010 = vmatpush1.bf16.msra.mxu0 %v4903
    %5011 = vmatprep.subr.bf16.mxu0 0
    %5012 = vmatpush1.bf16.msra.mxu0 %v4904
    %5013 = vmatprep.subr.bf16.mxu0 0
    %5014 = vmatpush1.bf16.msra.mxu0 %v4905
    %5015 = vmatprep.subr.bf16.mxu0 0
    %5016 = vmatpush1.bf16.msra.mxu0 %v4906
    %5017 = vmatprep.subr.bf16.mxu0 0
    %5018 = vmatpush1.bf16.msra.mxu0 %v4907
    %5019 = vmatprep.subr.bf16.mxu0 0
    %5020 = vmatpush1.bf16.msra.mxu0 %v4908
    %5021 = vmatprep.subr.bf16.mxu0 0
    %5022 = vmatpush1.bf16.msra.mxu0 %v4909
    %5023 = vmatprep.subr.bf16.mxu0 0
    %5024 = vmatpush1.bf16.msra.mxu0 %v4910
    %5025 = vmatprep.subr.bf16.mxu0 0
    %5026 = vmatpush1.bf16.msra.mxu0 %v4911
    %5027 = vmatprep.subr.bf16.mxu0 0
    %5028 = vmatpush1.bf16.msra.mxu0 %v4912
    %5029 = vmatprep.subr.bf16.mxu0 0
    %5030 = vmatpush1.bf16.msra.mxu0 %v4913
    %5031 = vmatprep.subr.bf16.mxu0 0
    %5032 = vmatpush1.bf16.msra.mxu0 %v4914
    %5033 = vmatprep.subr.bf16.mxu0 0
    %5034 = vmatpush1.bf16.msra.mxu0 %v4915
    %5035 = vmatprep.mubr.bf16.mxu0 %v4987
    %5036 = vmatmul.mubr.bf16.gmra.mrb[0].mxu0 %v4986
    %v5037 = vpop.f32.mrb[0].mxu0
    %v5038 = vadd.f32 %v4957, %v5037
    %v5039 = vpop.f32.mrb[0].mxu0
    %v5040 = vpop.f32.mrb[0].mxu0
    %v5041 = vadd.f32 %v4962, %v5040
    %v5042 = vpop.f32.mrb[0].mxu0
    %5043 = vdwg.mxu0
    %5044 = vmatprep.subr.bf16.mxu0 0
    %5045 = vmatpush1.bf16.msra.mxu0 %v4916
    %5046 = vmatprep.subr.bf16.mxu0 0
    %5047 = vmatpush1.bf16.msra.mxu0 %v4917
    %5048 = vmatprep.subr.bf16.mxu0 0
    %5049 = vmatpush1.bf16.msra.mxu0 %v4918
    %5050 = vmatprep.subr.bf16.mxu0 0
    %5051 = vmatpush1.bf16.msra.mxu0 %v4919
    %5052 = vmatprep.subr.bf16.mxu0 0
    %5053 = vmatpush1.bf16.msra.mxu0 %v4920
    %5054 = vmatprep.subr.bf16.mxu0 0
    %5055 = vmatpush1.bf16.msra.mxu0 %v4921
    %5056 = vmatprep.subr.bf16.mxu0 0
    %5057 = vmatpush1.bf16.msra.mxu0 %v4922
    %5058 = vmatprep.subr.bf16.mxu0 0
    %5059 = vmatpush1.bf16.msra.mxu0 %v4923
    %5060 = vmatprep.subr.bf16.mxu0 0
    %5061 = vmatpush1.bf16.msra.mxu0 %v4924
    %5062 = vmatprep.subr.bf16.mxu0 0
    %5063 = vmatpush1.bf16.msra.mxu0 %v4925
    %5064 = vmatprep.subr.bf16.mxu0 0
    %5065 = vmatpush1.bf16.msra.mxu0 %v4926
    %5066 = vmatprep.subr.bf16.mxu0 0
    %5067 = vmatpush1.bf16.msra.mxu0 %v4927
    %5068 = vmatprep.subr.bf16.mxu0 0
    %5069 = vmatpush1.bf16.msra.mxu0 %v4928
    %5070 = vmatprep.subr.bf16.mxu0 0
    %5071 = vmatpush1.bf16.msra.mxu0 %v4929
    %5072 = vmatprep.subr.bf16.mxu0 0
    %5073 = vmatpush1.bf16.msra.mxu0 %v4930
    %5074 = vmatprep.subr.bf16.mxu0 0
    %5075 = vmatpush1.bf16.msra.mxu0 %v4931
    %5076 = vmatprep.mubr.bf16.mxu0 %v4989
    %5077 = vmatmul.mubr.bf16.gmra.mrb[0].mxu0 %v4988
    %v5078 = vpop.f32.mrb[0].mxu0
    %v5079 = vadd.f32 %v5038, %v5078
    %v5080 = vpop.f32.mrb[0].mxu0
    %v5081 = vpop.f32.mrb[0].mxu0
    %v5082 = vadd.f32 %v5041, %v5081
    %v5083 = vpop.f32.mrb[0].mxu0
    %5084 = vdwg.mxu0
    %5085 = vmatprep.subr.bf16.mxu0 0
    %5086 = vmatpush1.bf16.msra.mxu0 %v4932
    %5087 = vmatprep.subr.bf16.mxu0 0
    %5088 = vmatpush1.bf16.msra.mxu0 %v4933
    %5089 = vmatprep.subr.bf16.mxu0 0
    %5090 = vmatpush1.bf16.msra.mxu0 %v4934
    %5091 = vmatprep.subr.bf16.mxu0 0
    %5092 = vmatpush1.bf16.msra.mxu0 %v4935
    %5093 = vmatprep.subr.bf16.mxu0 0
    %5094 = vmatpush1.bf16.msra.mxu0 %v4936
    %5095 = vmatprep.subr.bf16.mxu0 0
    %5096 = vmatpush1.bf16.msra.mxu0 %v4937
    %5097 = vmatprep.subr.bf16.mxu0 0
    %5098 = vmatpush1.bf16.msra.mxu0 %v4938
    %5099 = vmatprep.subr.bf16.mxu0 0
    %5100 = vmatpush1.bf16.msra.mxu0 %v4939
    %5101 = vmatprep.subr.bf16.mxu0 0
    %5102 = vmatpush1.bf16.msra.mxu0 %v4940
    %5103 = vmatprep.subr.bf16.mxu0 0
    %5104 = vmatpush1.bf16.msra.mxu0 %v4941
    %5105 = vmatprep.subr.bf16.mxu0 0
    %5106 = vmatpush1.bf16.msra.mxu0 %v4942
    %5107 = vmatprep.subr.bf16.mxu0 0
    %5108 = vmatpush1.bf16.msra.mxu0 %v4943
    %5109 = vmatprep.subr.bf16.mxu0 0
    %5110 = vmatpush1.bf16.msra.mxu0 %v4944
    %5111 = vmatprep.subr.bf16.mxu0 0
    %5112 = vmatpush1.bf16.msra.mxu0 %v4945
    %5113 = vmatprep.subr.bf16.mxu0 0
    %5114 = vmatpush1.bf16.msra.mxu0 %v4946
    %5115 = vmatprep.subr.bf16.mxu0 0
    %5116 = vmatpush1.bf16.msra.mxu0 %v4947
    %5117 = vmatprep.mubr.bf16.mxu0 %v4991
    %5118 = vmatmul.mubr.bf16.gmra.mrb[0].mxu0 %v4990
    %v5119 = vpop.f32.mrb[0].mxu0
    %v5120 = vadd.f32 %v5079, %v5119
    %v5121 = vpop.f32.mrb[0].mxu0
    %v5122 = vpop.f32.mrb[0].mxu0
    %v5123 = vadd.f32 %v5082, %v5122
    %v5124 = vpop.f32.mrb[0].mxu0
    %5125 = vdwg.mxu0
    %5126 = vmatprep.subr.bf16.mxu0 0
    %5127 = vmatpush1.bf16.msra.mxu0 %v4948
    %5128 = vmatprep.subr.bf16.mxu0 0
    %5129 = vmatpush1.bf16.msra.mxu0 %v4949
    %5130 = vmatprep.subr.bf16.mxu0 0
    %5131 = vmatpush1.bf16.msra.mxu0 %v4950
    %5132 = vmatprep.subr.bf16.mxu0 0
    %5133 = vmatpush1.bf16.msra.mxu0 %v4951
    %5134 = vmatprep.subr.bf16.mxu0 0
    %5135 = vmatpush1.bf16.msra.mxu0 0
    %5136 = vmatprep.subr.bf16.mxu0 0
    %5137 = vmatpush1.bf16.msra.mxu0 0
    %5138 = vmatprep.subr.bf16.mxu0 0
    %5139 = vmatpush1.bf16.msra.mxu0 0
    %5140 = vmatprep.subr.bf16.mxu0 0
    %5141 = vmatpush1.bf16.msra.mxu0 0
    %5142 = vmatprep.subr.bf16.mxu0 0
    %5143 = vmatpush1.bf16.msra.mxu0 0
    %5144 = vmatprep.subr.bf16.mxu0 0
    %5145 = vmatpush1.bf16.msra.mxu0 0
    %5146 = vmatprep.subr.bf16.mxu0 0
    %5147 = vmatpush1.bf16.msra.mxu0 0
    %5148 = vmatprep.subr.bf16.mxu0 0
    %5149 = vmatpush1.bf16.msra.mxu0 0
    %5150 = vmatprep.subr.bf16.mxu0 0
    %5151 = vmatpush1.bf16.msra.mxu0 0
    %5152 = vmatprep.subr.bf16.mxu0 0
    %5153 = vmatpush1.bf16.msra.mxu0 0
    %5154 = vmatprep.subr.bf16.mxu0 0
    %5155 = vmatpush1.bf16.msra.mxu0 0
    %5156 = vmatprep.subr.bf16.mxu0 0
    %5157 = vmatpush1.bf16.msra.mxu0 0
    %5158 = vmatprep.mubr.bf16.mxu0 0
    %5159 = vmatmul.mubr.bf16.gmra.mrb[0].mxu0 %v5001
    %v5160 = vpop.f32.mrb[0].mxu0
    %v5161 = vadd.f32 %v5120, %v5160
    %v5162 = vpop.f32.mrb[0].mxu0
    %v5163 = vpop.f32.mrb[0].mxu0
    %v5164 = vadd.f32 %v5123, %v5163
    %v5165 = vpop.f32.mrb[0].mxu0
    %5166 = vdwg.mxu0
    %5167 = vst [vmem:[%s5] sm:$0xff] %v5161
    %5168 = vst [vmem:[%s5 + $0x8] sm:$0x3] %v5164
    // Predicated region
    $region26: #{dummy_cnn_forward.1} parent=1 // pred_check
      _
    $region27: #{dummy_cnn_forward.1} parent=1 // pred_check_branch
      %5170 = sbr.rel (0) target = $region29
    $region28: #{dummy_cnn_forward.1} parent=1 // pred_region
      _
    $region29: #{dummy_cnn_forward.1} parent=1 // pred_fallthru
      _
    // Predicated region
    $region30: #{dummy_cnn_forward.1} parent=1 // pred_check
      _
    $region31: #{dummy_cnn_forward.1} parent=1 // pred_check_branch
      %5172 = sbr.rel (0) target = $region33
    $region32: #{dummy_cnn_forward.1} parent=1 // pred_region
      _
    $region33: #{dummy_cnn_forward.1} parent=1 // pred_fallthru
      _
    %5173 = vsyncpa [#allocation5], 1

</llo_original>
